<compile_context>
chip_gen: v6e
topology: v6e:2x2x1
jax: 0.10.0
libtpu: 0.0.40
codegen_flags: <defaults>
</compile_context>

<pallas_src>
import functools

import numpy as np
import jax
import jax.numpy as jnp
from jax.experimental import pallas as pl
from jax.experimental.pallas import tpu as pltpu


_TINY_BYPASS_BYTES = 256 << 10     # below this, pallas dispatch overhead dominates
_STEP_OVERHEAD_BYTES = 512 << 10   # ~0.35 us of HBM traffic; per-grid-step penalty


def _cdiv(a, b):
    return -(-a // b)


def _round_up(a, b):
    return _cdiv(a, b) * b


@functools.lru_cache(maxsize=None)
def _vmem_limit_bytes():
    """Scoped VMEM to request: generous, but never more than ~1/2 of physical
    VMEM (v7x only has 64 MiB per TensorCore; v5e/v6e have 128 MiB)."""
    try:
        cap = int(pltpu.get_tpu_info().vmem_capacity_bytes)
    except Exception:  # non-TPU backend / older jax -- use the smallest (v7x)
        cap = 64 << 20
    return min(32 << 20, cap // 2)


def _pair_budget_bytes():
    # in-tile + out-tile bytes per step; double-buffered -> half the VMEM limit.
    return _vmem_limit_bytes() // 4


def _small_budget_bytes():
    # padded in+out bytes per step for the batched small-plane path.
    return _vmem_limit_bytes() // 8


def _padded_plane_bytes(rows, cols, itemsize):
    """VMEM footprint of a (rows, cols) plane after lane/sublane padding."""
    sublane = 8 * max(1, 4 // itemsize)  # 8 f32 / 16 bf16 / 32 int8
    return _round_up(rows, sublane) * _round_up(cols, 128) * itemsize


def _pick_tiles(M, N, itemsize, pair_budget):
    """Pick (tm, tn): multiples of 128 (or the full dim) whose in+out tile pair
    fits `pair_budget`, minimizing padded HBM traffic, then grid steps."""

    def cands(dim):
        c = {dim}
        limit = min(dim - 1, pair_budget // (2 * itemsize * 128))
        t = 128
        while t <= limit:
            c.add(t)
            t += 128
        return sorted(c)

    best_key, best = None, (min(M, 128), min(N, 128))
    for tm in cands(M):
        for tn in cands(N):
            if 2 * tm * tn * itemsize > pair_budget:
                continue
            steps = _cdiv(M, tm) * _cdiv(N, tn)
            padded_bytes = 2 * steps * tm * tn * itemsize
            key = (padded_bytes + steps * _STEP_OVERHEAD_BYTES, steps, -tm * tn)
            if best_key is None or key < best_key:
                best_key, best = key, (tm, tn)
    return best


def _transpose_tile_kernel(x_ref, o_ref):
    # (tm, tn) tile -> (tn, tm) tile.  Pure XLU transpose; no extra VPU work so
    # the vst slot / HBM stream stays as short as possible (v5e has 1 vst slot).
    o_ref[...] = x_ref[...].T


def _transpose_planes_kernel(x_ref, o_ref):
    # (tb, M, N) slab -> (tb, N, M) slab (whole-plane batched transpose).
    o_ref[...] = jnp.swapaxes(x_ref[...], -1, -2)


def _small_path(x3, B, M, N, itemsize, cost):
    """Skinny/small planes: batch whole planes per grid step.  The per-step
    plane count is budgeted against the *padded* VMEM layout so large-B inputs
    with tiny planes stay well inside the scoped-VMEM limit (double-buffered)."""
    plane_bytes = (_padded_plane_bytes(M, N, itemsize)
                   + _padded_plane_bytes(N, M, itemsize))
    budget = _small_budget_bytes()
    if plane_bytes > budget:
        return None  # caller falls back to XLA
    tb = max(1, min(B, budget // plane_bytes))
    while B % tb:  # keep every DMA full-sized (no ragged batch edge)
        tb -= 1
    # TODO(synk): a lane-dense flat (tb, N*M) output spec would cut the masked
    # vst / lane-padded writeback further, but requires in-kernel reshapes.
    return pl.pallas_call(
        _transpose_planes_kernel,
        out_shape=jax.ShapeDtypeStruct((B, N, M), x3.dtype),
        grid_spec=pltpu.PrefetchScalarGridSpec(
            num_scalar_prefetch=0,
            grid=(B // tb,),
            in_specs=[pl.BlockSpec((tb, M, N), lambda b: (b, 0, 0))],
            out_specs=pl.BlockSpec((tb, N, M), lambda b: (b, 0, 0)),
        ),
        compiler_params=pltpu.CompilerParams(
            dimension_semantics=("parallel",),
            vmem_limit_bytes=_vmem_limit_bytes(),
        ),
        cost_estimate=cost,
    )(x3)


def _large_path(x3, B, M, N, itemsize, cost):
    """M, N >= 128: adaptively tiled 2-D transpose with batch folded into the
    row-tile grid axis (megacore-friendly), lane-dense loads and stores."""
    tm, tn = _pick_tiles(M, N, itemsize, _pair_budget_bytes())
    gm, gn = _cdiv(M, tm), _cdiv(N, tn)
    # Megacore balance: if there is only a single grid step and a free
    # 128-aligned split exists, split so v7x's second TensorCore has work.
    if B * gm * gn == 1 and N % 256 == 0:
        tn, gn = N // 2, 2
    elif B * gm * gn == 1 and M % 256 == 0:
        tm, gm = M // 2, 2
    grid = (B * gm, gn)
    # TODO(synk): sweep pipeline_mode=pl.Buffered(3) on v7x to hide DMA jitter.
    return pl.pallas_call(
        _transpose_tile_kernel,
        out_shape=jax.ShapeDtypeStruct((B, N, M), x3.dtype),
        grid_spec=pltpu.PrefetchScalarGridSpec(
            num_scalar_prefetch=0,
            grid=grid,
            # Batch dim squeezed (None): kernel sees 2-D tiles.  B is folded
            # into the leading grid axis so the parallel split always has
            # extent >= 2 when there is more than one tile of work.
            in_specs=[pl.BlockSpec((None, tm, tn),
                                   lambda p, j: (p // gm, p % gm, j))],
            out_specs=pl.BlockSpec((None, tn, tm),
                                   lambda p, j: (p // gm, j, p % gm)),
        ),
        compiler_params=pltpu.CompilerParams(
            dimension_semantics=("parallel", "parallel"),
            vmem_limit_bytes=_vmem_limit_bytes(),
        ),
        cost_estimate=cost,
    )(x3)


def pallas_transpose(x, dim0, dim1):
    """Drop-in equivalent of torch.transpose(x, dim0, dim1)."""
    nd = x.ndim
    dim0 %= nd
    dim1 %= nd
    if dim0 == dim1:
        return x
    d0, d1 = sorted((dim0, dim1))

    # Only the trailing-two-dims swap moves data within lane/sublane tiles; any
    # other axis pair is a pure index permutation best left to XLA (free fuse).
    if (d0, d1) != (nd - 2, nd - 1):
        return jnp.swapaxes(x, dim0, dim1)

    lead = x.shape[:-2]
    M, N = x.shape[-2], x.shape[-1]
    B = int(np.prod(lead)) if lead else 1
    itemsize = jnp.dtype(x.dtype).itemsize
    total_bytes = B * M * N * itemsize

    # Tiny-tensor bypass (covers the real KWS usage, (2, 8, 32) = 2 KiB):
    # kernel dispatch + per-step overhead would dwarf the data movement.
    if total_bytes <= _TINY_BYPASS_BYTES:
        return jnp.swapaxes(x, dim0, dim1)

    x3 = x.reshape(B, M, N)
    cost = pl.CostEstimate(flops=0, transcendentals=0,
                           bytes_accessed=2 * total_bytes)

    if M >= 128 and N >= 128:
        out = _large_path(x3, B, M, N, itemsize, cost)
    else:
        out = _small_path(x3, B, M, N, itemsize, cost)
        if out is None:
            # TODO(synk): extremely skinny planes whose padded footprint exceeds
            # the VMEM budget need a lane-repacking kernel; fall back to XLA.
            return jnp.swapaxes(x, dim0, dim1)

    return out.reshape(*lead, N, M)


if __name__ == "__main__":
    key = jax.random.PRNGKey(0)
    k1, k2, k3, k4 = jax.random.split(key, 4)

    # 1) The actual KWS usage: (batch, channels, time) = (2, 8, 32), Transpose(1, 2).
    #    Tiny -> bypassed around Pallas (dispatch would dominate 2 KiB of traffic).
    x = jax.random.normal(k1, (2, 8, 32), dtype=jnp.float32)
    y = jax.block_until_ready(pallas_transpose(x, 1, 2))
    np.testing.assert_array_equal(np.asarray(y), np.asarray(jnp.swapaxes(x, 1, 2)))

    # 2) Small/skinny-plane Pallas path (batched whole planes, padded-VMEM-aware tb).
    x_small = jax.random.normal(k2, (2048, 8, 32), dtype=jnp.float32)  # 2 MiB
    y_small = jax.block_until_ready(pallas_transpose(x_small, 1, 2))
    np.testing.assert_array_equal(np.asarray(y_small),
                                  np.asarray(jnp.swapaxes(x_small, 1, 2)))

    # 3) Large tiled path: ragged-aware adaptive tiles + megacore split of N.
    x_big = jax.random.normal(k3, (1, 640, 768), dtype=jnp.float32)
    y_big = jax.block_until_ready(pallas_transpose(x_big, -1, -2))
    np.testing.assert_array_equal(np.asarray(y_big),
                                  np.asarray(jnp.swapaxes(x_big, -1, -2)))

    # 4) Large tiled path with batch folded into the row-tile grid axis.
    x_mt = jax.random.normal(k4, (2, 256, 384), dtype=jnp.float32)
    y_mt = jax.block_until_ready(pallas_transpose(x_mt, 1, 2))
    np.testing.assert_array_equal(np.asarray(y_mt),
                                  np.asarray(jnp.swapaxes(x_mt, 1, 2)))

    # 5) Non-trailing axis pair: pure index permutation, delegated to XLA.
    y_perm = jax.block_until_ready(pallas_transpose(x, 0, 1))
    np.testing.assert_array_equal(np.asarray(y_perm),
                                  np.asarray(jnp.swapaxes(x, 0, 1)))

    print("KERNEL_OK")
</pallas_src>

<mosaic_0001>
module attributes {stable_mosaic.version = 11 : i64} {
  func.func @_transpose_planes_kernel(%arg0: i32, %arg1: memref<128x8x32xf32, #tpu.memory_space<vmem>>, %arg2: memref<128x32x8xf32, #tpu.memory_space<vmem>>) attributes {dimension_semantics = [#tpu.dimension_semantics<parallel>], iteration_bounds = array<i64: 16>, scalar_prefetch = 0 : i64, scratch_operands = 0 : i64, tpu.core_type = #tpu.core_type<tc>, window_params = [{transform_indices = @transform_0, window_bounds = array<i64: 128, 8, 32>}, {transform_indices = @transform_1, window_bounds = array<i64: 128, 32, 8>}]} {
    %c0 = arith.constant 0 : index
    %c0_0 = arith.constant 0 : index
    %c0_1 = arith.constant 0 : index
    %0 = vector.load %arg1[%c0, %c0_0, %c0_1] : memref<128x8x32xf32, #tpu.memory_space<vmem>>, vector<128x8x32xf32>
    %1 = tpu.transpose %0, [0, 2, 1] : vector<128x8x32xf32> -> vector<128x32x8xf32>
    %c0_2 = arith.constant 0 : index
    %c0_3 = arith.constant 0 : index
    %c0_4 = arith.constant 0 : index
    %2 = vector.load %arg2[%c0_2, %c0_3, %c0_4] : memref<128x32x8xf32, #tpu.memory_space<vmem>>, vector<128x32x8xf32>
    tpu.vector_store %arg2[%c0_2, %c0_3, %c0_4], %1 {strides = array<i32>} : memref<128x32x8xf32, #tpu.memory_space<vmem>>, vector<128x32x8xf32>,
    return
  }
  func.func @transform_0(%arg0: i32) -> (i32, i32, i32) {
    %c0_i32 = arith.constant 0 : i32
    %c0_i32_0 = arith.constant 0 : i32
    %c0_i32_1 = arith.constant 0 : i32
    return %arg0, %c0_i32, %c0_i32_0 : i32, i32, i32
  }
  func.func @transform_1(%arg0: i32) -> (i32, i32, i32) {
    %c0_i32 = arith.constant 0 : i32
    %c0_i32_0 = arith.constant 0 : i32
    %c0_i32_1 = arith.constant 0 : i32
    return %arg0, %c0_i32, %c0_i32_0 : i32, i32, i32
  }
}

</mosaic_0001>

<llo_original>
// kernel: tpu_custom_call.1
$region0: #{tpu_custom_call.1}
  #allocation0 [shape = 'u32[]', space=smem, size = 0x4, offset = 0x4, fixed_abs, tag = 'smem constant byte address 0x4 - core index']
  #allocation1 [shape = 'u32[144,128]{1,0:T(1,128)}', space=vmem, size = 0x12000, scoped, tag = 'internal scratch']
  %s0 = inlined_call_operand.vmem [shape: f32[2048,8,32], index: 0, kind: input, shape index: {}]
  %s1 = inlined_call_operand.vmem [shape: f32[2048,32,8], index: 1, kind: output, shape index: {}]
  %s2 = sld [smem:[#allocation0]]
  $region37: #{tpu_custom_call.1} parent=0
    _
  %s4 = ssub.s32 1, %s2
  %s5 = scalar_select 0, %s4, %s2
  loop: start=0, step=1, limit=18
  $region2: #{tpu_custom_call.1} parent=0 // loop_pre_header
    _
  $region3: #{tpu_custom_call.1} parent=0 // loop_header
    %s7 = sphi 0, %s11
    %p8 = scmp.ge.s32.totalorder %s7, 18
    %s17 = sphi 0, %s19
    %s20 = sphi 0, %s17
    %s21 = sphi 0, %s20
    %s37 = sphi 0, %s21
    %s43 = sphi 0, %s45
    %s46 = sphi 0, %s43
    %s47 = sphi 0, %s46
    %s63 = sphi 0, %s47
  $region4: #{tpu_custom_call.1} parent=0 // loop_header_branch
    %10 = sbr.rel (%p8) target = $region8
  $region5: #{tpu_custom_call.1} parent=0 // loop_body
    %s12 = ssub.s32 %s7, 1
    %s13 = ssub.s32 %s7, 2
    %s14 = sadd.s32 %s7, 1
    %s15 = ssub.s32 %s7, %s14
    %p16 = scmp.eq.s32.totalorder %s15, 0
    %s18 = sadd.s32 %s17, 1
    %s19 = scalar_select %p16, %s17, %s18
    %p22 = pneg %p16
    %p23 = scmp.eq.s32.totalorder %s7, 15
    %p24 = por %p22, %p23
    %p25 = scmp.ne.s32.totalorder %s17, %s20
    %p26 = scmp.eq.s32.totalorder %s7, 0
    %p27 = por %p25, %p26
    %p28 = scmp.ne.s32.totalorder %s17, %s20
    %p29 = scmp.eq.s32.totalorder %s12, 15
    %p30 = por %p28, %p29
    %p31 = scmp.ne.s32.totalorder %s20, %s21
    %p32 = scmp.eq.s32.totalorder %s12, 0
    %p33 = por %p31, %p32
    %p34 = scmp.ne.s32.totalorder %s20, %s21
    %p35 = scmp.eq.s32.totalorder %s13, 15
    %p36 = por %p34, %p35
    %p38 = scmp.ne.s32.totalorder %s21, %s37
    %p39 = scmp.eq.s32.totalorder %s13, 0
    %p40 = por %p38, %p39
    %s41 = ssub.s32 %s7, %s14
    %p42 = scmp.eq.s32.totalorder %s41, 0
    %s44 = sadd.s32 %s43, 1
    %s45 = scalar_select %p42, %s43, %s44
    %p48 = pneg %p42
    %p49 = scmp.eq.s32.totalorder %s7, 15
    %p50 = por %p48, %p49
    %p51 = scmp.ne.s32.totalorder %s43, %s46
    %p52 = scmp.eq.s32.totalorder %s7, 0
    %p53 = por %p51, %p52
    %p54 = scmp.ne.s32.totalorder %s43, %s46
    %p55 = scmp.eq.s32.totalorder %s12, 15
    %p56 = por %p54, %p55
    %p57 = scmp.ne.s32.totalorder %s46, %s47
    %p58 = scmp.eq.s32.totalorder %s12, 0
    %p59 = por %p57, %p58
    %p60 = scmp.ne.s32.totalorder %s46, %s47
    %p61 = scmp.eq.s32.totalorder %s13, 15
    %p62 = por %p60, %p61
    %p64 = scmp.ne.s32.totalorder %s47, %s63
    %p65 = scmp.eq.s32.totalorder %s13, 0
    %p66 = por %p64, %p65
    %p67 = scmp.le.s32.totalorder 1, %s7
    %p68 = scmp.lt.s32.totalorder %s7, 17
    %p69 = pnand %p67, %p68
    %p70 = pneg %p69
    // Predicated region
    $region9: #{tpu_custom_call.1} parent=5 // pred_check
      _
    $region10: #{tpu_custom_call.1} parent=5 // pred_check_branch
      %72 = sbr.rel (%p69) target = $region12
    $region11: #{tpu_custom_call.1} parent=5 // pred_region
      %s73 = ssub.s32 %s7, 1
    $region12: #{tpu_custom_call.1} parent=5 // pred_fallthru
      _
    %p74 = scmp.lt.s32.totalorder %s7, 16
    // Predicated region
    $region13: #{tpu_custom_call.1} parent=5 // pred_check
      %p75 = pneg %p74
    $region14: #{tpu_custom_call.1} parent=5 // pred_check_branch
      %77 = sbr.rel (%p75) target = $region16
    $region15: #{tpu_custom_call.1} parent=5 // pred_region
      // Predicated region
      $region17: #{tpu_custom_call.1} parent=15 // pred_check
        %p78 = pneg %p27
      $region18: #{tpu_custom_call.1} parent=15 // pred_check_branch
        %80 = sbr.rel (%p78) target = $region20
      $region19: #{tpu_custom_call.1} parent=15 // pred_region
        %s81 = smul.u32 128, %s7
        %p82 = scmp.lt.s32.totalorder %s81, 2047
        %s83 = scalar_select %p82, %s81, 2047
        %s84 = smul.addr %s83, 8
        %s85 = scalar_lea.vmem %s0, %s84
        %s86 = smul.u32 128, %s7
      $region20: #{tpu_custom_call.1} parent=15 // pred_fallthru
        _
    $region16: #{tpu_custom_call.1} parent=5 // pred_fallthru
      _
    %p87 = scmp.le.s32.totalorder 1, %s7
    %p88 = scmp.lt.s32.totalorder %s7, 17
    %p89 = pnand %p87, %p88
    %p90 = pneg %p89
    // Predicated region
    $region21: #{tpu_custom_call.1} parent=5 // pred_check
      _
    $region22: #{tpu_custom_call.1} parent=5 // pred_check_branch
      %92 = sbr.rel (%p89) target = $region24
    $region23: #{tpu_custom_call.1} parent=5 // pred_region
      %s93 = ssub.s32 %s7, 1
      %s94 = smul.u32 128, %s12
      %p95 = scmp.lt.s32.totalorder %s94, 2047
      %s96 = scalar_select %p95, %s94, 2047
      %s97 = smul.addr %s96, 8
      %s98 = scalar_lea.vmem %s0, %s97
      %p99 = pneg %p33
      %p100 = pneg %p30
      %p101 = pneg %p59
      %p102 = pneg %p56
      %s103 = smul.u32 128, %s12
      %p104 = scmp.lt.s32.totalorder %s103, 2047
      %s105 = scalar_select %p104, %s103, 2047
      %s106 = smul.addr %s105, 4
      %s107 = smul.addr %s106, 8
      %s108 = scalar_lea.vmem %s1, %s107
      %s109 = smul.u32 128, %s12
      %p110 = scmp.lt.s32.totalorder %s109, 2047
      %s111 = scalar_select %p110, %s109, 2047
      %s112 = smul.addr %s111, 8
      %s113 = scalar_lea.vmem %s0, %s112
      %s114 = smul.u32 128, %s12
      %s115 = smul.u32 128, %s12
      %p116 = scmp.lt.s32.totalorder %s115, 2047
      %s117 = scalar_select %p116, %s115, 2047
      %s118 = smul.addr %s117, 4
      %s119 = smul.addr %s118, 8
      %s120 = scalar_lea.vmem %s1, %s119
      %s121 = smul.u32 128, %s12
      %v122 = vld [vmem:[%s113] sm:$0xff]
      %v123 = vld [vmem:[%s113 + $0x8] sm:$0xff]
      %v124 = vld [vmem:[%s113 + $0x10] sm:$0xff]
      %v125 = vld [vmem:[%s113 + $0x18] sm:$0xff]
      %v126 = vld [vmem:[%s113 + $0x20] sm:$0xff]
      %v127 = vld [vmem:[%s113 + $0x28] sm:$0xff]
      %v128 = vld [vmem:[%s113 + $0x30] sm:$0xff]
      %v129 = vld [vmem:[%s113 + $0x38] sm:$0xff]
      %v130 = vld [vmem:[%s113 + $0x40] sm:$0xff]
      %v131 = vld [vmem:[%s113 + $0x48] sm:$0xff]
      %v132 = vld [vmem:[%s113 + $0x50] sm:$0xff]
      %v133 = vld [vmem:[%s113 + $0x58] sm:$0xff]
      %v134 = vld [vmem:[%s113 + $0x60] sm:$0xff]
      %v135 = vld [vmem:[%s113 + $0x68] sm:$0xff]
      %v136 = vld [vmem:[%s113 + $0x70] sm:$0xff]
      %v137 = vld [vmem:[%s113 + $0x78] sm:$0xff]
      %v138 = vld [vmem:[%s113 + $0x80] sm:$0xff]
      %v139 = vld [vmem:[%s113 + $0x88] sm:$0xff]
      %v140 = vld [vmem:[%s113 + $0x90] sm:$0xff]
      %v141 = vld [vmem:[%s113 + $0x98] sm:$0xff]
      %v142 = vld [vmem:[%s113 + $0xa0] sm:$0xff]
      %v143 = vld [vmem:[%s113 + $0xa8] sm:$0xff]
      %v144 = vld [vmem:[%s113 + $0xb0] sm:$0xff]
      %v145 = vld [vmem:[%s113 + $0xb8] sm:$0xff]
      %v146 = vld [vmem:[%s113 + $0xc0] sm:$0xff]
      %v147 = vld [vmem:[%s113 + $0xc8] sm:$0xff]
      %v148 = vld [vmem:[%s113 + $0xd0] sm:$0xff]
      %v149 = vld [vmem:[%s113 + $0xd8] sm:$0xff]
      %v150 = vld [vmem:[%s113 + $0xe0] sm:$0xff]
      %v151 = vld [vmem:[%s113 + $0xe8] sm:$0xff]
      %v152 = vld [vmem:[%s113 + $0xf0] sm:$0xff]
      %v153 = vld [vmem:[%s113 + $0xf8] sm:$0xff]
      %v154 = vld [vmem:[%s113 + $0x100] sm:$0xff]
      %v155 = vld [vmem:[%s113 + $0x108] sm:$0xff]
      %v156 = vld [vmem:[%s113 + $0x110] sm:$0xff]
      %v157 = vld [vmem:[%s113 + $0x118] sm:$0xff]
      %v158 = vld [vmem:[%s113 + $0x120] sm:$0xff]
      %v159 = vld [vmem:[%s113 + $0x128] sm:$0xff]
      %v160 = vld [vmem:[%s113 + $0x130] sm:$0xff]
      %v161 = vld [vmem:[%s113 + $0x138] sm:$0xff]
      %v162 = vld [vmem:[%s113 + $0x140] sm:$0xff]
      %v163 = vld [vmem:[%s113 + $0x148] sm:$0xff]
      %v164 = vld [vmem:[%s113 + $0x150] sm:$0xff]
      %v165 = vld [vmem:[%s113 + $0x158] sm:$0xff]
      %v166 = vld [vmem:[%s113 + $0x160] sm:$0xff]
      %v167 = vld [vmem:[%s113 + $0x168] sm:$0xff]
      %v168 = vld [vmem:[%s113 + $0x170] sm:$0xff]
      %v169 = vld [vmem:[%s113 + $0x178] sm:$0xff]
      %v170 = vld [vmem:[%s113 + $0x180] sm:$0xff]
      %v171 = vld [vmem:[%s113 + $0x188] sm:$0xff]
      %v172 = vld [vmem:[%s113 + $0x190] sm:$0xff]
      %v173 = vld [vmem:[%s113 + $0x198] sm:$0xff]
      %v174 = vld [vmem:[%s113 + $0x1a0] sm:$0xff]
      %v175 = vld [vmem:[%s113 + $0x1a8] sm:$0xff]
      %v176 = vld [vmem:[%s113 + $0x1b0] sm:$0xff]
      %v177 = vld [vmem:[%s113 + $0x1b8] sm:$0xff]
      %v178 = vld [vmem:[%s113 + $0x1c0] sm:$0xff]
      %v179 = vld [vmem:[%s113 + $0x1c8] sm:$0xff]
      %v180 = vld [vmem:[%s113 + $0x1d0] sm:$0xff]
      %v181 = vld [vmem:[%s113 + $0x1d8] sm:$0xff]
      %v182 = vld [vmem:[%s113 + $0x1e0] sm:$0xff]
      %v183 = vld [vmem:[%s113 + $0x1e8] sm:$0xff]
      %v184 = vld [vmem:[%s113 + $0x1f0] sm:$0xff]
      %v185 = vld [vmem:[%s113 + $0x1f8] sm:$0xff]
      %v186 = vld [vmem:[%s113 + $0x200] sm:$0xff]
      %v187 = vld [vmem:[%s113 + $0x208] sm:$0xff]
      %v188 = vld [vmem:[%s113 + $0x210] sm:$0xff]
      %v189 = vld [vmem:[%s113 + $0x218] sm:$0xff]
      %v190 = vld [vmem:[%s113 + $0x220] sm:$0xff]
      %v191 = vld [vmem:[%s113 + $0x228] sm:$0xff]
      %v192 = vld [vmem:[%s113 + $0x230] sm:$0xff]
      %v193 = vld [vmem:[%s113 + $0x238] sm:$0xff]
      %v194 = vld [vmem:[%s113 + $0x240] sm:$0xff]
      %v195 = vld [vmem:[%s113 + $0x248] sm:$0xff]
      %v196 = vld [vmem:[%s113 + $0x250] sm:$0xff]
      %v197 = vld [vmem:[%s113 + $0x258] sm:$0xff]
      %v198 = vld [vmem:[%s113 + $0x260] sm:$0xff]
      %v199 = vld [vmem:[%s113 + $0x268] sm:$0xff]
      %v200 = vld [vmem:[%s113 + $0x270] sm:$0xff]
      %v201 = vld [vmem:[%s113 + $0x278] sm:$0xff]
      %v202 = vld [vmem:[%s113 + $0x280] sm:$0xff]
      %v203 = vld [vmem:[%s113 + $0x288] sm:$0xff]
      %v204 = vld [vmem:[%s113 + $0x290] sm:$0xff]
      %v205 = vld [vmem:[%s113 + $0x298] sm:$0xff]
      %v206 = vld [vmem:[%s113 + $0x2a0] sm:$0xff]
      %v207 = vld [vmem:[%s113 + $0x2a8] sm:$0xff]
      %v208 = vld [vmem:[%s113 + $0x2b0] sm:$0xff]
      %v209 = vld [vmem:[%s113 + $0x2b8] sm:$0xff]
      %v210 = vld [vmem:[%s113 + $0x2c0] sm:$0xff]
      %v211 = vld [vmem:[%s113 + $0x2c8] sm:$0xff]
      %v212 = vld [vmem:[%s113 + $0x2d0] sm:$0xff]
      %v213 = vld [vmem:[%s113 + $0x2d8] sm:$0xff]
      %v214 = vld [vmem:[%s113 + $0x2e0] sm:$0xff]
      %v215 = vld [vmem:[%s113 + $0x2e8] sm:$0xff]
      %v216 = vld [vmem:[%s113 + $0x2f0] sm:$0xff]
      %v217 = vld [vmem:[%s113 + $0x2f8] sm:$0xff]
      %v218 = vld [vmem:[%s113 + $0x300] sm:$0xff]
      %v219 = vld [vmem:[%s113 + $0x308] sm:$0xff]
      %v220 = vld [vmem:[%s113 + $0x310] sm:$0xff]
      %v221 = vld [vmem:[%s113 + $0x318] sm:$0xff]
      %v222 = vld [vmem:[%s113 + $0x320] sm:$0xff]
      %v223 = vld [vmem:[%s113 + $0x328] sm:$0xff]
      %v224 = vld [vmem:[%s113 + $0x330] sm:$0xff]
      %v225 = vld [vmem:[%s113 + $0x338] sm:$0xff]
      %v226 = vld [vmem:[%s113 + $0x340] sm:$0xff]
      %v227 = vld [vmem:[%s113 + $0x348] sm:$0xff]
      %v228 = vld [vmem:[%s113 + $0x350] sm:$0xff]
      %v229 = vld [vmem:[%s113 + $0x358] sm:$0xff]
      %v230 = vld [vmem:[%s113 + $0x360] sm:$0xff]
      %v231 = vld [vmem:[%s113 + $0x368] sm:$0xff]
      %v232 = vld [vmem:[%s113 + $0x370] sm:$0xff]
      %v233 = vld [vmem:[%s113 + $0x378] sm:$0xff]
      %v234 = vld [vmem:[%s113 + $0x380] sm:$0xff]
      %v235 = vld [vmem:[%s113 + $0x388] sm:$0xff]
      %v236 = vld [vmem:[%s113 + $0x390] sm:$0xff]
      %v237 = vld [vmem:[%s113 + $0x398] sm:$0xff]
      %v238 = vld [vmem:[%s113 + $0x3a0] sm:$0xff]
      %v239 = vld [vmem:[%s113 + $0x3a8] sm:$0xff]
      %v240 = vld [vmem:[%s113 + $0x3b0] sm:$0xff]
      %v241 = vld [vmem:[%s113 + $0x3b8] sm:$0xff]
      %v242 = vld [vmem:[%s113 + $0x3c0] sm:$0xff]
      %v243 = vld [vmem:[%s113 + $0x3c8] sm:$0xff]
      %v244 = vld [vmem:[%s113 + $0x3d0] sm:$0xff]
      %v245 = vld [vmem:[%s113 + $0x3d8] sm:$0xff]
      %v246 = vld [vmem:[%s113 + $0x3e0] sm:$0xff]
      %v247 = vld [vmem:[%s113 + $0x3e8] sm:$0xff]
      %v248 = vld [vmem:[%s113 + $0x3f0] sm:$0xff]
      %v249 = vld [vmem:[%s113 + $0x3f8] sm:$0xff]
      %250 = vxpose.xlu0.b32.start [1/16] %v122, 128
      %251 = vxpose.xlu0.b32.cont [2/16] 0.0, 128
      %252 = vxpose.xlu0.b32.cont [3/16] 0.0, 128
      %253 = vxpose.xlu0.b32.cont [4/16] 0.0, 128
      %254 = vxpose.xlu0.b32.cont [5/16] 0.0, 128
      %255 = vxpose.xlu0.b32.cont [6/16] 0.0, 128
      %256 = vxpose.xlu0.b32.cont [7/16] 0.0, 128
      %257 = vxpose.xlu0.b32.cont [8/16] 0.0, 128
      %258 = vxpose.xlu0.b32.cont [9/16] 0.0, 128
      %259 = vxpose.xlu0.b32.cont [10/16] 0.0, 128
      %260 = vxpose.xlu0.b32.cont [11/16] 0.0, 128
      %261 = vxpose.xlu0.b32.cont [12/16] 0.0, 128
      %262 = vxpose.xlu0.b32.cont [13/16] 0.0, 128
      %263 = vxpose.xlu0.b32.cont [14/16] 0.0, 128
      %264 = vxpose.xlu0.b32.cont [15/16] 0.0, 128
      %265 = vxpose.xlu0.b32.end [16/16] 0.0, 128
      %v266 = vpop.trf.xlu0
      %v267 = vpop.trf.xlu0
      %v268 = vpop.trf.xlu0
      %v269 = vpop.trf.xlu0
      %v270 = vpop.trf.xlu0
      %v271 = vpop.trf.xlu0
      %v272 = vpop.trf.xlu0
      %v273 = vpop.trf.xlu0
      %v274 = vpop.trf.xlu0
      %v275 = vpop.trf.xlu0
      %v276 = vpop.trf.xlu0
      %v277 = vpop.trf.xlu0
      %v278 = vpop.trf.xlu0
      %v279 = vpop.trf.xlu0
      %v280 = vpop.trf.xlu0
      %v281 = vpop.trf.xlu0
      %282 = vxpose.xlu0.b32.start [1/16] %v123, 128
      %283 = vxpose.xlu0.b32.cont [2/16] 0.0, 128
      %284 = vxpose.xlu0.b32.cont [3/16] 0.0, 128
      %285 = vxpose.xlu0.b32.cont [4/16] 0.0, 128
      %286 = vxpose.xlu0.b32.cont [5/16] 0.0, 128
      %287 = vxpose.xlu0.b32.cont [6/16] 0.0, 128
      %288 = vxpose.xlu0.b32.cont [7/16] 0.0, 128
      %289 = vxpose.xlu0.b32.cont [8/16] 0.0, 128
      %290 = vxpose.xlu0.b32.cont [9/16] 0.0, 128
      %291 = vxpose.xlu0.b32.cont [10/16] 0.0, 128
      %292 = vxpose.xlu0.b32.cont [11/16] 0.0, 128
      %293 = vxpose.xlu0.b32.cont [12/16] 0.0, 128
      %294 = vxpose.xlu0.b32.cont [13/16] 0.0, 128
      %295 = vxpose.xlu0.b32.cont [14/16] 0.0, 128
      %296 = vxpose.xlu0.b32.cont [15/16] 0.0, 128
      %297 = vxpose.xlu0.b32.end [16/16] 0.0, 128
      %v298 = vpop.trf.xlu0
      %v299 = vpop.trf.xlu0
      %v300 = vpop.trf.xlu0
      %v301 = vpop.trf.xlu0
      %v302 = vpop.trf.xlu0
      %v303 = vpop.trf.xlu0
      %v304 = vpop.trf.xlu0
      %v305 = vpop.trf.xlu0
      %v306 = vpop.trf.xlu0
      %v307 = vpop.trf.xlu0
      %v308 = vpop.trf.xlu0
      %v309 = vpop.trf.xlu0
      %v310 = vpop.trf.xlu0
      %v311 = vpop.trf.xlu0
      %v312 = vpop.trf.xlu0
      %v313 = vpop.trf.xlu0
      %314 = vxpose.xlu0.b32.start [1/16] %v124, 128
      %315 = vxpose.xlu0.b32.cont [2/16] 0.0, 128
      %316 = vxpose.xlu0.b32.cont [3/16] 0.0, 128
      %317 = vxpose.xlu0.b32.cont [4/16] 0.0, 128
      %318 = vxpose.xlu0.b32.cont [5/16] 0.0, 128
      %319 = vxpose.xlu0.b32.cont [6/16] 0.0, 128
      %320 = vxpose.xlu0.b32.cont [7/16] 0.0, 128
      %321 = vxpose.xlu0.b32.cont [8/16] 0.0, 128
      %322 = vxpose.xlu0.b32.cont [9/16] 0.0, 128
      %323 = vxpose.xlu0.b32.cont [10/16] 0.0, 128
      %324 = vxpose.xlu0.b32.cont [11/16] 0.0, 128
      %325 = vxpose.xlu0.b32.cont [12/16] 0.0, 128
      %326 = vxpose.xlu0.b32.cont [13/16] 0.0, 128
      %327 = vxpose.xlu0.b32.cont [14/16] 0.0, 128
      %328 = vxpose.xlu0.b32.cont [15/16] 0.0, 128
      %329 = vxpose.xlu0.b32.end [16/16] 0.0, 128
      %v330 = vpop.trf.xlu0
      %v331 = vpop.trf.xlu0
      %v332 = vpop.trf.xlu0
      %v333 = vpop.trf.xlu0
      %v334 = vpop.trf.xlu0
      %v335 = vpop.trf.xlu0
      %v336 = vpop.trf.xlu0
      %v337 = vpop.trf.xlu0
      %v338 = vpop.trf.xlu0
      %v339 = vpop.trf.xlu0
      %v340 = vpop.trf.xlu0
      %v341 = vpop.trf.xlu0
      %v342 = vpop.trf.xlu0
      %v343 = vpop.trf.xlu0
      %v344 = vpop.trf.xlu0
      %v345 = vpop.trf.xlu0
      %346 = vxpose.xlu0.b32.start [1/16] %v125, 128
      %347 = vxpose.xlu0.b32.cont [2/16] 0.0, 128
      %348 = vxpose.xlu0.b32.cont [3/16] 0.0, 128
      %349 = vxpose.xlu0.b32.cont [4/16] 0.0, 128
      %350 = vxpose.xlu0.b32.cont [5/16] 0.0, 128
      %351 = vxpose.xlu0.b32.cont [6/16] 0.0, 128
      %352 = vxpose.xlu0.b32.cont [7/16] 0.0, 128
      %353 = vxpose.xlu0.b32.cont [8/16] 0.0, 128
      %354 = vxpose.xlu0.b32.cont [9/16] 0.0, 128
      %355 = vxpose.xlu0.b32.cont [10/16] 0.0, 128
      %356 = vxpose.xlu0.b32.cont [11/16] 0.0, 128
      %357 = vxpose.xlu0.b32.cont [12/16] 0.0, 128
      %358 = vxpose.xlu0.b32.cont [13/16] 0.0, 128
      %359 = vxpose.xlu0.b32.cont [14/16] 0.0, 128
      %360 = vxpose.xlu0.b32.cont [15/16] 0.0, 128
      %361 = vxpose.xlu0.b32.end [16/16] 0.0, 128
      %v362 = vpop.trf.xlu0
      %v363 = vpop.trf.xlu0
      %v364 = vpop.trf.xlu0
      %v365 = vpop.trf.xlu0
      %v366 = vpop.trf.xlu0
      %v367 = vpop.trf.xlu0
      %v368 = vpop.trf.xlu0
      %v369 = vpop.trf.xlu0
      %v370 = vpop.trf.xlu0
      %v371 = vpop.trf.xlu0
      %v372 = vpop.trf.xlu0
      %v373 = vpop.trf.xlu0
      %v374 = vpop.trf.xlu0
      %v375 = vpop.trf.xlu0
      %v376 = vpop.trf.xlu0
      %v377 = vpop.trf.xlu0
      %378 = vxpose.xlu0.b32.start [1/16] %v126, 128
      %379 = vxpose.xlu0.b32.cont [2/16] 0.0, 128
      %380 = vxpose.xlu0.b32.cont [3/16] 0.0, 128
      %381 = vxpose.xlu0.b32.cont [4/16] 0.0, 128
      %382 = vxpose.xlu0.b32.cont [5/16] 0.0, 128
      %383 = vxpose.xlu0.b32.cont [6/16] 0.0, 128
      %384 = vxpose.xlu0.b32.cont [7/16] 0.0, 128
      %385 = vxpose.xlu0.b32.cont [8/16] 0.0, 128
      %386 = vxpose.xlu0.b32.cont [9/16] 0.0, 128
      %387 = vxpose.xlu0.b32.cont [10/16] 0.0, 128
      %388 = vxpose.xlu0.b32.cont [11/16] 0.0, 128
      %389 = vxpose.xlu0.b32.cont [12/16] 0.0, 128
      %390 = vxpose.xlu0.b32.cont [13/16] 0.0, 128
      %391 = vxpose.xlu0.b32.cont [14/16] 0.0, 128
      %392 = vxpose.xlu0.b32.cont [15/16] 0.0, 128
      %393 = vxpose.xlu0.b32.end [16/16] 0.0, 128
      %v394 = vpop.trf.xlu0
      %v395 = vpop.trf.xlu0
      %v396 = vpop.trf.xlu0
      %v397 = vpop.trf.xlu0
      %v398 = vpop.trf.xlu0
      %v399 = vpop.trf.xlu0
      %v400 = vpop.trf.xlu0
      %v401 = vpop.trf.xlu0
      %v402 = vpop.trf.xlu0
      %v403 = vpop.trf.xlu0
      %v404 = vpop.trf.xlu0
      %v405 = vpop.trf.xlu0
      %v406 = vpop.trf.xlu0
      %v407 = vpop.trf.xlu0
      %v408 = vpop.trf.xlu0
      %v409 = vpop.trf.xlu0
      %410 = vxpose.xlu0.b32.start [1/16] %v127, 128
      %411 = vxpose.xlu0.b32.cont [2/16] 0.0, 128
      %412 = vxpose.xlu0.b32.cont [3/16] 0.0, 128
      %413 = vxpose.xlu0.b32.cont [4/16] 0.0, 128
      %414 = vxpose.xlu0.b32.cont [5/16] 0.0, 128
      %415 = vxpose.xlu0.b32.cont [6/16] 0.0, 128
      %416 = vxpose.xlu0.b32.cont [7/16] 0.0, 128
      %417 = vxpose.xlu0.b32.cont [8/16] 0.0, 128
      %418 = vxpose.xlu0.b32.cont [9/16] 0.0, 128
      %419 = vxpose.xlu0.b32.cont [10/16] 0.0, 128
      %420 = vxpose.xlu0.b32.cont [11/16] 0.0, 128
      %421 = vxpose.xlu0.b32.cont [12/16] 0.0, 128
      %422 = vxpose.xlu0.b32.cont [13/16] 0.0, 128
      %423 = vxpose.xlu0.b32.cont [14/16] 0.0, 128
      %424 = vxpose.xlu0.b32.cont [15/16] 0.0, 128
      %425 = vxpose.xlu0.b32.end [16/16] 0.0, 128
      %v426 = vpop.trf.xlu0
      %v427 = vpop.trf.xlu0
      %v428 = vpop.trf.xlu0
      %v429 = vpop.trf.xlu0
      %v430 = vpop.trf.xlu0
      %v431 = vpop.trf.xlu0
      %v432 = vpop.trf.xlu0
      %v433 = vpop.trf.xlu0
      %v434 = vpop.trf.xlu0
      %v435 = vpop.trf.xlu0
      %v436 = vpop.trf.xlu0
      %v437 = vpop.trf.xlu0
      %v438 = vpop.trf.xlu0
      %v439 = vpop.trf.xlu0
      %v440 = vpop.trf.xlu0
      %v441 = vpop.trf.xlu0
      %442 = vxpose.xlu0.b32.start [1/16] %v128, 128
      %443 = vxpose.xlu0.b32.cont [2/16] 0.0, 128
      %444 = vxpose.xlu0.b32.cont [3/16] 0.0, 128
      %445 = vxpose.xlu0.b32.cont [4/16] 0.0, 128
      %446 = vxpose.xlu0.b32.cont [5/16] 0.0, 128
      %447 = vxpose.xlu0.b32.cont [6/16] 0.0, 128
      %448 = vxpose.xlu0.b32.cont [7/16] 0.0, 128
      %449 = vxpose.xlu0.b32.cont [8/16] 0.0, 128
      %450 = vxpose.xlu0.b32.cont [9/16] 0.0, 128
      %451 = vxpose.xlu0.b32.cont [10/16] 0.0, 128
      %452 = vxpose.xlu0.b32.cont [11/16] 0.0, 128
      %453 = vxpose.xlu0.b32.cont [12/16] 0.0, 128
      %454 = vxpose.xlu0.b32.cont [13/16] 0.0, 128
      %455 = vxpose.xlu0.b32.cont [14/16] 0.0, 128
      %456 = vxpose.xlu0.b32.cont [15/16] 0.0, 128
      %457 = vxpose.xlu0.b32.end [16/16] 0.0, 128
      %v458 = vpop.trf.xlu0
      %v459 = vpop.trf.xlu0
      %v460 = vpop.trf.xlu0
      %v461 = vpop.trf.xlu0
      %v462 = vpop.trf.xlu0
      %v463 = vpop.trf.xlu0
      %v464 = vpop.trf.xlu0
      %v465 = vpop.trf.xlu0
      %v466 = vpop.trf.xlu0
      %v467 = vpop.trf.xlu0
      %v468 = vpop.trf.xlu0
      %v469 = vpop.trf.xlu0
      %v470 = vpop.trf.xlu0
      %v471 = vpop.trf.xlu0
      %v472 = vpop.trf.xlu0
      %v473 = vpop.trf.xlu0
      %474 = vxpose.xlu0.b32.start [1/16] %v129, 128
      %475 = vxpose.xlu0.b32.cont [2/16] 0.0, 128
      %476 = vxpose.xlu0.b32.cont [3/16] 0.0, 128
      %477 = vxpose.xlu0.b32.cont [4/16] 0.0, 128
      %478 = vxpose.xlu0.b32.cont [5/16] 0.0, 128
      %479 = vxpose.xlu0.b32.cont [6/16] 0.0, 128
      %480 = vxpose.xlu0.b32.cont [7/16] 0.0, 128
      %481 = vxpose.xlu0.b32.cont [8/16] 0.0, 128
      %482 = vxpose.xlu0.b32.cont [9/16] 0.0, 128
      %483 = vxpose.xlu0.b32.cont [10/16] 0.0, 128
      %484 = vxpose.xlu0.b32.cont [11/16] 0.0, 128
      %485 = vxpose.xlu0.b32.cont [12/16] 0.0, 128
      %486 = vxpose.xlu0.b32.cont [13/16] 0.0, 128
      %487 = vxpose.xlu0.b32.cont [14/16] 0.0, 128
      %488 = vxpose.xlu0.b32.cont [15/16] 0.0, 128
      %489 = vxpose.xlu0.b32.end [16/16] 0.0, 128
      %v490 = vpop.trf.xlu0
      %v491 = vpop.trf.xlu0
      %v492 = vpop.trf.xlu0
      %v493 = vpop.trf.xlu0
      %v494 = vpop.trf.xlu0
      %v495 = vpop.trf.xlu0
      %v496 = vpop.trf.xlu0
      %v497 = vpop.trf.xlu0
      %v498 = vpop.trf.xlu0
      %v499 = vpop.trf.xlu0
      %v500 = vpop.trf.xlu0
      %v501 = vpop.trf.xlu0
      %v502 = vpop.trf.xlu0
      %v503 = vpop.trf.xlu0
      %v504 = vpop.trf.xlu0
      %v505 = vpop.trf.xlu0
      %506 = vxpose.xlu0.b32.start [1/16] %v130, 128
      %507 = vxpose.xlu0.b32.cont [2/16] 0.0, 128
      %508 = vxpose.xlu0.b32.cont [3/16] 0.0, 128
      %509 = vxpose.xlu0.b32.cont [4/16] 0.0, 128
      %510 = vxpose.xlu0.b32.cont [5/16] 0.0, 128
      %511 = vxpose.xlu0.b32.cont [6/16] 0.0, 128
      %512 = vxpose.xlu0.b32.cont [7/16] 0.0, 128
      %513 = vxpose.xlu0.b32.cont [8/16] 0.0, 128
      %514 = vxpose.xlu0.b32.cont [9/16] 0.0, 128
      %515 = vxpose.xlu0.b32.cont [10/16] 0.0, 128
      %516 = vxpose.xlu0.b32.cont [11/16] 0.0, 128
      %517 = vxpose.xlu0.b32.cont [12/16] 0.0, 128
      %518 = vxpose.xlu0.b32.cont [13/16] 0.0, 128
      %519 = vxpose.xlu0.b32.cont [14/16] 0.0, 128
      %520 = vxpose.xlu0.b32.cont [15/16] 0.0, 128
      %521 = vxpose.xlu0.b32.end [16/16] 0.0, 128
      %v522 = vpop.trf.xlu0
      %v523 = vpop.trf.xlu0
      %v524 = vpop.trf.xlu0
      %v525 = vpop.trf.xlu0
      %v526 = vpop.trf.xlu0
      %v527 = vpop.trf.xlu0
      %v528 = vpop.trf.xlu0
      %v529 = vpop.trf.xlu0
      %v530 = vpop.trf.xlu0
      %v531 = vpop.trf.xlu0
      %v532 = vpop.trf.xlu0
      %v533 = vpop.trf.xlu0
      %v534 = vpop.trf.xlu0
      %v535 = vpop.trf.xlu0
      %v536 = vpop.trf.xlu0
      %v537 = vpop.trf.xlu0
      %538 = vxpose.xlu0.b32.start [1/16] %v131, 128
      %539 = vxpose.xlu0.b32.cont [2/16] 0.0, 128
      %540 = vxpose.xlu0.b32.cont [3/16] 0.0, 128
      %541 = vxpose.xlu0.b32.cont [4/16] 0.0, 128
      %542 = vxpose.xlu0.b32.cont [5/16] 0.0, 128
      %543 = vxpose.xlu0.b32.cont [6/16] 0.0, 128
      %544 = vxpose.xlu0.b32.cont [7/16] 0.0, 128
      %545 = vxpose.xlu0.b32.cont [8/16] 0.0, 128
      %546 = vxpose.xlu0.b32.cont [9/16] 0.0, 128
      %547 = vxpose.xlu0.b32.cont [10/16] 0.0, 128
      %548 = vxpose.xlu0.b32.cont [11/16] 0.0, 128
      %549 = vxpose.xlu0.b32.cont [12/16] 0.0, 128
      %550 = vxpose.xlu0.b32.cont [13/16] 0.0, 128
      %551 = vxpose.xlu0.b32.cont [14/16] 0.0, 128
      %552 = vxpose.xlu0.b32.cont [15/16] 0.0, 128
      %553 = vxpose.xlu0.b32.end [16/16] 0.0, 128
      %v554 = vpop.trf.xlu0
      %v555 = vpop.trf.xlu0
      %v556 = vpop.trf.xlu0
      %v557 = vpop.trf.xlu0
      %v558 = vpop.trf.xlu0
      %v559 = vpop.trf.xlu0
      %v560 = vpop.trf.xlu0
      %v561 = vpop.trf.xlu0
      %v562 = vpop.trf.xlu0
      %v563 = vpop.trf.xlu0
      %v564 = vpop.trf.xlu0
      %v565 = vpop.trf.xlu0
      %v566 = vpop.trf.xlu0
      %v567 = vpop.trf.xlu0
      %v568 = vpop.trf.xlu0
      %v569 = vpop.trf.xlu0
      %570 = vxpose.xlu0.b32.start [1/16] %v132, 128
      %571 = vxpose.xlu0.b32.cont [2/16] 0.0, 128
      %572 = vxpose.xlu0.b32.cont [3/16] 0.0, 128
      %573 = vxpose.xlu0.b32.cont [4/16] 0.0, 128
      %574 = vxpose.xlu0.b32.cont [5/16] 0.0, 128
      %575 = vxpose.xlu0.b32.cont [6/16] 0.0, 128
      %576 = vxpose.xlu0.b32.cont [7/16] 0.0, 128
      %577 = vxpose.xlu0.b32.cont [8/16] 0.0, 128
      %578 = vxpose.xlu0.b32.cont [9/16] 0.0, 128
      %579 = vxpose.xlu0.b32.cont [10/16] 0.0, 128
      %580 = vxpose.xlu0.b32.cont [11/16] 0.0, 128
      %581 = vxpose.xlu0.b32.cont [12/16] 0.0, 128
      %582 = vxpose.xlu0.b32.cont [13/16] 0.0, 128
      %583 = vxpose.xlu0.b32.cont [14/16] 0.0, 128
      %584 = vxpose.xlu0.b32.cont [15/16] 0.0, 128
      %585 = vxpose.xlu0.b32.end [16/16] 0.0, 128
      %v586 = vpop.trf.xlu0
      %v587 = vpop.trf.xlu0
      %v588 = vpop.trf.xlu0
      %v589 = vpop.trf.xlu0
      %v590 = vpop.trf.xlu0
      %v591 = vpop.trf.xlu0
      %v592 = vpop.trf.xlu0
      %v593 = vpop.trf.xlu0
      %v594 = vpop.trf.xlu0
      %v595 = vpop.trf.xlu0
      %v596 = vpop.trf.xlu0
      %v597 = vpop.trf.xlu0
      %v598 = vpop.trf.xlu0
      %v599 = vpop.trf.xlu0
      %v600 = vpop.trf.xlu0
      %v601 = vpop.trf.xlu0
      %602 = vxpose.xlu0.b32.start [1/16] %v133, 128
      %603 = vxpose.xlu0.b32.cont [2/16] 0.0, 128
      %604 = vxpose.xlu0.b32.cont [3/16] 0.0, 128
      %605 = vxpose.xlu0.b32.cont [4/16] 0.0, 128
      %606 = vxpose.xlu0.b32.cont [5/16] 0.0, 128
      %607 = vxpose.xlu0.b32.cont [6/16] 0.0, 128
      %608 = vxpose.xlu0.b32.cont [7/16] 0.0, 128
      %609 = vxpose.xlu0.b32.cont [8/16] 0.0, 128
      %610 = vxpose.xlu0.b32.cont [9/16] 0.0, 128
      %611 = vxpose.xlu0.b32.cont [10/16] 0.0, 128
      %612 = vxpose.xlu0.b32.cont [11/16] 0.0, 128
      %613 = vxpose.xlu0.b32.cont [12/16] 0.0, 128
      %614 = vxpose.xlu0.b32.cont [13/16] 0.0, 128
      %615 = vxpose.xlu0.b32.cont [14/16] 0.0, 128
      %616 = vxpose.xlu0.b32.cont [15/16] 0.0, 128
      %617 = vxpose.xlu0.b32.end [16/16] 0.0, 128
      %v618 = vpop.trf.xlu0
      %v619 = vpop.trf.xlu0
      %v620 = vpop.trf.xlu0
      %v621 = vpop.trf.xlu0
      %v622 = vpop.trf.xlu0
      %v623 = vpop.trf.xlu0
      %v624 = vpop.trf.xlu0
      %v625 = vpop.trf.xlu0
      %v626 = vpop.trf.xlu0
      %v627 = vpop.trf.xlu0
      %v628 = vpop.trf.xlu0
      %v629 = vpop.trf.xlu0
      %v630 = vpop.trf.xlu0
      %v631 = vpop.trf.xlu0
      %v632 = vpop.trf.xlu0
      %v633 = vpop.trf.xlu0
      %634 = vxpose.xlu0.b32.start [1/16] %v134, 128
      %635 = vxpose.xlu0.b32.cont [2/16] 0.0, 128
      %636 = vxpose.xlu0.b32.cont [3/16] 0.0, 128
      %637 = vxpose.xlu0.b32.cont [4/16] 0.0, 128
      %638 = vxpose.xlu0.b32.cont [5/16] 0.0, 128
      %639 = vxpose.xlu0.b32.cont [6/16] 0.0, 128
      %640 = vxpose.xlu0.b32.cont [7/16] 0.0, 128
      %641 = vxpose.xlu0.b32.cont [8/16] 0.0, 128
      %642 = vxpose.xlu0.b32.cont [9/16] 0.0, 128
      %643 = vxpose.xlu0.b32.cont [10/16] 0.0, 128
      %644 = vxpose.xlu0.b32.cont [11/16] 0.0, 128
      %645 = vxpose.xlu0.b32.cont [12/16] 0.0, 128
      %646 = vxpose.xlu0.b32.cont [13/16] 0.0, 128
      %647 = vxpose.xlu0.b32.cont [14/16] 0.0, 128
      %648 = vxpose.xlu0.b32.cont [15/16] 0.0, 128
      %649 = vxpose.xlu0.b32.end [16/16] 0.0, 128
      %v650 = vpop.trf.xlu0
      %v651 = vpop.trf.xlu0
      %v652 = vpop.trf.xlu0
      %v653 = vpop.trf.xlu0
      %v654 = vpop.trf.xlu0
      %v655 = vpop.trf.xlu0
      %v656 = vpop.trf.xlu0
      %v657 = vpop.trf.xlu0
      %v658 = vpop.trf.xlu0
      %v659 = vpop.trf.xlu0
      %v660 = vpop.trf.xlu0
      %v661 = vpop.trf.xlu0
      %v662 = vpop.trf.xlu0
      %v663 = vpop.trf.xlu0
      %v664 = vpop.trf.xlu0
      %v665 = vpop.trf.xlu0
      %666 = vxpose.xlu0.b32.start [1/16] %v135, 128
      %667 = vxpose.xlu0.b32.cont [2/16] 0.0, 128
      %668 = vxpose.xlu0.b32.cont [3/16] 0.0, 128
      %669 = vxpose.xlu0.b32.cont [4/16] 0.0, 128
      %670 = vxpose.xlu0.b32.cont [5/16] 0.0, 128
      %671 = vxpose.xlu0.b32.cont [6/16] 0.0, 128
      %672 = vxpose.xlu0.b32.cont [7/16] 0.0, 128
      %673 = vxpose.xlu0.b32.cont [8/16] 0.0, 128
      %674 = vxpose.xlu0.b32.cont [9/16] 0.0, 128
      %675 = vxpose.xlu0.b32.cont [10/16] 0.0, 128
      %676 = vxpose.xlu0.b32.cont [11/16] 0.0, 128
      %677 = vxpose.xlu0.b32.cont [12/16] 0.0, 128
      %678 = vxpose.xlu0.b32.cont [13/16] 0.0, 128
      %679 = vxpose.xlu0.b32.cont [14/16] 0.0, 128
      %680 = vxpose.xlu0.b32.cont [15/16] 0.0, 128
      %681 = vxpose.xlu0.b32.end [16/16] 0.0, 128
      %v682 = vpop.trf.xlu0
      %v683 = vpop.trf.xlu0
      %v684 = vpop.trf.xlu0
      %v685 = vpop.trf.xlu0
      %v686 = vpop.trf.xlu0
      %v687 = vpop.trf.xlu0
      %v688 = vpop.trf.xlu0
      %v689 = vpop.trf.xlu0
      %v690 = vpop.trf.xlu0
      %v691 = vpop.trf.xlu0
      %v692 = vpop.trf.xlu0
      %v693 = vpop.trf.xlu0
      %v694 = vpop.trf.xlu0
      %v695 = vpop.trf.xlu0
      %v696 = vpop.trf.xlu0
      %v697 = vpop.trf.xlu0
      %698 = vxpose.xlu0.b32.start [1/16] %v136, 128
      %699 = vxpose.xlu0.b32.cont [2/16] 0.0, 128
      %700 = vxpose.xlu0.b32.cont [3/16] 0.0, 128
      %701 = vxpose.xlu0.b32.cont [4/16] 0.0, 128
      %702 = vxpose.xlu0.b32.cont [5/16] 0.0, 128
      %703 = vxpose.xlu0.b32.cont [6/16] 0.0, 128
      %704 = vxpose.xlu0.b32.cont [7/16] 0.0, 128
      %705 = vxpose.xlu0.b32.cont [8/16] 0.0, 128
      %706 = vxpose.xlu0.b32.cont [9/16] 0.0, 128
      %707 = vxpose.xlu0.b32.cont [10/16] 0.0, 128
      %708 = vxpose.xlu0.b32.cont [11/16] 0.0, 128
      %709 = vxpose.xlu0.b32.cont [12/16] 0.0, 128
      %710 = vxpose.xlu0.b32.cont [13/16] 0.0, 128
      %711 = vxpose.xlu0.b32.cont [14/16] 0.0, 128
      %712 = vxpose.xlu0.b32.cont [15/16] 0.0, 128
      %713 = vxpose.xlu0.b32.end [16/16] 0.0, 128
      %v714 = vpop.trf.xlu0
      %v715 = vpop.trf.xlu0
      %v716 = vpop.trf.xlu0
      %v717 = vpop.trf.xlu0
      %v718 = vpop.trf.xlu0
      %v719 = vpop.trf.xlu0
      %v720 = vpop.trf.xlu0
      %v721 = vpop.trf.xlu0
      %v722 = vpop.trf.xlu0
      %v723 = vpop.trf.xlu0
      %v724 = vpop.trf.xlu0
      %v725 = vpop.trf.xlu0
      %v726 = vpop.trf.xlu0
      %v727 = vpop.trf.xlu0
      %v728 = vpop.trf.xlu0
      %v729 = vpop.trf.xlu0
      %730 = vxpose.xlu0.b32.start [1/16] %v137, 128
      %731 = vxpose.xlu0.b32.cont [2/16] 0.0, 128
      %732 = vxpose.xlu0.b32.cont [3/16] 0.0, 128
      %733 = vxpose.xlu0.b32.cont [4/16] 0.0, 128
      %734 = vxpose.xlu0.b32.cont [5/16] 0.0, 128
      %735 = vxpose.xlu0.b32.cont [6/16] 0.0, 128
      %736 = vxpose.xlu0.b32.cont [7/16] 0.0, 128
      %737 = vxpose.xlu0.b32.cont [8/16] 0.0, 128
      %738 = vxpose.xlu0.b32.cont [9/16] 0.0, 128
      %739 = vxpose.xlu0.b32.cont [10/16] 0.0, 128
      %740 = vxpose.xlu0.b32.cont [11/16] 0.0, 128
      %741 = vxpose.xlu0.b32.cont [12/16] 0.0, 128
      %742 = vxpose.xlu0.b32.cont [13/16] 0.0, 128
      %743 = vxpose.xlu0.b32.cont [14/16] 0.0, 128
      %744 = vxpose.xlu0.b32.cont [15/16] 0.0, 128
      %745 = vxpose.xlu0.b32.end [16/16] 0.0, 128
      %v746 = vpop.trf.xlu0
      %v747 = vpop.trf.xlu0
      %v748 = vpop.trf.xlu0
      %v749 = vpop.trf.xlu0
      %v750 = vpop.trf.xlu0
      %v751 = vpop.trf.xlu0
      %v752 = vpop.trf.xlu0
      %v753 = vpop.trf.xlu0
      %v754 = vpop.trf.xlu0
      %v755 = vpop.trf.xlu0
      %v756 = vpop.trf.xlu0
      %v757 = vpop.trf.xlu0
      %v758 = vpop.trf.xlu0
      %v759 = vpop.trf.xlu0
      %v760 = vpop.trf.xlu0
      %v761 = vpop.trf.xlu0
      %762 = vxpose.xlu0.b32.start [1/16] %v138, 128
      %763 = vxpose.xlu0.b32.cont [2/16] 0.0, 128
      %764 = vxpose.xlu0.b32.cont [3/16] 0.0, 128
      %765 = vxpose.xlu0.b32.cont [4/16] 0.0, 128
      %766 = vxpose.xlu0.b32.cont [5/16] 0.0, 128
      %767 = vxpose.xlu0.b32.cont [6/16] 0.0, 128
      %768 = vxpose.xlu0.b32.cont [7/16] 0.0, 128
      %769 = vxpose.xlu0.b32.cont [8/16] 0.0, 128
      %770 = vxpose.xlu0.b32.cont [9/16] 0.0, 128
      %771 = vxpose.xlu0.b32.cont [10/16] 0.0, 128
      %772 = vxpose.xlu0.b32.cont [11/16] 0.0, 128
      %773 = vxpose.xlu0.b32.cont [12/16] 0.0, 128
      %774 = vxpose.xlu0.b32.cont [13/16] 0.0, 128
      %775 = vxpose.xlu0.b32.cont [14/16] 0.0, 128
      %776 = vxpose.xlu0.b32.cont [15/16] 0.0, 128
      %777 = vxpose.xlu0.b32.end [16/16] 0.0, 128
      %v778 = vpop.trf.xlu0
      %v779 = vpop.trf.xlu0
      %v780 = vpop.trf.xlu0
      %v781 = vpop.trf.xlu0
      %v782 = vpop.trf.xlu0
      %v783 = vpop.trf.xlu0
      %v784 = vpop.trf.xlu0
      %v785 = vpop.trf.xlu0
      %v786 = vpop.trf.xlu0
      %v787 = vpop.trf.xlu0
      %v788 = vpop.trf.xlu0
      %v789 = vpop.trf.xlu0
      %v790 = vpop.trf.xlu0
      %v791 = vpop.trf.xlu0
      %v792 = vpop.trf.xlu0
      %v793 = vpop.trf.xlu0
      %794 = vxpose.xlu0.b32.start [1/16] %v139, 128
      %795 = vxpose.xlu0.b32.cont [2/16] 0.0, 128
      %796 = vxpose.xlu0.b32.cont [3/16] 0.0, 128
      %797 = vxpose.xlu0.b32.cont [4/16] 0.0, 128
      %798 = vxpose.xlu0.b32.cont [5/16] 0.0, 128
      %799 = vxpose.xlu0.b32.cont [6/16] 0.0, 128
      %800 = vxpose.xlu0.b32.cont [7/16] 0.0, 128
      %801 = vxpose.xlu0.b32.cont [8/16] 0.0, 128
      %802 = vxpose.xlu0.b32.cont [9/16] 0.0, 128
      %803 = vxpose.xlu0.b32.cont [10/16] 0.0, 128
      %804 = vxpose.xlu0.b32.cont [11/16] 0.0, 128
      %805 = vxpose.xlu0.b32.cont [12/16] 0.0, 128
      %806 = vxpose.xlu0.b32.cont [13/16] 0.0, 128
      %807 = vxpose.xlu0.b32.cont [14/16] 0.0, 128
      %808 = vxpose.xlu0.b32.cont [15/16] 0.0, 128
      %809 = vxpose.xlu0.b32.end [16/16] 0.0, 128
      %v810 = vpop.trf.xlu0
      %v811 = vpop.trf.xlu0
      %v812 = vpop.trf.xlu0
      %v813 = vpop.trf.xlu0
      %v814 = vpop.trf.xlu0
      %v815 = vpop.trf.xlu0
      %v816 = vpop.trf.xlu0
      %v817 = vpop.trf.xlu0
      %v818 = vpop.trf.xlu0
      %v819 = vpop.trf.xlu0
      %v820 = vpop.trf.xlu0
      %v821 = vpop.trf.xlu0
      %v822 = vpop.trf.xlu0
      %v823 = vpop.trf.xlu0
      %v824 = vpop.trf.xlu0
      %v825 = vpop.trf.xlu0
      %826 = vxpose.xlu0.b32.start [1/16] %v140, 128
      %827 = vxpose.xlu0.b32.cont [2/16] 0.0, 128
      %828 = vxpose.xlu0.b32.cont [3/16] 0.0, 128
      %829 = vxpose.xlu0.b32.cont [4/16] 0.0, 128
      %830 = vxpose.xlu0.b32.cont [5/16] 0.0, 128
      %831 = vxpose.xlu0.b32.cont [6/16] 0.0, 128
      %832 = vxpose.xlu0.b32.cont [7/16] 0.0, 128
      %833 = vxpose.xlu0.b32.cont [8/16] 0.0, 128
      %834 = vxpose.xlu0.b32.cont [9/16] 0.0, 128
      %835 = vxpose.xlu0.b32.cont [10/16] 0.0, 128
      %836 = vxpose.xlu0.b32.cont [11/16] 0.0, 128
      %837 = vxpose.xlu0.b32.cont [12/16] 0.0, 128
      %838 = vxpose.xlu0.b32.cont [13/16] 0.0, 128
      %839 = vxpose.xlu0.b32.cont [14/16] 0.0, 128
      %840 = vxpose.xlu0.b32.cont [15/16] 0.0, 128
      %841 = vxpose.xlu0.b32.end [16/16] 0.0, 128
      %v842 = vpop.trf.xlu0
      %v843 = vpop.trf.xlu0
      %v844 = vpop.trf.xlu0
      %v845 = vpop.trf.xlu0
      %v846 = vpop.trf.xlu0
      %v847 = vpop.trf.xlu0
      %v848 = vpop.trf.xlu0
      %v849 = vpop.trf.xlu0
      %v850 = vpop.trf.xlu0
      %v851 = vpop.trf.xlu0
      %v852 = vpop.trf.xlu0
      %v853 = vpop.trf.xlu0
      %v854 = vpop.trf.xlu0
      %v855 = vpop.trf.xlu0
      %v856 = vpop.trf.xlu0
      %v857 = vpop.trf.xlu0
      %858 = vxpose.xlu0.b32.start [1/16] %v141, 128
      %859 = vxpose.xlu0.b32.cont [2/16] 0.0, 128
      %860 = vxpose.xlu0.b32.cont [3/16] 0.0, 128
      %861 = vxpose.xlu0.b32.cont [4/16] 0.0, 128
      %862 = vxpose.xlu0.b32.cont [5/16] 0.0, 128
      %863 = vxpose.xlu0.b32.cont [6/16] 0.0, 128
      %864 = vxpose.xlu0.b32.cont [7/16] 0.0, 128
      %865 = vxpose.xlu0.b32.cont [8/16] 0.0, 128
      %866 = vxpose.xlu0.b32.cont [9/16] 0.0, 128
      %867 = vxpose.xlu0.b32.cont [10/16] 0.0, 128
      %868 = vxpose.xlu0.b32.cont [11/16] 0.0, 128
      %869 = vxpose.xlu0.b32.cont [12/16] 0.0, 128
      %870 = vxpose.xlu0.b32.cont [13/16] 0.0, 128
      %871 = vxpose.xlu0.b32.cont [14/16] 0.0, 128
      %872 = vxpose.xlu0.b32.cont [15/16] 0.0, 128
      %873 = vxpose.xlu0.b32.end [16/16] 0.0, 128
      %v874 = vpop.trf.xlu0
      %v875 = vpop.trf.xlu0
      %v876 = vpop.trf.xlu0
      %v877 = vpop.trf.xlu0
      %v878 = vpop.trf.xlu0
      %v879 = vpop.trf.xlu0
      %v880 = vpop.trf.xlu0
      %v881 = vpop.trf.xlu0
      %v882 = vpop.trf.xlu0
      %v883 = vpop.trf.xlu0
      %v884 = vpop.trf.xlu0
      %v885 = vpop.trf.xlu0
      %v886 = vpop.trf.xlu0
      %v887 = vpop.trf.xlu0
      %v888 = vpop.trf.xlu0
      %v889 = vpop.trf.xlu0
      %890 = vxpose.xlu0.b32.start [1/16] %v142, 128
      %891 = vxpose.xlu0.b32.cont [2/16] 0.0, 128
      %892 = vxpose.xlu0.b32.cont [3/16] 0.0, 128
      %893 = vxpose.xlu0.b32.cont [4/16] 0.0, 128
      %894 = vxpose.xlu0.b32.cont [5/16] 0.0, 128
      %895 = vxpose.xlu0.b32.cont [6/16] 0.0, 128
      %896 = vxpose.xlu0.b32.cont [7/16] 0.0, 128
      %897 = vxpose.xlu0.b32.cont [8/16] 0.0, 128
      %898 = vxpose.xlu0.b32.cont [9/16] 0.0, 128
      %899 = vxpose.xlu0.b32.cont [10/16] 0.0, 128
      %900 = vxpose.xlu0.b32.cont [11/16] 0.0, 128
      %901 = vxpose.xlu0.b32.cont [12/16] 0.0, 128
      %902 = vxpose.xlu0.b32.cont [13/16] 0.0, 128
      %903 = vxpose.xlu0.b32.cont [14/16] 0.0, 128
      %904 = vxpose.xlu0.b32.cont [15/16] 0.0, 128
      %905 = vxpose.xlu0.b32.end [16/16] 0.0, 128
      %v906 = vpop.trf.xlu0
      %v907 = vpop.trf.xlu0
      %v908 = vpop.trf.xlu0
      %v909 = vpop.trf.xlu0
      %v910 = vpop.trf.xlu0
      %v911 = vpop.trf.xlu0
      %v912 = vpop.trf.xlu0
      %v913 = vpop.trf.xlu0
      %v914 = vpop.trf.xlu0
      %v915 = vpop.trf.xlu0
      %v916 = vpop.trf.xlu0
      %v917 = vpop.trf.xlu0
      %v918 = vpop.trf.xlu0
      %v919 = vpop.trf.xlu0
      %v920 = vpop.trf.xlu0
      %v921 = vpop.trf.xlu0
      %922 = vxpose.xlu0.b32.start [1/16] %v143, 128
      %923 = vxpose.xlu0.b32.cont [2/16] 0.0, 128
      %924 = vxpose.xlu0.b32.cont [3/16] 0.0, 128
      %925 = vxpose.xlu0.b32.cont [4/16] 0.0, 128
      %926 = vxpose.xlu0.b32.cont [5/16] 0.0, 128
      %927 = vxpose.xlu0.b32.cont [6/16] 0.0, 128
      %928 = vxpose.xlu0.b32.cont [7/16] 0.0, 128
      %929 = vxpose.xlu0.b32.cont [8/16] 0.0, 128
      %930 = vxpose.xlu0.b32.cont [9/16] 0.0, 128
      %931 = vxpose.xlu0.b32.cont [10/16] 0.0, 128
      %932 = vxpose.xlu0.b32.cont [11/16] 0.0, 128
      %933 = vxpose.xlu0.b32.cont [12/16] 0.0, 128
      %934 = vxpose.xlu0.b32.cont [13/16] 0.0, 128
      %935 = vxpose.xlu0.b32.cont [14/16] 0.0, 128
      %936 = vxpose.xlu0.b32.cont [15/16] 0.0, 128
      %937 = vxpose.xlu0.b32.end [16/16] 0.0, 128
      %v938 = vpop.trf.xlu0
      %v939 = vpop.trf.xlu0
      %v940 = vpop.trf.xlu0
      %v941 = vpop.trf.xlu0
      %v942 = vpop.trf.xlu0
      %v943 = vpop.trf.xlu0
      %v944 = vpop.trf.xlu0
      %v945 = vpop.trf.xlu0
      %v946 = vpop.trf.xlu0
      %v947 = vpop.trf.xlu0
      %v948 = vpop.trf.xlu0
      %v949 = vpop.trf.xlu0
      %v950 = vpop.trf.xlu0
      %v951 = vpop.trf.xlu0
      %v952 = vpop.trf.xlu0
      %v953 = vpop.trf.xlu0
      %954 = vxpose.xlu0.b32.start [1/16] %v144, 128
      %955 = vxpose.xlu0.b32.cont [2/16] 0.0, 128
      %956 = vxpose.xlu0.b32.cont [3/16] 0.0, 128
      %957 = vxpose.xlu0.b32.cont [4/16] 0.0, 128
      %958 = vxpose.xlu0.b32.cont [5/16] 0.0, 128
      %959 = vxpose.xlu0.b32.cont [6/16] 0.0, 128
      %960 = vxpose.xlu0.b32.cont [7/16] 0.0, 128
      %961 = vxpose.xlu0.b32.cont [8/16] 0.0, 128
      %962 = vxpose.xlu0.b32.cont [9/16] 0.0, 128
      %963 = vxpose.xlu0.b32.cont [10/16] 0.0, 128
      %964 = vxpose.xlu0.b32.cont [11/16] 0.0, 128
      %965 = vxpose.xlu0.b32.cont [12/16] 0.0, 128
      %966 = vxpose.xlu0.b32.cont [13/16] 0.0, 128
      %967 = vxpose.xlu0.b32.cont [14/16] 0.0, 128
      %968 = vxpose.xlu0.b32.cont [15/16] 0.0, 128
      %969 = vxpose.xlu0.b32.end [16/16] 0.0, 128
      %v970 = vpop.trf.xlu0
      %v971 = vpop.trf.xlu0
      %v972 = vpop.trf.xlu0
      %v973 = vpop.trf.xlu0
      %v974 = vpop.trf.xlu0
      %v975 = vpop.trf.xlu0
      %v976 = vpop.trf.xlu0
      %v977 = vpop.trf.xlu0
      %v978 = vpop.trf.xlu0
      %v979 = vpop.trf.xlu0
      %v980 = vpop.trf.xlu0
      %v981 = vpop.trf.xlu0
      %v982 = vpop.trf.xlu0
      %v983 = vpop.trf.xlu0
      %v984 = vpop.trf.xlu0
      %v985 = vpop.trf.xlu0
      %986 = vxpose.xlu0.b32.start [1/16] %v145, 128
      %987 = vxpose.xlu0.b32.cont [2/16] 0.0, 128
      %988 = vxpose.xlu0.b32.cont [3/16] 0.0, 128
      %989 = vxpose.xlu0.b32.cont [4/16] 0.0, 128
      %990 = vxpose.xlu0.b32.cont [5/16] 0.0, 128
      %991 = vxpose.xlu0.b32.cont [6/16] 0.0, 128
      %992 = vxpose.xlu0.b32.cont [7/16] 0.0, 128
      %993 = vxpose.xlu0.b32.cont [8/16] 0.0, 128
      %994 = vxpose.xlu0.b32.cont [9/16] 0.0, 128
      %995 = vxpose.xlu0.b32.cont [10/16] 0.0, 128
      %996 = vxpose.xlu0.b32.cont [11/16] 0.0, 128
      %997 = vxpose.xlu0.b32.cont [12/16] 0.0, 128
      %998 = vxpose.xlu0.b32.cont [13/16] 0.0, 128
      %999 = vxpose.xlu0.b32.cont [14/16] 0.0, 128
      %1000 = vxpose.xlu0.b32.cont [15/16] 0.0, 128
      %1001 = vxpose.xlu0.b32.end [16/16] 0.0, 128
      %v1002 = vpop.trf.xlu0
      %v1003 = vpop.trf.xlu0
      %v1004 = vpop.trf.xlu0
      %v1005 = vpop.trf.xlu0
      %v1006 = vpop.trf.xlu0
      %v1007 = vpop.trf.xlu0
      %v1008 = vpop.trf.xlu0
      %v1009 = vpop.trf.xlu0
      %v1010 = vpop.trf.xlu0
      %v1011 = vpop.trf.xlu0
      %v1012 = vpop.trf.xlu0
      %v1013 = vpop.trf.xlu0
      %v1014 = vpop.trf.xlu0
      %v1015 = vpop.trf.xlu0
      %v1016 = vpop.trf.xlu0
      %v1017 = vpop.trf.xlu0
      %1018 = vxpose.xlu0.b32.start [1/16] %v146, 128
      %1019 = vxpose.xlu0.b32.cont [2/16] 0.0, 128
      %1020 = vxpose.xlu0.b32.cont [3/16] 0.0, 128
      %1021 = vxpose.xlu0.b32.cont [4/16] 0.0, 128
      %1022 = vxpose.xlu0.b32.cont [5/16] 0.0, 128
      %1023 = vxpose.xlu0.b32.cont [6/16] 0.0, 128
      %1024 = vxpose.xlu0.b32.cont [7/16] 0.0, 128
      %1025 = vxpose.xlu0.b32.cont [8/16] 0.0, 128
      %1026 = vxpose.xlu0.b32.cont [9/16] 0.0, 128
      %1027 = vxpose.xlu0.b32.cont [10/16] 0.0, 128
      %1028 = vxpose.xlu0.b32.cont [11/16] 0.0, 128
      %1029 = vxpose.xlu0.b32.cont [12/16] 0.0, 128
      %1030 = vxpose.xlu0.b32.cont [13/16] 0.0, 128
      %1031 = vxpose.xlu0.b32.cont [14/16] 0.0, 128
      %1032 = vxpose.xlu0.b32.cont [15/16] 0.0, 128
      %1033 = vxpose.xlu0.b32.end [16/16] 0.0, 128
      %v1034 = vpop.trf.xlu0
      %v1035 = vpop.trf.xlu0
      %v1036 = vpop.trf.xlu0
      %v1037 = vpop.trf.xlu0
      %v1038 = vpop.trf.xlu0
      %v1039 = vpop.trf.xlu0
      %v1040 = vpop.trf.xlu0
      %v1041 = vpop.trf.xlu0
      %v1042 = vpop.trf.xlu0
      %v1043 = vpop.trf.xlu0
      %v1044 = vpop.trf.xlu0
      %v1045 = vpop.trf.xlu0
      %v1046 = vpop.trf.xlu0
      %v1047 = vpop.trf.xlu0
      %v1048 = vpop.trf.xlu0
      %v1049 = vpop.trf.xlu0
      %1050 = vxpose.xlu0.b32.start [1/16] %v147, 128
      %1051 = vxpose.xlu0.b32.cont [2/16] 0.0, 128
      %1052 = vxpose.xlu0.b32.cont [3/16] 0.0, 128
      %1053 = vxpose.xlu0.b32.cont [4/16] 0.0, 128
      %1054 = vxpose.xlu0.b32.cont [5/16] 0.0, 128
      %1055 = vxpose.xlu0.b32.cont [6/16] 0.0, 128
      %1056 = vxpose.xlu0.b32.cont [7/16] 0.0, 128
      %1057 = vxpose.xlu0.b32.cont [8/16] 0.0, 128
      %1058 = vxpose.xlu0.b32.cont [9/16] 0.0, 128
      %1059 = vxpose.xlu0.b32.cont [10/16] 0.0, 128
      %1060 = vxpose.xlu0.b32.cont [11/16] 0.0, 128
      %1061 = vxpose.xlu0.b32.cont [12/16] 0.0, 128
      %1062 = vxpose.xlu0.b32.cont [13/16] 0.0, 128
      %1063 = vxpose.xlu0.b32.cont [14/16] 0.0, 128
      %1064 = vxpose.xlu0.b32.cont [15/16] 0.0, 128
      %1065 = vxpose.xlu0.b32.end [16/16] 0.0, 128
      %v1066 = vpop.trf.xlu0
      %v1067 = vpop.trf.xlu0
      %v1068 = vpop.trf.xlu0
      %v1069 = vpop.trf.xlu0
      %v1070 = vpop.trf.xlu0
      %v1071 = vpop.trf.xlu0
      %v1072 = vpop.trf.xlu0
      %v1073 = vpop.trf.xlu0
      %v1074 = vpop.trf.xlu0
      %v1075 = vpop.trf.xlu0
      %v1076 = vpop.trf.xlu0
      %v1077 = vpop.trf.xlu0
      %v1078 = vpop.trf.xlu0
      %v1079 = vpop.trf.xlu0
      %v1080 = vpop.trf.xlu0
      %v1081 = vpop.trf.xlu0
      %1082 = vxpose.xlu0.b32.start [1/16] %v148, 128
      %1083 = vxpose.xlu0.b32.cont [2/16] 0.0, 128
      %1084 = vxpose.xlu0.b32.cont [3/16] 0.0, 128
      %1085 = vxpose.xlu0.b32.cont [4/16] 0.0, 128
      %1086 = vxpose.xlu0.b32.cont [5/16] 0.0, 128
      %1087 = vxpose.xlu0.b32.cont [6/16] 0.0, 128
      %1088 = vxpose.xlu0.b32.cont [7/16] 0.0, 128
      %1089 = vxpose.xlu0.b32.cont [8/16] 0.0, 128
      %1090 = vxpose.xlu0.b32.cont [9/16] 0.0, 128
      %1091 = vxpose.xlu0.b32.cont [10/16] 0.0, 128
      %1092 = vxpose.xlu0.b32.cont [11/16] 0.0, 128
      %1093 = vxpose.xlu0.b32.cont [12/16] 0.0, 128
      %1094 = vxpose.xlu0.b32.cont [13/16] 0.0, 128
      %1095 = vxpose.xlu0.b32.cont [14/16] 0.0, 128
      %1096 = vxpose.xlu0.b32.cont [15/16] 0.0, 128
      %1097 = vxpose.xlu0.b32.end [16/16] 0.0, 128
      %v1098 = vpop.trf.xlu0
      %v1099 = vpop.trf.xlu0
      %v1100 = vpop.trf.xlu0
      %v1101 = vpop.trf.xlu0
      %v1102 = vpop.trf.xlu0
      %v1103 = vpop.trf.xlu0
      %v1104 = vpop.trf.xlu0
      %v1105 = vpop.trf.xlu0
      %v1106 = vpop.trf.xlu0
      %v1107 = vpop.trf.xlu0
      %v1108 = vpop.trf.xlu0
      %v1109 = vpop.trf.xlu0
      %v1110 = vpop.trf.xlu0
      %v1111 = vpop.trf.xlu0
      %v1112 = vpop.trf.xlu0
      %v1113 = vpop.trf.xlu0
      %1114 = vxpose.xlu0.b32.start [1/16] %v149, 128
      %1115 = vxpose.xlu0.b32.cont [2/16] 0.0, 128
      %1116 = vxpose.xlu0.b32.cont [3/16] 0.0, 128
      %1117 = vxpose.xlu0.b32.cont [4/16] 0.0, 128
      %1118 = vxpose.xlu0.b32.cont [5/16] 0.0, 128
      %1119 = vxpose.xlu0.b32.cont [6/16] 0.0, 128
      %1120 = vxpose.xlu0.b32.cont [7/16] 0.0, 128
      %1121 = vxpose.xlu0.b32.cont [8/16] 0.0, 128
      %1122 = vxpose.xlu0.b32.cont [9/16] 0.0, 128
      %1123 = vxpose.xlu0.b32.cont [10/16] 0.0, 128
      %1124 = vxpose.xlu0.b32.cont [11/16] 0.0, 128
      %1125 = vxpose.xlu0.b32.cont [12/16] 0.0, 128
      %1126 = vxpose.xlu0.b32.cont [13/16] 0.0, 128
      %1127 = vxpose.xlu0.b32.cont [14/16] 0.0, 128
      %1128 = vxpose.xlu0.b32.cont [15/16] 0.0, 128
      %1129 = vxpose.xlu0.b32.end [16/16] 0.0, 128
      %v1130 = vpop.trf.xlu0
      %v1131 = vpop.trf.xlu0
      %v1132 = vpop.trf.xlu0
      %v1133 = vpop.trf.xlu0
      %v1134 = vpop.trf.xlu0
      %v1135 = vpop.trf.xlu0
      %v1136 = vpop.trf.xlu0
      %v1137 = vpop.trf.xlu0
      %v1138 = vpop.trf.xlu0
      %v1139 = vpop.trf.xlu0
      %v1140 = vpop.trf.xlu0
      %v1141 = vpop.trf.xlu0
      %v1142 = vpop.trf.xlu0
      %v1143 = vpop.trf.xlu0
      %v1144 = vpop.trf.xlu0
      %v1145 = vpop.trf.xlu0
      %1146 = vxpose.xlu0.b32.start [1/16] %v150, 128
      %1147 = vxpose.xlu0.b32.cont [2/16] 0.0, 128
      %1148 = vxpose.xlu0.b32.cont [3/16] 0.0, 128
      %1149 = vxpose.xlu0.b32.cont [4/16] 0.0, 128
      %1150 = vxpose.xlu0.b32.cont [5/16] 0.0, 128
      %1151 = vxpose.xlu0.b32.cont [6/16] 0.0, 128
      %1152 = vxpose.xlu0.b32.cont [7/16] 0.0, 128
      %1153 = vxpose.xlu0.b32.cont [8/16] 0.0, 128
      %1154 = vxpose.xlu0.b32.cont [9/16] 0.0, 128
      %1155 = vxpose.xlu0.b32.cont [10/16] 0.0, 128
      %1156 = vxpose.xlu0.b32.cont [11/16] 0.0, 128
      %1157 = vxpose.xlu0.b32.cont [12/16] 0.0, 128
      %1158 = vxpose.xlu0.b32.cont [13/16] 0.0, 128
      %1159 = vxpose.xlu0.b32.cont [14/16] 0.0, 128
      %1160 = vxpose.xlu0.b32.cont [15/16] 0.0, 128
      %1161 = vxpose.xlu0.b32.end [16/16] 0.0, 128
      %v1162 = vpop.trf.xlu0
      %v1163 = vpop.trf.xlu0
      %v1164 = vpop.trf.xlu0
      %v1165 = vpop.trf.xlu0
      %v1166 = vpop.trf.xlu0
      %v1167 = vpop.trf.xlu0
      %v1168 = vpop.trf.xlu0
      %v1169 = vpop.trf.xlu0
      %v1170 = vpop.trf.xlu0
      %v1171 = vpop.trf.xlu0
      %v1172 = vpop.trf.xlu0
      %v1173 = vpop.trf.xlu0
      %v1174 = vpop.trf.xlu0
      %v1175 = vpop.trf.xlu0
      %v1176 = vpop.trf.xlu0
      %v1177 = vpop.trf.xlu0
      %1178 = vxpose.xlu0.b32.start [1/16] %v151, 128
      %1179 = vxpose.xlu0.b32.cont [2/16] 0.0, 128
      %1180 = vxpose.xlu0.b32.cont [3/16] 0.0, 128
      %1181 = vxpose.xlu0.b32.cont [4/16] 0.0, 128
      %1182 = vxpose.xlu0.b32.cont [5/16] 0.0, 128
      %1183 = vxpose.xlu0.b32.cont [6/16] 0.0, 128
      %1184 = vxpose.xlu0.b32.cont [7/16] 0.0, 128
      %1185 = vxpose.xlu0.b32.cont [8/16] 0.0, 128
      %1186 = vxpose.xlu0.b32.cont [9/16] 0.0, 128
      %1187 = vxpose.xlu0.b32.cont [10/16] 0.0, 128
      %1188 = vxpose.xlu0.b32.cont [11/16] 0.0, 128
      %1189 = vxpose.xlu0.b32.cont [12/16] 0.0, 128
      %1190 = vxpose.xlu0.b32.cont [13/16] 0.0, 128
      %1191 = vxpose.xlu0.b32.cont [14/16] 0.0, 128
      %1192 = vxpose.xlu0.b32.cont [15/16] 0.0, 128
      %1193 = vxpose.xlu0.b32.end [16/16] 0.0, 128
      %v1194 = vpop.trf.xlu0
      %v1195 = vpop.trf.xlu0
      %v1196 = vpop.trf.xlu0
      %v1197 = vpop.trf.xlu0
      %v1198 = vpop.trf.xlu0
      %v1199 = vpop.trf.xlu0
      %v1200 = vpop.trf.xlu0
      %v1201 = vpop.trf.xlu0
      %v1202 = vpop.trf.xlu0
      %v1203 = vpop.trf.xlu0
      %v1204 = vpop.trf.xlu0
      %v1205 = vpop.trf.xlu0
      %v1206 = vpop.trf.xlu0
      %v1207 = vpop.trf.xlu0
      %v1208 = vpop.trf.xlu0
      %v1209 = vpop.trf.xlu0
      %1210 = vxpose.xlu0.b32.start [1/16] %v152, 128
      %1211 = vxpose.xlu0.b32.cont [2/16] 0.0, 128
      %1212 = vxpose.xlu0.b32.cont [3/16] 0.0, 128
      %1213 = vxpose.xlu0.b32.cont [4/16] 0.0, 128
      %1214 = vxpose.xlu0.b32.cont [5/16] 0.0, 128
      %1215 = vxpose.xlu0.b32.cont [6/16] 0.0, 128
      %1216 = vxpose.xlu0.b32.cont [7/16] 0.0, 128
      %1217 = vxpose.xlu0.b32.cont [8/16] 0.0, 128
      %1218 = vxpose.xlu0.b32.cont [9/16] 0.0, 128
      %1219 = vxpose.xlu0.b32.cont [10/16] 0.0, 128
      %1220 = vxpose.xlu0.b32.cont [11/16] 0.0, 128
      %1221 = vxpose.xlu0.b32.cont [12/16] 0.0, 128
      %1222 = vxpose.xlu0.b32.cont [13/16] 0.0, 128
      %1223 = vxpose.xlu0.b32.cont [14/16] 0.0, 128
      %1224 = vxpose.xlu0.b32.cont [15/16] 0.0, 128
      %1225 = vxpose.xlu0.b32.end [16/16] 0.0, 128
      %v1226 = vpop.trf.xlu0
      %v1227 = vpop.trf.xlu0
      %v1228 = vpop.trf.xlu0
      %v1229 = vpop.trf.xlu0
      %v1230 = vpop.trf.xlu0
      %v1231 = vpop.trf.xlu0
      %v1232 = vpop.trf.xlu0
      %v1233 = vpop.trf.xlu0
      %v1234 = vpop.trf.xlu0
      %v1235 = vpop.trf.xlu0
      %v1236 = vpop.trf.xlu0
      %v1237 = vpop.trf.xlu0
      %v1238 = vpop.trf.xlu0
      %v1239 = vpop.trf.xlu0
      %v1240 = vpop.trf.xlu0
      %v1241 = vpop.trf.xlu0
      %1242 = vxpose.xlu0.b32.start [1/16] %v153, 128
      %1243 = vxpose.xlu0.b32.cont [2/16] 0.0, 128
      %1244 = vxpose.xlu0.b32.cont [3/16] 0.0, 128
      %1245 = vxpose.xlu0.b32.cont [4/16] 0.0, 128
      %1246 = vxpose.xlu0.b32.cont [5/16] 0.0, 128
      %1247 = vxpose.xlu0.b32.cont [6/16] 0.0, 128
      %1248 = vxpose.xlu0.b32.cont [7/16] 0.0, 128
      %1249 = vxpose.xlu0.b32.cont [8/16] 0.0, 128
      %1250 = vxpose.xlu0.b32.cont [9/16] 0.0, 128
      %1251 = vxpose.xlu0.b32.cont [10/16] 0.0, 128
      %1252 = vxpose.xlu0.b32.cont [11/16] 0.0, 128
      %1253 = vxpose.xlu0.b32.cont [12/16] 0.0, 128
      %1254 = vxpose.xlu0.b32.cont [13/16] 0.0, 128
      %1255 = vxpose.xlu0.b32.cont [14/16] 0.0, 128
      %1256 = vxpose.xlu0.b32.cont [15/16] 0.0, 128
      %1257 = vxpose.xlu0.b32.end [16/16] 0.0, 128
      %v1258 = vpop.trf.xlu0
      %v1259 = vpop.trf.xlu0
      %v1260 = vpop.trf.xlu0
      %v1261 = vpop.trf.xlu0
      %v1262 = vpop.trf.xlu0
      %v1263 = vpop.trf.xlu0
      %v1264 = vpop.trf.xlu0
      %v1265 = vpop.trf.xlu0
      %v1266 = vpop.trf.xlu0
      %v1267 = vpop.trf.xlu0
      %v1268 = vpop.trf.xlu0
      %v1269 = vpop.trf.xlu0
      %v1270 = vpop.trf.xlu0
      %v1271 = vpop.trf.xlu0
      %v1272 = vpop.trf.xlu0
      %v1273 = vpop.trf.xlu0
      %1274 = vxpose.xlu0.b32.start [1/16] %v154, 128
      %1275 = vxpose.xlu0.b32.cont [2/16] 0.0, 128
      %1276 = vxpose.xlu0.b32.cont [3/16] 0.0, 128
      %1277 = vxpose.xlu0.b32.cont [4/16] 0.0, 128
      %1278 = vxpose.xlu0.b32.cont [5/16] 0.0, 128
      %1279 = vxpose.xlu0.b32.cont [6/16] 0.0, 128
      %1280 = vxpose.xlu0.b32.cont [7/16] 0.0, 128
      %1281 = vxpose.xlu0.b32.cont [8/16] 0.0, 128
      %1282 = vxpose.xlu0.b32.cont [9/16] 0.0, 128
      %1283 = vxpose.xlu0.b32.cont [10/16] 0.0, 128
      %1284 = vxpose.xlu0.b32.cont [11/16] 0.0, 128
      %1285 = vxpose.xlu0.b32.cont [12/16] 0.0, 128
      %1286 = vxpose.xlu0.b32.cont [13/16] 0.0, 128
      %1287 = vxpose.xlu0.b32.cont [14/16] 0.0, 128
      %1288 = vxpose.xlu0.b32.cont [15/16] 0.0, 128
      %1289 = vxpose.xlu0.b32.end [16/16] 0.0, 128
      %v1290 = vpop.trf.xlu0
      %v1291 = vpop.trf.xlu0
      %v1292 = vpop.trf.xlu0
      %v1293 = vpop.trf.xlu0
      %v1294 = vpop.trf.xlu0
      %v1295 = vpop.trf.xlu0
      %v1296 = vpop.trf.xlu0
      %v1297 = vpop.trf.xlu0
      %v1298 = vpop.trf.xlu0
      %v1299 = vpop.trf.xlu0
      %v1300 = vpop.trf.xlu0
      %v1301 = vpop.trf.xlu0
      %v1302 = vpop.trf.xlu0
      %v1303 = vpop.trf.xlu0
      %v1304 = vpop.trf.xlu0
      %v1305 = vpop.trf.xlu0
      %1306 = vxpose.xlu0.b32.start [1/16] %v155, 128
      %1307 = vxpose.xlu0.b32.cont [2/16] 0.0, 128
      %1308 = vxpose.xlu0.b32.cont [3/16] 0.0, 128
      %1309 = vxpose.xlu0.b32.cont [4/16] 0.0, 128
      %1310 = vxpose.xlu0.b32.cont [5/16] 0.0, 128
      %1311 = vxpose.xlu0.b32.cont [6/16] 0.0, 128
      %1312 = vxpose.xlu0.b32.cont [7/16] 0.0, 128
      %1313 = vxpose.xlu0.b32.cont [8/16] 0.0, 128
      %1314 = vxpose.xlu0.b32.cont [9/16] 0.0, 128
      %1315 = vxpose.xlu0.b32.cont [10/16] 0.0, 128
      %1316 = vxpose.xlu0.b32.cont [11/16] 0.0, 128
      %1317 = vxpose.xlu0.b32.cont [12/16] 0.0, 128
      %1318 = vxpose.xlu0.b32.cont [13/16] 0.0, 128
      %1319 = vxpose.xlu0.b32.cont [14/16] 0.0, 128
      %1320 = vxpose.xlu0.b32.cont [15/16] 0.0, 128
      %1321 = vxpose.xlu0.b32.end [16/16] 0.0, 128
      %v1322 = vpop.trf.xlu0
      %v1323 = vpop.trf.xlu0
      %v1324 = vpop.trf.xlu0
      %v1325 = vpop.trf.xlu0
      %v1326 = vpop.trf.xlu0
      %v1327 = vpop.trf.xlu0
      %v1328 = vpop.trf.xlu0
      %v1329 = vpop.trf.xlu0
      %v1330 = vpop.trf.xlu0
      %v1331 = vpop.trf.xlu0
      %v1332 = vpop.trf.xlu0
      %v1333 = vpop.trf.xlu0
      %v1334 = vpop.trf.xlu0
      %v1335 = vpop.trf.xlu0
      %v1336 = vpop.trf.xlu0
      %v1337 = vpop.trf.xlu0
      %1338 = vxpose.xlu0.b32.start [1/16] %v156, 128
      %1339 = vxpose.xlu0.b32.cont [2/16] 0.0, 128
      %1340 = vxpose.xlu0.b32.cont [3/16] 0.0, 128
      %1341 = vxpose.xlu0.b32.cont [4/16] 0.0, 128
      %1342 = vxpose.xlu0.b32.cont [5/16] 0.0, 128
      %1343 = vxpose.xlu0.b32.cont [6/16] 0.0, 128
      %1344 = vxpose.xlu0.b32.cont [7/16] 0.0, 128
      %1345 = vxpose.xlu0.b32.cont [8/16] 0.0, 128
      %1346 = vxpose.xlu0.b32.cont [9/16] 0.0, 128
      %1347 = vxpose.xlu0.b32.cont [10/16] 0.0, 128
      %1348 = vxpose.xlu0.b32.cont [11/16] 0.0, 128
      %1349 = vxpose.xlu0.b32.cont [12/16] 0.0, 128
      %1350 = vxpose.xlu0.b32.cont [13/16] 0.0, 128
      %1351 = vxpose.xlu0.b32.cont [14/16] 0.0, 128
      %1352 = vxpose.xlu0.b32.cont [15/16] 0.0, 128
      %1353 = vxpose.xlu0.b32.end [16/16] 0.0, 128
      %v1354 = vpop.trf.xlu0
      %v1355 = vpop.trf.xlu0
      %v1356 = vpop.trf.xlu0
      %v1357 = vpop.trf.xlu0
      %v1358 = vpop.trf.xlu0
      %v1359 = vpop.trf.xlu0
      %v1360 = vpop.trf.xlu0
      %v1361 = vpop.trf.xlu0
      %v1362 = vpop.trf.xlu0
      %v1363 = vpop.trf.xlu0
      %v1364 = vpop.trf.xlu0
      %v1365 = vpop.trf.xlu0
      %v1366 = vpop.trf.xlu0
      %v1367 = vpop.trf.xlu0
      %v1368 = vpop.trf.xlu0
      %v1369 = vpop.trf.xlu0
      %1370 = vxpose.xlu0.b32.start [1/16] %v157, 128
      %1371 = vxpose.xlu0.b32.cont [2/16] 0.0, 128
      %1372 = vxpose.xlu0.b32.cont [3/16] 0.0, 128
      %1373 = vxpose.xlu0.b32.cont [4/16] 0.0, 128
      %1374 = vxpose.xlu0.b32.cont [5/16] 0.0, 128
      %1375 = vxpose.xlu0.b32.cont [6/16] 0.0, 128
      %1376 = vxpose.xlu0.b32.cont [7/16] 0.0, 128
      %1377 = vxpose.xlu0.b32.cont [8/16] 0.0, 128
      %1378 = vxpose.xlu0.b32.cont [9/16] 0.0, 128
      %1379 = vxpose.xlu0.b32.cont [10/16] 0.0, 128
      %1380 = vxpose.xlu0.b32.cont [11/16] 0.0, 128
      %1381 = vxpose.xlu0.b32.cont [12/16] 0.0, 128
      %1382 = vxpose.xlu0.b32.cont [13/16] 0.0, 128
      %1383 = vxpose.xlu0.b32.cont [14/16] 0.0, 128
      %1384 = vxpose.xlu0.b32.cont [15/16] 0.0, 128
      %1385 = vxpose.xlu0.b32.end [16/16] 0.0, 128
      %v1386 = vpop.trf.xlu0
      %v1387 = vpop.trf.xlu0
      %v1388 = vpop.trf.xlu0
      %v1389 = vpop.trf.xlu0
      %v1390 = vpop.trf.xlu0
      %v1391 = vpop.trf.xlu0
      %v1392 = vpop.trf.xlu0
      %v1393 = vpop.trf.xlu0
      %v1394 = vpop.trf.xlu0
      %v1395 = vpop.trf.xlu0
      %v1396 = vpop.trf.xlu0
      %v1397 = vpop.trf.xlu0
      %v1398 = vpop.trf.xlu0
      %v1399 = vpop.trf.xlu0
      %v1400 = vpop.trf.xlu0
      %v1401 = vpop.trf.xlu0
      %1402 = vxpose.xlu0.b32.start [1/16] %v158, 128
      %1403 = vxpose.xlu0.b32.cont [2/16] 0.0, 128
      %1404 = vxpose.xlu0.b32.cont [3/16] 0.0, 128
      %1405 = vxpose.xlu0.b32.cont [4/16] 0.0, 128
      %1406 = vxpose.xlu0.b32.cont [5/16] 0.0, 128
      %1407 = vxpose.xlu0.b32.cont [6/16] 0.0, 128
      %1408 = vxpose.xlu0.b32.cont [7/16] 0.0, 128
      %1409 = vxpose.xlu0.b32.cont [8/16] 0.0, 128
      %1410 = vxpose.xlu0.b32.cont [9/16] 0.0, 128
      %1411 = vxpose.xlu0.b32.cont [10/16] 0.0, 128
      %1412 = vxpose.xlu0.b32.cont [11/16] 0.0, 128
      %1413 = vxpose.xlu0.b32.cont [12/16] 0.0, 128
      %1414 = vxpose.xlu0.b32.cont [13/16] 0.0, 128
      %1415 = vxpose.xlu0.b32.cont [14/16] 0.0, 128
      %1416 = vxpose.xlu0.b32.cont [15/16] 0.0, 128
      %1417 = vxpose.xlu0.b32.end [16/16] 0.0, 128
      %v1418 = vpop.trf.xlu0
      %v1419 = vpop.trf.xlu0
      %v1420 = vpop.trf.xlu0
      %v1421 = vpop.trf.xlu0
      %v1422 = vpop.trf.xlu0
      %v1423 = vpop.trf.xlu0
      %v1424 = vpop.trf.xlu0
      %v1425 = vpop.trf.xlu0
      %v1426 = vpop.trf.xlu0
      %v1427 = vpop.trf.xlu0
      %v1428 = vpop.trf.xlu0
      %v1429 = vpop.trf.xlu0
      %v1430 = vpop.trf.xlu0
      %v1431 = vpop.trf.xlu0
      %v1432 = vpop.trf.xlu0
      %v1433 = vpop.trf.xlu0
      %1434 = vxpose.xlu0.b32.start [1/16] %v159, 128
      %1435 = vxpose.xlu0.b32.cont [2/16] 0.0, 128
      %1436 = vxpose.xlu0.b32.cont [3/16] 0.0, 128
      %1437 = vxpose.xlu0.b32.cont [4/16] 0.0, 128
      %1438 = vxpose.xlu0.b32.cont [5/16] 0.0, 128
      %1439 = vxpose.xlu0.b32.cont [6/16] 0.0, 128
      %1440 = vxpose.xlu0.b32.cont [7/16] 0.0, 128
      %1441 = vxpose.xlu0.b32.cont [8/16] 0.0, 128
      %1442 = vxpose.xlu0.b32.cont [9/16] 0.0, 128
      %1443 = vxpose.xlu0.b32.cont [10/16] 0.0, 128
      %1444 = vxpose.xlu0.b32.cont [11/16] 0.0, 128
      %1445 = vxpose.xlu0.b32.cont [12/16] 0.0, 128
      %1446 = vxpose.xlu0.b32.cont [13/16] 0.0, 128
      %1447 = vxpose.xlu0.b32.cont [14/16] 0.0, 128
      %1448 = vxpose.xlu0.b32.cont [15/16] 0.0, 128
      %1449 = vxpose.xlu0.b32.end [16/16] 0.0, 128
      %v1450 = vpop.trf.xlu0
      %v1451 = vpop.trf.xlu0
      %v1452 = vpop.trf.xlu0
      %v1453 = vpop.trf.xlu0
      %v1454 = vpop.trf.xlu0
      %v1455 = vpop.trf.xlu0
      %v1456 = vpop.trf.xlu0
      %v1457 = vpop.trf.xlu0
      %v1458 = vpop.trf.xlu0
      %v1459 = vpop.trf.xlu0
      %v1460 = vpop.trf.xlu0
      %v1461 = vpop.trf.xlu0
      %v1462 = vpop.trf.xlu0
      %v1463 = vpop.trf.xlu0
      %v1464 = vpop.trf.xlu0
      %v1465 = vpop.trf.xlu0
      %1466 = vxpose.xlu0.b32.start [1/16] %v160, 128
      %1467 = vxpose.xlu0.b32.cont [2/16] 0.0, 128
      %1468 = vxpose.xlu0.b32.cont [3/16] 0.0, 128
      %1469 = vxpose.xlu0.b32.cont [4/16] 0.0, 128
      %1470 = vxpose.xlu0.b32.cont [5/16] 0.0, 128
      %1471 = vxpose.xlu0.b32.cont [6/16] 0.0, 128
      %1472 = vxpose.xlu0.b32.cont [7/16] 0.0, 128
      %1473 = vxpose.xlu0.b32.cont [8/16] 0.0, 128
      %1474 = vxpose.xlu0.b32.cont [9/16] 0.0, 128
      %1475 = vxpose.xlu0.b32.cont [10/16] 0.0, 128
      %1476 = vxpose.xlu0.b32.cont [11/16] 0.0, 128
      %1477 = vxpose.xlu0.b32.cont [12/16] 0.0, 128
      %1478 = vxpose.xlu0.b32.cont [13/16] 0.0, 128
      %1479 = vxpose.xlu0.b32.cont [14/16] 0.0, 128
      %1480 = vxpose.xlu0.b32.cont [15/16] 0.0, 128
      %1481 = vxpose.xlu0.b32.end [16/16] 0.0, 128
      %v1482 = vpop.trf.xlu0
      %v1483 = vpop.trf.xlu0
      %v1484 = vpop.trf.xlu0
      %v1485 = vpop.trf.xlu0
      %v1486 = vpop.trf.xlu0
      %v1487 = vpop.trf.xlu0
      %v1488 = vpop.trf.xlu0
      %v1489 = vpop.trf.xlu0
      %v1490 = vpop.trf.xlu0
      %v1491 = vpop.trf.xlu0
      %v1492 = vpop.trf.xlu0
      %v1493 = vpop.trf.xlu0
      %v1494 = vpop.trf.xlu0
      %v1495 = vpop.trf.xlu0
      %v1496 = vpop.trf.xlu0
      %v1497 = vpop.trf.xlu0
      %1498 = vxpose.xlu0.b32.start [1/16] %v161, 128
      %1499 = vxpose.xlu0.b32.cont [2/16] 0.0, 128
      %1500 = vxpose.xlu0.b32.cont [3/16] 0.0, 128
      %1501 = vxpose.xlu0.b32.cont [4/16] 0.0, 128
      %1502 = vxpose.xlu0.b32.cont [5/16] 0.0, 128
      %1503 = vxpose.xlu0.b32.cont [6/16] 0.0, 128
      %1504 = vxpose.xlu0.b32.cont [7/16] 0.0, 128
      %1505 = vxpose.xlu0.b32.cont [8/16] 0.0, 128
      %1506 = vxpose.xlu0.b32.cont [9/16] 0.0, 128
      %1507 = vxpose.xlu0.b32.cont [10/16] 0.0, 128
      %1508 = vxpose.xlu0.b32.cont [11/16] 0.0, 128
      %1509 = vxpose.xlu0.b32.cont [12/16] 0.0, 128
      %1510 = vxpose.xlu0.b32.cont [13/16] 0.0, 128
      %1511 = vxpose.xlu0.b32.cont [14/16] 0.0, 128
      %1512 = vxpose.xlu0.b32.cont [15/16] 0.0, 128
      %1513 = vxpose.xlu0.b32.end [16/16] 0.0, 128
      %v1514 = vpop.trf.xlu0
      %v1515 = vpop.trf.xlu0
      %v1516 = vpop.trf.xlu0
      %v1517 = vpop.trf.xlu0
      %v1518 = vpop.trf.xlu0
      %v1519 = vpop.trf.xlu0
      %v1520 = vpop.trf.xlu0
      %v1521 = vpop.trf.xlu0
      %v1522 = vpop.trf.xlu0
      %v1523 = vpop.trf.xlu0
      %v1524 = vpop.trf.xlu0
      %v1525 = vpop.trf.xlu0
      %v1526 = vpop.trf.xlu0
      %v1527 = vpop.trf.xlu0
      %v1528 = vpop.trf.xlu0
      %v1529 = vpop.trf.xlu0
      %1530 = vxpose.xlu0.b32.start [1/16] %v162, 128
      %1531 = vxpose.xlu0.b32.cont [2/16] 0.0, 128
      %1532 = vxpose.xlu0.b32.cont [3/16] 0.0, 128
      %1533 = vxpose.xlu0.b32.cont [4/16] 0.0, 128
      %1534 = vxpose.xlu0.b32.cont [5/16] 0.0, 128
      %1535 = vxpose.xlu0.b32.cont [6/16] 0.0, 128
      %1536 = vxpose.xlu0.b32.cont [7/16] 0.0, 128
      %1537 = vxpose.xlu0.b32.cont [8/16] 0.0, 128
      %1538 = vxpose.xlu0.b32.cont [9/16] 0.0, 128
      %1539 = vxpose.xlu0.b32.cont [10/16] 0.0, 128
      %1540 = vxpose.xlu0.b32.cont [11/16] 0.0, 128
      %1541 = vxpose.xlu0.b32.cont [12/16] 0.0, 128
      %1542 = vxpose.xlu0.b32.cont [13/16] 0.0, 128
      %1543 = vxpose.xlu0.b32.cont [14/16] 0.0, 128
      %1544 = vxpose.xlu0.b32.cont [15/16] 0.0, 128
      %1545 = vxpose.xlu0.b32.end [16/16] 0.0, 128
      %v1546 = vpop.trf.xlu0
      %v1547 = vpop.trf.xlu0
      %v1548 = vpop.trf.xlu0
      %v1549 = vpop.trf.xlu0
      %v1550 = vpop.trf.xlu0
      %v1551 = vpop.trf.xlu0
      %v1552 = vpop.trf.xlu0
      %v1553 = vpop.trf.xlu0
      %v1554 = vpop.trf.xlu0
      %v1555 = vpop.trf.xlu0
      %v1556 = vpop.trf.xlu0
      %v1557 = vpop.trf.xlu0
      %v1558 = vpop.trf.xlu0
      %v1559 = vpop.trf.xlu0
      %v1560 = vpop.trf.xlu0
      %v1561 = vpop.trf.xlu0
      %1562 = vxpose.xlu0.b32.start [1/16] %v163, 128
      %1563 = vxpose.xlu0.b32.cont [2/16] 0.0, 128
      %1564 = vxpose.xlu0.b32.cont [3/16] 0.0, 128
      %1565 = vxpose.xlu0.b32.cont [4/16] 0.0, 128
      %1566 = vxpose.xlu0.b32.cont [5/16] 0.0, 128
      %1567 = vxpose.xlu0.b32.cont [6/16] 0.0, 128
      %1568 = vxpose.xlu0.b32.cont [7/16] 0.0, 128
      %1569 = vxpose.xlu0.b32.cont [8/16] 0.0, 128
      %1570 = vxpose.xlu0.b32.cont [9/16] 0.0, 128
      %1571 = vxpose.xlu0.b32.cont [10/16] 0.0, 128
      %1572 = vxpose.xlu0.b32.cont [11/16] 0.0, 128
      %1573 = vxpose.xlu0.b32.cont [12/16] 0.0, 128
      %1574 = vxpose.xlu0.b32.cont [13/16] 0.0, 128
      %1575 = vxpose.xlu0.b32.cont [14/16] 0.0, 128
      %1576 = vxpose.xlu0.b32.cont [15/16] 0.0, 128
      %1577 = vxpose.xlu0.b32.end [16/16] 0.0, 128
      %v1578 = vpop.trf.xlu0
      %v1579 = vpop.trf.xlu0
      %v1580 = vpop.trf.xlu0
      %v1581 = vpop.trf.xlu0
      %v1582 = vpop.trf.xlu0
      %v1583 = vpop.trf.xlu0
      %v1584 = vpop.trf.xlu0
      %v1585 = vpop.trf.xlu0
      %v1586 = vpop.trf.xlu0
      %v1587 = vpop.trf.xlu0
      %v1588 = vpop.trf.xlu0
      %v1589 = vpop.trf.xlu0
      %v1590 = vpop.trf.xlu0
      %v1591 = vpop.trf.xlu0
      %v1592 = vpop.trf.xlu0
      %v1593 = vpop.trf.xlu0
      %1594 = vxpose.xlu0.b32.start [1/16] %v164, 128
      %1595 = vxpose.xlu0.b32.cont [2/16] 0.0, 128
      %1596 = vxpose.xlu0.b32.cont [3/16] 0.0, 128
      %1597 = vxpose.xlu0.b32.cont [4/16] 0.0, 128
      %1598 = vxpose.xlu0.b32.cont [5/16] 0.0, 128
      %1599 = vxpose.xlu0.b32.cont [6/16] 0.0, 128
      %1600 = vxpose.xlu0.b32.cont [7/16] 0.0, 128
      %1601 = vxpose.xlu0.b32.cont [8/16] 0.0, 128
      %1602 = vxpose.xlu0.b32.cont [9/16] 0.0, 128
      %1603 = vxpose.xlu0.b32.cont [10/16] 0.0, 128
      %1604 = vxpose.xlu0.b32.cont [11/16] 0.0, 128
      %1605 = vxpose.xlu0.b32.cont [12/16] 0.0, 128
      %1606 = vxpose.xlu0.b32.cont [13/16] 0.0, 128
      %1607 = vxpose.xlu0.b32.cont [14/16] 0.0, 128
      %1608 = vxpose.xlu0.b32.cont [15/16] 0.0, 128
      %1609 = vxpose.xlu0.b32.end [16/16] 0.0, 128
      %v1610 = vpop.trf.xlu0
      %v1611 = vpop.trf.xlu0
      %v1612 = vpop.trf.xlu0
      %v1613 = vpop.trf.xlu0
      %v1614 = vpop.trf.xlu0
      %v1615 = vpop.trf.xlu0
      %v1616 = vpop.trf.xlu0
      %v1617 = vpop.trf.xlu0
      %v1618 = vpop.trf.xlu0
      %v1619 = vpop.trf.xlu0
      %v1620 = vpop.trf.xlu0
      %v1621 = vpop.trf.xlu0
      %v1622 = vpop.trf.xlu0
      %v1623 = vpop.trf.xlu0
      %v1624 = vpop.trf.xlu0
      %v1625 = vpop.trf.xlu0
      %1626 = vxpose.xlu0.b32.start [1/16] %v165, 128
      %1627 = vxpose.xlu0.b32.cont [2/16] 0.0, 128
      %1628 = vxpose.xlu0.b32.cont [3/16] 0.0, 128
      %1629 = vxpose.xlu0.b32.cont [4/16] 0.0, 128
      %1630 = vxpose.xlu0.b32.cont [5/16] 0.0, 128
      %1631 = vxpose.xlu0.b32.cont [6/16] 0.0, 128
      %1632 = vxpose.xlu0.b32.cont [7/16] 0.0, 128
      %1633 = vxpose.xlu0.b32.cont [8/16] 0.0, 128
      %1634 = vxpose.xlu0.b32.cont [9/16] 0.0, 128
      %1635 = vxpose.xlu0.b32.cont [10/16] 0.0, 128
      %1636 = vxpose.xlu0.b32.cont [11/16] 0.0, 128
      %1637 = vxpose.xlu0.b32.cont [12/16] 0.0, 128
      %1638 = vxpose.xlu0.b32.cont [13/16] 0.0, 128
      %1639 = vxpose.xlu0.b32.cont [14/16] 0.0, 128
      %1640 = vxpose.xlu0.b32.cont [15/16] 0.0, 128
      %1641 = vxpose.xlu0.b32.end [16/16] 0.0, 128
      %v1642 = vpop.trf.xlu0
      %v1643 = vpop.trf.xlu0
      %v1644 = vpop.trf.xlu0
      %v1645 = vpop.trf.xlu0
      %v1646 = vpop.trf.xlu0
      %v1647 = vpop.trf.xlu0
      %v1648 = vpop.trf.xlu0
      %v1649 = vpop.trf.xlu0
      %v1650 = vpop.trf.xlu0
      %v1651 = vpop.trf.xlu0
      %v1652 = vpop.trf.xlu0
      %v1653 = vpop.trf.xlu0
      %v1654 = vpop.trf.xlu0
      %v1655 = vpop.trf.xlu0
      %v1656 = vpop.trf.xlu0
      %v1657 = vpop.trf.xlu0
      %1658 = vxpose.xlu0.b32.start [1/16] %v166, 128
      %1659 = vxpose.xlu0.b32.cont [2/16] 0.0, 128
      %1660 = vxpose.xlu0.b32.cont [3/16] 0.0, 128
      %1661 = vxpose.xlu0.b32.cont [4/16] 0.0, 128
      %1662 = vxpose.xlu0.b32.cont [5/16] 0.0, 128
      %1663 = vxpose.xlu0.b32.cont [6/16] 0.0, 128
      %1664 = vxpose.xlu0.b32.cont [7/16] 0.0, 128
      %1665 = vxpose.xlu0.b32.cont [8/16] 0.0, 128
      %1666 = vxpose.xlu0.b32.cont [9/16] 0.0, 128
      %1667 = vxpose.xlu0.b32.cont [10/16] 0.0, 128
      %1668 = vxpose.xlu0.b32.cont [11/16] 0.0, 128
      %1669 = vxpose.xlu0.b32.cont [12/16] 0.0, 128
      %1670 = vxpose.xlu0.b32.cont [13/16] 0.0, 128
      %1671 = vxpose.xlu0.b32.cont [14/16] 0.0, 128
      %1672 = vxpose.xlu0.b32.cont [15/16] 0.0, 128
      %1673 = vxpose.xlu0.b32.end [16/16] 0.0, 128
      %v1674 = vpop.trf.xlu0
      %v1675 = vpop.trf.xlu0
      %v1676 = vpop.trf.xlu0
      %v1677 = vpop.trf.xlu0
      %v1678 = vpop.trf.xlu0
      %v1679 = vpop.trf.xlu0
      %v1680 = vpop.trf.xlu0
      %v1681 = vpop.trf.xlu0
      %v1682 = vpop.trf.xlu0
      %v1683 = vpop.trf.xlu0
      %v1684 = vpop.trf.xlu0
      %v1685 = vpop.trf.xlu0
      %v1686 = vpop.trf.xlu0
      %v1687 = vpop.trf.xlu0
      %v1688 = vpop.trf.xlu0
      %v1689 = vpop.trf.xlu0
      %1690 = vxpose.xlu0.b32.start [1/16] %v167, 128
      %1691 = vxpose.xlu0.b32.cont [2/16] 0.0, 128
      %1692 = vxpose.xlu0.b32.cont [3/16] 0.0, 128
      %1693 = vxpose.xlu0.b32.cont [4/16] 0.0, 128
      %1694 = vxpose.xlu0.b32.cont [5/16] 0.0, 128
      %1695 = vxpose.xlu0.b32.cont [6/16] 0.0, 128
      %1696 = vxpose.xlu0.b32.cont [7/16] 0.0, 128
      %1697 = vxpose.xlu0.b32.cont [8/16] 0.0, 128
      %1698 = vxpose.xlu0.b32.cont [9/16] 0.0, 128
      %1699 = vxpose.xlu0.b32.cont [10/16] 0.0, 128
      %1700 = vxpose.xlu0.b32.cont [11/16] 0.0, 128
      %1701 = vxpose.xlu0.b32.cont [12/16] 0.0, 128
      %1702 = vxpose.xlu0.b32.cont [13/16] 0.0, 128
      %1703 = vxpose.xlu0.b32.cont [14/16] 0.0, 128
      %1704 = vxpose.xlu0.b32.cont [15/16] 0.0, 128
      %1705 = vxpose.xlu0.b32.end [16/16] 0.0, 128
      %v1706 = vpop.trf.xlu0
      %v1707 = vpop.trf.xlu0
      %v1708 = vpop.trf.xlu0
      %v1709 = vpop.trf.xlu0
      %v1710 = vpop.trf.xlu0
      %v1711 = vpop.trf.xlu0
      %v1712 = vpop.trf.xlu0
      %v1713 = vpop.trf.xlu0
      %v1714 = vpop.trf.xlu0
      %v1715 = vpop.trf.xlu0
      %v1716 = vpop.trf.xlu0
      %v1717 = vpop.trf.xlu0
      %v1718 = vpop.trf.xlu0
      %v1719 = vpop.trf.xlu0
      %v1720 = vpop.trf.xlu0
      %v1721 = vpop.trf.xlu0
      %1722 = vxpose.xlu0.b32.start [1/16] %v168, 128
      %1723 = vxpose.xlu0.b32.cont [2/16] 0.0, 128
      %1724 = vxpose.xlu0.b32.cont [3/16] 0.0, 128
      %1725 = vxpose.xlu0.b32.cont [4/16] 0.0, 128
      %1726 = vxpose.xlu0.b32.cont [5/16] 0.0, 128
      %1727 = vxpose.xlu0.b32.cont [6/16] 0.0, 128
      %1728 = vxpose.xlu0.b32.cont [7/16] 0.0, 128
      %1729 = vxpose.xlu0.b32.cont [8/16] 0.0, 128
      %1730 = vxpose.xlu0.b32.cont [9/16] 0.0, 128
      %1731 = vxpose.xlu0.b32.cont [10/16] 0.0, 128
      %1732 = vxpose.xlu0.b32.cont [11/16] 0.0, 128
      %1733 = vxpose.xlu0.b32.cont [12/16] 0.0, 128
      %1734 = vxpose.xlu0.b32.cont [13/16] 0.0, 128
      %1735 = vxpose.xlu0.b32.cont [14/16] 0.0, 128
      %1736 = vxpose.xlu0.b32.cont [15/16] 0.0, 128
      %1737 = vxpose.xlu0.b32.end [16/16] 0.0, 128
      %v1738 = vpop.trf.xlu0
      %v1739 = vpop.trf.xlu0
      %v1740 = vpop.trf.xlu0
      %v1741 = vpop.trf.xlu0
      %v1742 = vpop.trf.xlu0
      %v1743 = vpop.trf.xlu0
      %v1744 = vpop.trf.xlu0
      %v1745 = vpop.trf.xlu0
      %v1746 = vpop.trf.xlu0
      %v1747 = vpop.trf.xlu0
      %v1748 = vpop.trf.xlu0
      %v1749 = vpop.trf.xlu0
      %v1750 = vpop.trf.xlu0
      %v1751 = vpop.trf.xlu0
      %v1752 = vpop.trf.xlu0
      %v1753 = vpop.trf.xlu0
      %1754 = vxpose.xlu0.b32.start [1/16] %v169, 128
      %1755 = vxpose.xlu0.b32.cont [2/16] 0.0, 128
      %1756 = vxpose.xlu0.b32.cont [3/16] 0.0, 128
      %1757 = vxpose.xlu0.b32.cont [4/16] 0.0, 128
      %1758 = vxpose.xlu0.b32.cont [5/16] 0.0, 128
      %1759 = vxpose.xlu0.b32.cont [6/16] 0.0, 128
      %1760 = vxpose.xlu0.b32.cont [7/16] 0.0, 128
      %1761 = vxpose.xlu0.b32.cont [8/16] 0.0, 128
      %1762 = vxpose.xlu0.b32.cont [9/16] 0.0, 128
      %1763 = vxpose.xlu0.b32.cont [10/16] 0.0, 128
      %1764 = vxpose.xlu0.b32.cont [11/16] 0.0, 128
      %1765 = vxpose.xlu0.b32.cont [12/16] 0.0, 128
      %1766 = vxpose.xlu0.b32.cont [13/16] 0.0, 128
      %1767 = vxpose.xlu0.b32.cont [14/16] 0.0, 128
      %1768 = vxpose.xlu0.b32.cont [15/16] 0.0, 128
      %1769 = vxpose.xlu0.b32.end [16/16] 0.0, 128
      %v1770 = vpop.trf.xlu0
      %v1771 = vpop.trf.xlu0
      %v1772 = vpop.trf.xlu0
      %v1773 = vpop.trf.xlu0
      %v1774 = vpop.trf.xlu0
      %v1775 = vpop.trf.xlu0
      %v1776 = vpop.trf.xlu0
      %v1777 = vpop.trf.xlu0
      %v1778 = vpop.trf.xlu0
      %v1779 = vpop.trf.xlu0
      %v1780 = vpop.trf.xlu0
      %v1781 = vpop.trf.xlu0
      %v1782 = vpop.trf.xlu0
      %v1783 = vpop.trf.xlu0
      %v1784 = vpop.trf.xlu0
      %v1785 = vpop.trf.xlu0
      %1786 = vxpose.xlu0.b32.start [1/16] %v170, 128
      %1787 = vxpose.xlu0.b32.cont [2/16] 0.0, 128
      %1788 = vxpose.xlu0.b32.cont [3/16] 0.0, 128
      %1789 = vxpose.xlu0.b32.cont [4/16] 0.0, 128
      %1790 = vxpose.xlu0.b32.cont [5/16] 0.0, 128
      %1791 = vxpose.xlu0.b32.cont [6/16] 0.0, 128
      %1792 = vxpose.xlu0.b32.cont [7/16] 0.0, 128
      %1793 = vxpose.xlu0.b32.cont [8/16] 0.0, 128
      %1794 = vxpose.xlu0.b32.cont [9/16] 0.0, 128
      %1795 = vxpose.xlu0.b32.cont [10/16] 0.0, 128
      %1796 = vxpose.xlu0.b32.cont [11/16] 0.0, 128
      %1797 = vxpose.xlu0.b32.cont [12/16] 0.0, 128
      %1798 = vxpose.xlu0.b32.cont [13/16] 0.0, 128
      %1799 = vxpose.xlu0.b32.cont [14/16] 0.0, 128
      %1800 = vxpose.xlu0.b32.cont [15/16] 0.0, 128
      %1801 = vxpose.xlu0.b32.end [16/16] 0.0, 128
      %v1802 = vpop.trf.xlu0
      %v1803 = vpop.trf.xlu0
      %v1804 = vpop.trf.xlu0
      %v1805 = vpop.trf.xlu0
      %v1806 = vpop.trf.xlu0
      %v1807 = vpop.trf.xlu0
      %v1808 = vpop.trf.xlu0
      %v1809 = vpop.trf.xlu0
      %v1810 = vpop.trf.xlu0
      %v1811 = vpop.trf.xlu0
      %v1812 = vpop.trf.xlu0
      %v1813 = vpop.trf.xlu0
      %v1814 = vpop.trf.xlu0
      %v1815 = vpop.trf.xlu0
      %v1816 = vpop.trf.xlu0
      %v1817 = vpop.trf.xlu0
      %1818 = vxpose.xlu0.b32.start [1/16] %v171, 128
      %1819 = vxpose.xlu0.b32.cont [2/16] 0.0, 128
      %1820 = vxpose.xlu0.b32.cont [3/16] 0.0, 128
      %1821 = vxpose.xlu0.b32.cont [4/16] 0.0, 128
      %1822 = vxpose.xlu0.b32.cont [5/16] 0.0, 128
      %1823 = vxpose.xlu0.b32.cont [6/16] 0.0, 128
      %1824 = vxpose.xlu0.b32.cont [7/16] 0.0, 128
      %1825 = vxpose.xlu0.b32.cont [8/16] 0.0, 128
      %1826 = vxpose.xlu0.b32.cont [9/16] 0.0, 128
      %1827 = vxpose.xlu0.b32.cont [10/16] 0.0, 128
      %1828 = vxpose.xlu0.b32.cont [11/16] 0.0, 128
      %1829 = vxpose.xlu0.b32.cont [12/16] 0.0, 128
      %1830 = vxpose.xlu0.b32.cont [13/16] 0.0, 128
      %1831 = vxpose.xlu0.b32.cont [14/16] 0.0, 128
      %1832 = vxpose.xlu0.b32.cont [15/16] 0.0, 128
      %1833 = vxpose.xlu0.b32.end [16/16] 0.0, 128
      %v1834 = vpop.trf.xlu0
      %v1835 = vpop.trf.xlu0
      %v1836 = vpop.trf.xlu0
      %v1837 = vpop.trf.xlu0
      %v1838 = vpop.trf.xlu0
      %v1839 = vpop.trf.xlu0
      %v1840 = vpop.trf.xlu0
      %v1841 = vpop.trf.xlu0
      %v1842 = vpop.trf.xlu0
      %v1843 = vpop.trf.xlu0
      %v1844 = vpop.trf.xlu0
      %v1845 = vpop.trf.xlu0
      %v1846 = vpop.trf.xlu0
      %v1847 = vpop.trf.xlu0
      %v1848 = vpop.trf.xlu0
      %v1849 = vpop.trf.xlu0
      %1850 = vxpose.xlu0.b32.start [1/16] %v172, 128
      %1851 = vxpose.xlu0.b32.cont [2/16] 0.0, 128
      %1852 = vxpose.xlu0.b32.cont [3/16] 0.0, 128
      %1853 = vxpose.xlu0.b32.cont [4/16] 0.0, 128
      %1854 = vxpose.xlu0.b32.cont [5/16] 0.0, 128
      %1855 = vxpose.xlu0.b32.cont [6/16] 0.0, 128
      %1856 = vxpose.xlu0.b32.cont [7/16] 0.0, 128
      %1857 = vxpose.xlu0.b32.cont [8/16] 0.0, 128
      %1858 = vxpose.xlu0.b32.cont [9/16] 0.0, 128
      %1859 = vxpose.xlu0.b32.cont [10/16] 0.0, 128
      %1860 = vxpose.xlu0.b32.cont [11/16] 0.0, 128
      %1861 = vxpose.xlu0.b32.cont [12/16] 0.0, 128
      %1862 = vxpose.xlu0.b32.cont [13/16] 0.0, 128
      %1863 = vxpose.xlu0.b32.cont [14/16] 0.0, 128
      %1864 = vxpose.xlu0.b32.cont [15/16] 0.0, 128
      %1865 = vxpose.xlu0.b32.end [16/16] 0.0, 128
      %v1866 = vpop.trf.xlu0
      %v1867 = vpop.trf.xlu0
      %v1868 = vpop.trf.xlu0
      %v1869 = vpop.trf.xlu0
      %v1870 = vpop.trf.xlu0
      %v1871 = vpop.trf.xlu0
      %v1872 = vpop.trf.xlu0
      %v1873 = vpop.trf.xlu0
      %v1874 = vpop.trf.xlu0
      %v1875 = vpop.trf.xlu0
      %v1876 = vpop.trf.xlu0
      %v1877 = vpop.trf.xlu0
      %v1878 = vpop.trf.xlu0
      %v1879 = vpop.trf.xlu0
      %v1880 = vpop.trf.xlu0
      %v1881 = vpop.trf.xlu0
      %1882 = vxpose.xlu0.b32.start [1/16] %v173, 128
      %1883 = vxpose.xlu0.b32.cont [2/16] 0.0, 128
      %1884 = vxpose.xlu0.b32.cont [3/16] 0.0, 128
      %1885 = vxpose.xlu0.b32.cont [4/16] 0.0, 128
      %1886 = vxpose.xlu0.b32.cont [5/16] 0.0, 128
      %1887 = vxpose.xlu0.b32.cont [6/16] 0.0, 128
      %1888 = vxpose.xlu0.b32.cont [7/16] 0.0, 128
      %1889 = vxpose.xlu0.b32.cont [8/16] 0.0, 128
      %1890 = vxpose.xlu0.b32.cont [9/16] 0.0, 128
      %1891 = vxpose.xlu0.b32.cont [10/16] 0.0, 128
      %1892 = vxpose.xlu0.b32.cont [11/16] 0.0, 128
      %1893 = vxpose.xlu0.b32.cont [12/16] 0.0, 128
      %1894 = vxpose.xlu0.b32.cont [13/16] 0.0, 128
      %1895 = vxpose.xlu0.b32.cont [14/16] 0.0, 128
      %1896 = vxpose.xlu0.b32.cont [15/16] 0.0, 128
      %1897 = vxpose.xlu0.b32.end [16/16] 0.0, 128
      %v1898 = vpop.trf.xlu0
      %v1899 = vpop.trf.xlu0
      %v1900 = vpop.trf.xlu0
      %v1901 = vpop.trf.xlu0
      %v1902 = vpop.trf.xlu0
      %v1903 = vpop.trf.xlu0
      %v1904 = vpop.trf.xlu0
      %v1905 = vpop.trf.xlu0
      %v1906 = vpop.trf.xlu0
      %v1907 = vpop.trf.xlu0
      %v1908 = vpop.trf.xlu0
      %v1909 = vpop.trf.xlu0
      %v1910 = vpop.trf.xlu0
      %v1911 = vpop.trf.xlu0
      %v1912 = vpop.trf.xlu0
      %v1913 = vpop.trf.xlu0
      %1914 = vxpose.xlu0.b32.start [1/16] %v174, 128
      %1915 = vxpose.xlu0.b32.cont [2/16] 0.0, 128
      %1916 = vxpose.xlu0.b32.cont [3/16] 0.0, 128
      %1917 = vxpose.xlu0.b32.cont [4/16] 0.0, 128
      %1918 = vxpose.xlu0.b32.cont [5/16] 0.0, 128
      %1919 = vxpose.xlu0.b32.cont [6/16] 0.0, 128
      %1920 = vxpose.xlu0.b32.cont [7/16] 0.0, 128
      %1921 = vxpose.xlu0.b32.cont [8/16] 0.0, 128
      %1922 = vxpose.xlu0.b32.cont [9/16] 0.0, 128
      %1923 = vxpose.xlu0.b32.cont [10/16] 0.0, 128
      %1924 = vxpose.xlu0.b32.cont [11/16] 0.0, 128
      %1925 = vxpose.xlu0.b32.cont [12/16] 0.0, 128
      %1926 = vxpose.xlu0.b32.cont [13/16] 0.0, 128
      %1927 = vxpose.xlu0.b32.cont [14/16] 0.0, 128
      %1928 = vxpose.xlu0.b32.cont [15/16] 0.0, 128
      %1929 = vxpose.xlu0.b32.end [16/16] 0.0, 128
      %v1930 = vpop.trf.xlu0
      %v1931 = vpop.trf.xlu0
      %v1932 = vpop.trf.xlu0
      %v1933 = vpop.trf.xlu0
      %v1934 = vpop.trf.xlu0
      %v1935 = vpop.trf.xlu0
      %v1936 = vpop.trf.xlu0
      %v1937 = vpop.trf.xlu0
      %v1938 = vpop.trf.xlu0
      %v1939 = vpop.trf.xlu0
      %v1940 = vpop.trf.xlu0
      %v1941 = vpop.trf.xlu0
      %v1942 = vpop.trf.xlu0
      %v1943 = vpop.trf.xlu0
      %v1944 = vpop.trf.xlu0
      %v1945 = vpop.trf.xlu0
      %1946 = vxpose.xlu0.b32.start [1/16] %v175, 128
      %1947 = vxpose.xlu0.b32.cont [2/16] 0.0, 128
      %1948 = vxpose.xlu0.b32.cont [3/16] 0.0, 128
      %1949 = vxpose.xlu0.b32.cont [4/16] 0.0, 128
      %1950 = vxpose.xlu0.b32.cont [5/16] 0.0, 128
      %1951 = vxpose.xlu0.b32.cont [6/16] 0.0, 128
      %1952 = vxpose.xlu0.b32.cont [7/16] 0.0, 128
      %1953 = vxpose.xlu0.b32.cont [8/16] 0.0, 128
      %1954 = vxpose.xlu0.b32.cont [9/16] 0.0, 128
      %1955 = vxpose.xlu0.b32.cont [10/16] 0.0, 128
      %1956 = vxpose.xlu0.b32.cont [11/16] 0.0, 128
      %1957 = vxpose.xlu0.b32.cont [12/16] 0.0, 128
      %1958 = vxpose.xlu0.b32.cont [13/16] 0.0, 128
      %1959 = vxpose.xlu0.b32.cont [14/16] 0.0, 128
      %1960 = vxpose.xlu0.b32.cont [15/16] 0.0, 128
      %1961 = vxpose.xlu0.b32.end [16/16] 0.0, 128
      %v1962 = vpop.trf.xlu0
      %v1963 = vpop.trf.xlu0
      %v1964 = vpop.trf.xlu0
      %v1965 = vpop.trf.xlu0
      %v1966 = vpop.trf.xlu0
      %v1967 = vpop.trf.xlu0
      %v1968 = vpop.trf.xlu0
      %v1969 = vpop.trf.xlu0
      %v1970 = vpop.trf.xlu0
      %v1971 = vpop.trf.xlu0
      %v1972 = vpop.trf.xlu0
      %v1973 = vpop.trf.xlu0
      %v1974 = vpop.trf.xlu0
      %v1975 = vpop.trf.xlu0
      %v1976 = vpop.trf.xlu0
      %v1977 = vpop.trf.xlu0
      %1978 = vxpose.xlu0.b32.start [1/16] %v176, 128
      %1979 = vxpose.xlu0.b32.cont [2/16] 0.0, 128
      %1980 = vxpose.xlu0.b32.cont [3/16] 0.0, 128
      %1981 = vxpose.xlu0.b32.cont [4/16] 0.0, 128
      %1982 = vxpose.xlu0.b32.cont [5/16] 0.0, 128
      %1983 = vxpose.xlu0.b32.cont [6/16] 0.0, 128
      %1984 = vxpose.xlu0.b32.cont [7/16] 0.0, 128
      %1985 = vxpose.xlu0.b32.cont [8/16] 0.0, 128
      %1986 = vxpose.xlu0.b32.cont [9/16] 0.0, 128
      %1987 = vxpose.xlu0.b32.cont [10/16] 0.0, 128
      %1988 = vxpose.xlu0.b32.cont [11/16] 0.0, 128
      %1989 = vxpose.xlu0.b32.cont [12/16] 0.0, 128
      %1990 = vxpose.xlu0.b32.cont [13/16] 0.0, 128
      %1991 = vxpose.xlu0.b32.cont [14/16] 0.0, 128
      %1992 = vxpose.xlu0.b32.cont [15/16] 0.0, 128
      %1993 = vxpose.xlu0.b32.end [16/16] 0.0, 128
      %v1994 = vpop.trf.xlu0
      %v1995 = vpop.trf.xlu0
      %v1996 = vpop.trf.xlu0
      %v1997 = vpop.trf.xlu0
      %v1998 = vpop.trf.xlu0
      %v1999 = vpop.trf.xlu0
      %v2000 = vpop.trf.xlu0
      %v2001 = vpop.trf.xlu0
      %v2002 = vpop.trf.xlu0
      %v2003 = vpop.trf.xlu0
      %v2004 = vpop.trf.xlu0
      %v2005 = vpop.trf.xlu0
      %v2006 = vpop.trf.xlu0
      %v2007 = vpop.trf.xlu0
      %v2008 = vpop.trf.xlu0
      %v2009 = vpop.trf.xlu0
      %2010 = vxpose.xlu0.b32.start [1/16] %v177, 128
      %2011 = vxpose.xlu0.b32.cont [2/16] 0.0, 128
      %2012 = vxpose.xlu0.b32.cont [3/16] 0.0, 128
      %2013 = vxpose.xlu0.b32.cont [4/16] 0.0, 128
      %2014 = vxpose.xlu0.b32.cont [5/16] 0.0, 128
      %2015 = vxpose.xlu0.b32.cont [6/16] 0.0, 128
      %2016 = vxpose.xlu0.b32.cont [7/16] 0.0, 128
      %2017 = vxpose.xlu0.b32.cont [8/16] 0.0, 128
      %2018 = vxpose.xlu0.b32.cont [9/16] 0.0, 128
      %2019 = vxpose.xlu0.b32.cont [10/16] 0.0, 128
      %2020 = vxpose.xlu0.b32.cont [11/16] 0.0, 128
      %2021 = vxpose.xlu0.b32.cont [12/16] 0.0, 128
      %2022 = vxpose.xlu0.b32.cont [13/16] 0.0, 128
      %2023 = vxpose.xlu0.b32.cont [14/16] 0.0, 128
      %2024 = vxpose.xlu0.b32.cont [15/16] 0.0, 128
      %2025 = vxpose.xlu0.b32.end [16/16] 0.0, 128
      %v2026 = vpop.trf.xlu0
      %v2027 = vpop.trf.xlu0
      %v2028 = vpop.trf.xlu0
      %v2029 = vpop.trf.xlu0
      %v2030 = vpop.trf.xlu0
      %v2031 = vpop.trf.xlu0
      %v2032 = vpop.trf.xlu0
      %v2033 = vpop.trf.xlu0
      %v2034 = vpop.trf.xlu0
      %v2035 = vpop.trf.xlu0
      %v2036 = vpop.trf.xlu0
      %v2037 = vpop.trf.xlu0
      %v2038 = vpop.trf.xlu0
      %v2039 = vpop.trf.xlu0
      %v2040 = vpop.trf.xlu0
      %v2041 = vpop.trf.xlu0
      %2042 = vxpose.xlu0.b32.start [1/16] %v178, 128
      %2043 = vxpose.xlu0.b32.cont [2/16] 0.0, 128
      %2044 = vxpose.xlu0.b32.cont [3/16] 0.0, 128
      %2045 = vxpose.xlu0.b32.cont [4/16] 0.0, 128
      %2046 = vxpose.xlu0.b32.cont [5/16] 0.0, 128
      %2047 = vxpose.xlu0.b32.cont [6/16] 0.0, 128
      %2048 = vxpose.xlu0.b32.cont [7/16] 0.0, 128
      %2049 = vxpose.xlu0.b32.cont [8/16] 0.0, 128
      %2050 = vxpose.xlu0.b32.cont [9/16] 0.0, 128
      %2051 = vxpose.xlu0.b32.cont [10/16] 0.0, 128
      %2052 = vxpose.xlu0.b32.cont [11/16] 0.0, 128
      %2053 = vxpose.xlu0.b32.cont [12/16] 0.0, 128
      %2054 = vxpose.xlu0.b32.cont [13/16] 0.0, 128
      %2055 = vxpose.xlu0.b32.cont [14/16] 0.0, 128
      %2056 = vxpose.xlu0.b32.cont [15/16] 0.0, 128
      %2057 = vxpose.xlu0.b32.end [16/16] 0.0, 128
      %v2058 = vpop.trf.xlu0
      %v2059 = vpop.trf.xlu0
      %v2060 = vpop.trf.xlu0
      %v2061 = vpop.trf.xlu0
      %v2062 = vpop.trf.xlu0
      %v2063 = vpop.trf.xlu0
      %v2064 = vpop.trf.xlu0
      %v2065 = vpop.trf.xlu0
      %v2066 = vpop.trf.xlu0
      %v2067 = vpop.trf.xlu0
      %v2068 = vpop.trf.xlu0
      %v2069 = vpop.trf.xlu0
      %v2070 = vpop.trf.xlu0
      %v2071 = vpop.trf.xlu0
      %v2072 = vpop.trf.xlu0
      %v2073 = vpop.trf.xlu0
      %2074 = vxpose.xlu0.b32.start [1/16] %v179, 128
      %2075 = vxpose.xlu0.b32.cont [2/16] 0.0, 128
      %2076 = vxpose.xlu0.b32.cont [3/16] 0.0, 128
      %2077 = vxpose.xlu0.b32.cont [4/16] 0.0, 128
      %2078 = vxpose.xlu0.b32.cont [5/16] 0.0, 128
      %2079 = vxpose.xlu0.b32.cont [6/16] 0.0, 128
      %2080 = vxpose.xlu0.b32.cont [7/16] 0.0, 128
      %2081 = vxpose.xlu0.b32.cont [8/16] 0.0, 128
      %2082 = vxpose.xlu0.b32.cont [9/16] 0.0, 128
      %2083 = vxpose.xlu0.b32.cont [10/16] 0.0, 128
      %2084 = vxpose.xlu0.b32.cont [11/16] 0.0, 128
      %2085 = vxpose.xlu0.b32.cont [12/16] 0.0, 128
      %2086 = vxpose.xlu0.b32.cont [13/16] 0.0, 128
      %2087 = vxpose.xlu0.b32.cont [14/16] 0.0, 128
      %2088 = vxpose.xlu0.b32.cont [15/16] 0.0, 128
      %2089 = vxpose.xlu0.b32.end [16/16] 0.0, 128
      %v2090 = vpop.trf.xlu0
      %v2091 = vpop.trf.xlu0
      %v2092 = vpop.trf.xlu0
      %v2093 = vpop.trf.xlu0
      %v2094 = vpop.trf.xlu0
      %v2095 = vpop.trf.xlu0
      %v2096 = vpop.trf.xlu0
      %v2097 = vpop.trf.xlu0
      %v2098 = vpop.trf.xlu0
      %v2099 = vpop.trf.xlu0
      %v2100 = vpop.trf.xlu0
      %v2101 = vpop.trf.xlu0
      %v2102 = vpop.trf.xlu0
      %v2103 = vpop.trf.xlu0
      %v2104 = vpop.trf.xlu0
      %v2105 = vpop.trf.xlu0
      %2106 = vxpose.xlu0.b32.start [1/16] %v180, 128
      %2107 = vxpose.xlu0.b32.cont [2/16] 0.0, 128
      %2108 = vxpose.xlu0.b32.cont [3/16] 0.0, 128
      %2109 = vxpose.xlu0.b32.cont [4/16] 0.0, 128
      %2110 = vxpose.xlu0.b32.cont [5/16] 0.0, 128
      %2111 = vxpose.xlu0.b32.cont [6/16] 0.0, 128
      %2112 = vxpose.xlu0.b32.cont [7/16] 0.0, 128
      %2113 = vxpose.xlu0.b32.cont [8/16] 0.0, 128
      %2114 = vxpose.xlu0.b32.cont [9/16] 0.0, 128
      %2115 = vxpose.xlu0.b32.cont [10/16] 0.0, 128
      %2116 = vxpose.xlu0.b32.cont [11/16] 0.0, 128
      %2117 = vxpose.xlu0.b32.cont [12/16] 0.0, 128
      %2118 = vxpose.xlu0.b32.cont [13/16] 0.0, 128
      %2119 = vxpose.xlu0.b32.cont [14/16] 0.0, 128
      %2120 = vxpose.xlu0.b32.cont [15/16] 0.0, 128
      %2121 = vxpose.xlu0.b32.end [16/16] 0.0, 128
      %v2122 = vpop.trf.xlu0
      %v2123 = vpop.trf.xlu0
      %v2124 = vpop.trf.xlu0
      %v2125 = vpop.trf.xlu0
      %v2126 = vpop.trf.xlu0
      %v2127 = vpop.trf.xlu0
      %v2128 = vpop.trf.xlu0
      %v2129 = vpop.trf.xlu0
      %v2130 = vpop.trf.xlu0
      %v2131 = vpop.trf.xlu0
      %v2132 = vpop.trf.xlu0
      %v2133 = vpop.trf.xlu0
      %v2134 = vpop.trf.xlu0
      %v2135 = vpop.trf.xlu0
      %v2136 = vpop.trf.xlu0
      %v2137 = vpop.trf.xlu0
      %2138 = vxpose.xlu0.b32.start [1/16] %v181, 128
      %2139 = vxpose.xlu0.b32.cont [2/16] 0.0, 128
      %2140 = vxpose.xlu0.b32.cont [3/16] 0.0, 128
      %2141 = vxpose.xlu0.b32.cont [4/16] 0.0, 128
      %2142 = vxpose.xlu0.b32.cont [5/16] 0.0, 128
      %2143 = vxpose.xlu0.b32.cont [6/16] 0.0, 128
      %2144 = vxpose.xlu0.b32.cont [7/16] 0.0, 128
      %2145 = vxpose.xlu0.b32.cont [8/16] 0.0, 128
      %2146 = vxpose.xlu0.b32.cont [9/16] 0.0, 128
      %2147 = vxpose.xlu0.b32.cont [10/16] 0.0, 128
      %2148 = vxpose.xlu0.b32.cont [11/16] 0.0, 128
      %2149 = vxpose.xlu0.b32.cont [12/16] 0.0, 128
      %2150 = vxpose.xlu0.b32.cont [13/16] 0.0, 128
      %2151 = vxpose.xlu0.b32.cont [14/16] 0.0, 128
      %2152 = vxpose.xlu0.b32.cont [15/16] 0.0, 128
      %2153 = vxpose.xlu0.b32.end [16/16] 0.0, 128
      %v2154 = vpop.trf.xlu0
      %v2155 = vpop.trf.xlu0
      %v2156 = vpop.trf.xlu0
      %v2157 = vpop.trf.xlu0
      %v2158 = vpop.trf.xlu0
      %v2159 = vpop.trf.xlu0
      %v2160 = vpop.trf.xlu0
      %v2161 = vpop.trf.xlu0
      %v2162 = vpop.trf.xlu0
      %v2163 = vpop.trf.xlu0
      %v2164 = vpop.trf.xlu0
      %v2165 = vpop.trf.xlu0
      %v2166 = vpop.trf.xlu0
      %v2167 = vpop.trf.xlu0
      %v2168 = vpop.trf.xlu0
      %v2169 = vpop.trf.xlu0
      %2170 = vxpose.xlu0.b32.start [1/16] %v182, 128
      %2171 = vxpose.xlu0.b32.cont [2/16] 0.0, 128
      %2172 = vxpose.xlu0.b32.cont [3/16] 0.0, 128
      %2173 = vxpose.xlu0.b32.cont [4/16] 0.0, 128
      %2174 = vxpose.xlu0.b32.cont [5/16] 0.0, 128
      %2175 = vxpose.xlu0.b32.cont [6/16] 0.0, 128
      %2176 = vxpose.xlu0.b32.cont [7/16] 0.0, 128
      %2177 = vxpose.xlu0.b32.cont [8/16] 0.0, 128
      %2178 = vxpose.xlu0.b32.cont [9/16] 0.0, 128
      %2179 = vxpose.xlu0.b32.cont [10/16] 0.0, 128
      %2180 = vxpose.xlu0.b32.cont [11/16] 0.0, 128
      %2181 = vxpose.xlu0.b32.cont [12/16] 0.0, 128
      %2182 = vxpose.xlu0.b32.cont [13/16] 0.0, 128
      %2183 = vxpose.xlu0.b32.cont [14/16] 0.0, 128
      %2184 = vxpose.xlu0.b32.cont [15/16] 0.0, 128
      %2185 = vxpose.xlu0.b32.end [16/16] 0.0, 128
      %v2186 = vpop.trf.xlu0
      %v2187 = vpop.trf.xlu0
      %v2188 = vpop.trf.xlu0
      %v2189 = vpop.trf.xlu0
      %v2190 = vpop.trf.xlu0
      %v2191 = vpop.trf.xlu0
      %v2192 = vpop.trf.xlu0
      %v2193 = vpop.trf.xlu0
      %v2194 = vpop.trf.xlu0
      %v2195 = vpop.trf.xlu0
      %v2196 = vpop.trf.xlu0
      %v2197 = vpop.trf.xlu0
      %v2198 = vpop.trf.xlu0
      %v2199 = vpop.trf.xlu0
      %v2200 = vpop.trf.xlu0
      %v2201 = vpop.trf.xlu0
      %2202 = vxpose.xlu0.b32.start [1/16] %v183, 128
      %2203 = vxpose.xlu0.b32.cont [2/16] 0.0, 128
      %2204 = vxpose.xlu0.b32.cont [3/16] 0.0, 128
      %2205 = vxpose.xlu0.b32.cont [4/16] 0.0, 128
      %2206 = vxpose.xlu0.b32.cont [5/16] 0.0, 128
      %2207 = vxpose.xlu0.b32.cont [6/16] 0.0, 128
      %2208 = vxpose.xlu0.b32.cont [7/16] 0.0, 128
      %2209 = vxpose.xlu0.b32.cont [8/16] 0.0, 128
      %2210 = vxpose.xlu0.b32.cont [9/16] 0.0, 128
      %2211 = vxpose.xlu0.b32.cont [10/16] 0.0, 128
      %2212 = vxpose.xlu0.b32.cont [11/16] 0.0, 128
      %2213 = vxpose.xlu0.b32.cont [12/16] 0.0, 128
      %2214 = vxpose.xlu0.b32.cont [13/16] 0.0, 128
      %2215 = vxpose.xlu0.b32.cont [14/16] 0.0, 128
      %2216 = vxpose.xlu0.b32.cont [15/16] 0.0, 128
      %2217 = vxpose.xlu0.b32.end [16/16] 0.0, 128
      %v2218 = vpop.trf.xlu0
      %v2219 = vpop.trf.xlu0
      %v2220 = vpop.trf.xlu0
      %v2221 = vpop.trf.xlu0
      %v2222 = vpop.trf.xlu0
      %v2223 = vpop.trf.xlu0
      %v2224 = vpop.trf.xlu0
      %v2225 = vpop.trf.xlu0
      %v2226 = vpop.trf.xlu0
      %v2227 = vpop.trf.xlu0
      %v2228 = vpop.trf.xlu0
      %v2229 = vpop.trf.xlu0
      %v2230 = vpop.trf.xlu0
      %v2231 = vpop.trf.xlu0
      %v2232 = vpop.trf.xlu0
      %v2233 = vpop.trf.xlu0
      %2234 = vxpose.xlu0.b32.start [1/16] %v184, 128
      %2235 = vxpose.xlu0.b32.cont [2/16] 0.0, 128
      %2236 = vxpose.xlu0.b32.cont [3/16] 0.0, 128
      %2237 = vxpose.xlu0.b32.cont [4/16] 0.0, 128
      %2238 = vxpose.xlu0.b32.cont [5/16] 0.0, 128
      %2239 = vxpose.xlu0.b32.cont [6/16] 0.0, 128
      %2240 = vxpose.xlu0.b32.cont [7/16] 0.0, 128
      %2241 = vxpose.xlu0.b32.cont [8/16] 0.0, 128
      %2242 = vxpose.xlu0.b32.cont [9/16] 0.0, 128
      %2243 = vxpose.xlu0.b32.cont [10/16] 0.0, 128
      %2244 = vxpose.xlu0.b32.cont [11/16] 0.0, 128
      %2245 = vxpose.xlu0.b32.cont [12/16] 0.0, 128
      %2246 = vxpose.xlu0.b32.cont [13/16] 0.0, 128
      %2247 = vxpose.xlu0.b32.cont [14/16] 0.0, 128
      %2248 = vxpose.xlu0.b32.cont [15/16] 0.0, 128
      %2249 = vxpose.xlu0.b32.end [16/16] 0.0, 128
      %v2250 = vpop.trf.xlu0
      %v2251 = vpop.trf.xlu0
      %v2252 = vpop.trf.xlu0
      %v2253 = vpop.trf.xlu0
      %v2254 = vpop.trf.xlu0
      %v2255 = vpop.trf.xlu0
      %v2256 = vpop.trf.xlu0
      %v2257 = vpop.trf.xlu0
      %v2258 = vpop.trf.xlu0
      %v2259 = vpop.trf.xlu0
      %v2260 = vpop.trf.xlu0
      %v2261 = vpop.trf.xlu0
      %v2262 = vpop.trf.xlu0
      %v2263 = vpop.trf.xlu0
      %v2264 = vpop.trf.xlu0
      %v2265 = vpop.trf.xlu0
      %2266 = vxpose.xlu0.b32.start [1/16] %v185, 128
      %2267 = vxpose.xlu0.b32.cont [2/16] 0.0, 128
      %2268 = vxpose.xlu0.b32.cont [3/16] 0.0, 128
      %2269 = vxpose.xlu0.b32.cont [4/16] 0.0, 128
      %2270 = vxpose.xlu0.b32.cont [5/16] 0.0, 128
      %2271 = vxpose.xlu0.b32.cont [6/16] 0.0, 128
      %2272 = vxpose.xlu0.b32.cont [7/16] 0.0, 128
      %2273 = vxpose.xlu0.b32.cont [8/16] 0.0, 128
      %2274 = vxpose.xlu0.b32.cont [9/16] 0.0, 128
      %2275 = vxpose.xlu0.b32.cont [10/16] 0.0, 128
      %2276 = vxpose.xlu0.b32.cont [11/16] 0.0, 128
      %2277 = vxpose.xlu0.b32.cont [12/16] 0.0, 128
      %2278 = vxpose.xlu0.b32.cont [13/16] 0.0, 128
      %2279 = vxpose.xlu0.b32.cont [14/16] 0.0, 128
      %2280 = vxpose.xlu0.b32.cont [15/16] 0.0, 128
      %2281 = vxpose.xlu0.b32.end [16/16] 0.0, 128
      %v2282 = vpop.trf.xlu0
      %v2283 = vpop.trf.xlu0
      %v2284 = vpop.trf.xlu0
      %v2285 = vpop.trf.xlu0
      %v2286 = vpop.trf.xlu0
      %v2287 = vpop.trf.xlu0
      %v2288 = vpop.trf.xlu0
      %v2289 = vpop.trf.xlu0
      %v2290 = vpop.trf.xlu0
      %v2291 = vpop.trf.xlu0
      %v2292 = vpop.trf.xlu0
      %v2293 = vpop.trf.xlu0
      %v2294 = vpop.trf.xlu0
      %v2295 = vpop.trf.xlu0
      %v2296 = vpop.trf.xlu0
      %v2297 = vpop.trf.xlu0
      %2298 = vxpose.xlu0.b32.start [1/16] %v186, 128
      %2299 = vxpose.xlu0.b32.cont [2/16] 0.0, 128
      %2300 = vxpose.xlu0.b32.cont [3/16] 0.0, 128
      %2301 = vxpose.xlu0.b32.cont [4/16] 0.0, 128
      %2302 = vxpose.xlu0.b32.cont [5/16] 0.0, 128
      %2303 = vxpose.xlu0.b32.cont [6/16] 0.0, 128
      %2304 = vxpose.xlu0.b32.cont [7/16] 0.0, 128
      %2305 = vxpose.xlu0.b32.cont [8/16] 0.0, 128
      %2306 = vxpose.xlu0.b32.cont [9/16] 0.0, 128
      %2307 = vxpose.xlu0.b32.cont [10/16] 0.0, 128
      %2308 = vxpose.xlu0.b32.cont [11/16] 0.0, 128
      %2309 = vxpose.xlu0.b32.cont [12/16] 0.0, 128
      %2310 = vxpose.xlu0.b32.cont [13/16] 0.0, 128
      %2311 = vxpose.xlu0.b32.cont [14/16] 0.0, 128
      %2312 = vxpose.xlu0.b32.cont [15/16] 0.0, 128
      %2313 = vxpose.xlu0.b32.end [16/16] 0.0, 128
      %v2314 = vpop.trf.xlu0
      %v2315 = vpop.trf.xlu0
      %v2316 = vpop.trf.xlu0
      %v2317 = vpop.trf.xlu0
      %v2318 = vpop.trf.xlu0
      %v2319 = vpop.trf.xlu0
      %v2320 = vpop.trf.xlu0
      %v2321 = vpop.trf.xlu0
      %v2322 = vpop.trf.xlu0
      %v2323 = vpop.trf.xlu0
      %v2324 = vpop.trf.xlu0
      %v2325 = vpop.trf.xlu0
      %v2326 = vpop.trf.xlu0
      %v2327 = vpop.trf.xlu0
      %v2328 = vpop.trf.xlu0
      %v2329 = vpop.trf.xlu0
      %2330 = vxpose.xlu0.b32.start [1/16] %v187, 128
      %2331 = vxpose.xlu0.b32.cont [2/16] 0.0, 128
      %2332 = vxpose.xlu0.b32.cont [3/16] 0.0, 128
      %2333 = vxpose.xlu0.b32.cont [4/16] 0.0, 128
      %2334 = vxpose.xlu0.b32.cont [5/16] 0.0, 128
      %2335 = vxpose.xlu0.b32.cont [6/16] 0.0, 128
      %2336 = vxpose.xlu0.b32.cont [7/16] 0.0, 128
      %2337 = vxpose.xlu0.b32.cont [8/16] 0.0, 128
      %2338 = vxpose.xlu0.b32.cont [9/16] 0.0, 128
      %2339 = vxpose.xlu0.b32.cont [10/16] 0.0, 128
      %2340 = vxpose.xlu0.b32.cont [11/16] 0.0, 128
      %2341 = vxpose.xlu0.b32.cont [12/16] 0.0, 128
      %2342 = vxpose.xlu0.b32.cont [13/16] 0.0, 128
      %2343 = vxpose.xlu0.b32.cont [14/16] 0.0, 128
      %2344 = vxpose.xlu0.b32.cont [15/16] 0.0, 128
      %2345 = vxpose.xlu0.b32.end [16/16] 0.0, 128
      %v2346 = vpop.trf.xlu0
      %v2347 = vpop.trf.xlu0
      %v2348 = vpop.trf.xlu0
      %v2349 = vpop.trf.xlu0
      %v2350 = vpop.trf.xlu0
      %v2351 = vpop.trf.xlu0
      %v2352 = vpop.trf.xlu0
      %v2353 = vpop.trf.xlu0
      %v2354 = vpop.trf.xlu0
      %v2355 = vpop.trf.xlu0
      %v2356 = vpop.trf.xlu0
      %v2357 = vpop.trf.xlu0
      %v2358 = vpop.trf.xlu0
      %v2359 = vpop.trf.xlu0
      %v2360 = vpop.trf.xlu0
      %v2361 = vpop.trf.xlu0
      %2362 = vxpose.xlu0.b32.start [1/16] %v188, 128
      %2363 = vxpose.xlu0.b32.cont [2/16] 0.0, 128
      %2364 = vxpose.xlu0.b32.cont [3/16] 0.0, 128
      %2365 = vxpose.xlu0.b32.cont [4/16] 0.0, 128
      %2366 = vxpose.xlu0.b32.cont [5/16] 0.0, 128
      %2367 = vxpose.xlu0.b32.cont [6/16] 0.0, 128
      %2368 = vxpose.xlu0.b32.cont [7/16] 0.0, 128
      %2369 = vxpose.xlu0.b32.cont [8/16] 0.0, 128
      %2370 = vxpose.xlu0.b32.cont [9/16] 0.0, 128
      %2371 = vxpose.xlu0.b32.cont [10/16] 0.0, 128
      %2372 = vxpose.xlu0.b32.cont [11/16] 0.0, 128
      %2373 = vxpose.xlu0.b32.cont [12/16] 0.0, 128
      %2374 = vxpose.xlu0.b32.cont [13/16] 0.0, 128
      %2375 = vxpose.xlu0.b32.cont [14/16] 0.0, 128
      %2376 = vxpose.xlu0.b32.cont [15/16] 0.0, 128
      %2377 = vxpose.xlu0.b32.end [16/16] 0.0, 128
      %v2378 = vpop.trf.xlu0
      %v2379 = vpop.trf.xlu0
      %v2380 = vpop.trf.xlu0
      %v2381 = vpop.trf.xlu0
      %v2382 = vpop.trf.xlu0
      %v2383 = vpop.trf.xlu0
      %v2384 = vpop.trf.xlu0
      %v2385 = vpop.trf.xlu0
      %v2386 = vpop.trf.xlu0
      %v2387 = vpop.trf.xlu0
      %v2388 = vpop.trf.xlu0
      %v2389 = vpop.trf.xlu0
      %v2390 = vpop.trf.xlu0
      %v2391 = vpop.trf.xlu0
      %v2392 = vpop.trf.xlu0
      %v2393 = vpop.trf.xlu0
      %2394 = vxpose.xlu0.b32.start [1/16] %v189, 128
      %2395 = vxpose.xlu0.b32.cont [2/16] 0.0, 128
      %2396 = vxpose.xlu0.b32.cont [3/16] 0.0, 128
      %2397 = vxpose.xlu0.b32.cont [4/16] 0.0, 128
      %2398 = vxpose.xlu0.b32.cont [5/16] 0.0, 128
      %2399 = vxpose.xlu0.b32.cont [6/16] 0.0, 128
      %2400 = vxpose.xlu0.b32.cont [7/16] 0.0, 128
      %2401 = vxpose.xlu0.b32.cont [8/16] 0.0, 128
      %2402 = vxpose.xlu0.b32.cont [9/16] 0.0, 128
      %2403 = vxpose.xlu0.b32.cont [10/16] 0.0, 128
      %2404 = vxpose.xlu0.b32.cont [11/16] 0.0, 128
      %2405 = vxpose.xlu0.b32.cont [12/16] 0.0, 128
      %2406 = vxpose.xlu0.b32.cont [13/16] 0.0, 128
      %2407 = vxpose.xlu0.b32.cont [14/16] 0.0, 128
      %2408 = vxpose.xlu0.b32.cont [15/16] 0.0, 128
      %2409 = vxpose.xlu0.b32.end [16/16] 0.0, 128
      %v2410 = vpop.trf.xlu0
      %v2411 = vpop.trf.xlu0
      %v2412 = vpop.trf.xlu0
      %v2413 = vpop.trf.xlu0
      %v2414 = vpop.trf.xlu0
      %v2415 = vpop.trf.xlu0
      %v2416 = vpop.trf.xlu0
      %v2417 = vpop.trf.xlu0
      %v2418 = vpop.trf.xlu0
      %v2419 = vpop.trf.xlu0
      %v2420 = vpop.trf.xlu0
      %v2421 = vpop.trf.xlu0
      %v2422 = vpop.trf.xlu0
      %v2423 = vpop.trf.xlu0
      %v2424 = vpop.trf.xlu0
      %v2425 = vpop.trf.xlu0
      %2426 = vxpose.xlu0.b32.start [1/16] %v190, 128
      %2427 = vxpose.xlu0.b32.cont [2/16] 0.0, 128
      %2428 = vxpose.xlu0.b32.cont [3/16] 0.0, 128
      %2429 = vxpose.xlu0.b32.cont [4/16] 0.0, 128
      %2430 = vxpose.xlu0.b32.cont [5/16] 0.0, 128
      %2431 = vxpose.xlu0.b32.cont [6/16] 0.0, 128
      %2432 = vxpose.xlu0.b32.cont [7/16] 0.0, 128
      %2433 = vxpose.xlu0.b32.cont [8/16] 0.0, 128
      %2434 = vxpose.xlu0.b32.cont [9/16] 0.0, 128
      %2435 = vxpose.xlu0.b32.cont [10/16] 0.0, 128
      %2436 = vxpose.xlu0.b32.cont [11/16] 0.0, 128
      %2437 = vxpose.xlu0.b32.cont [12/16] 0.0, 128
      %2438 = vxpose.xlu0.b32.cont [13/16] 0.0, 128
      %2439 = vxpose.xlu0.b32.cont [14/16] 0.0, 128
      %2440 = vxpose.xlu0.b32.cont [15/16] 0.0, 128
      %2441 = vxpose.xlu0.b32.end [16/16] 0.0, 128
      %v2442 = vpop.trf.xlu0
      %v2443 = vpop.trf.xlu0
      %v2444 = vpop.trf.xlu0
      %v2445 = vpop.trf.xlu0
      %v2446 = vpop.trf.xlu0
      %v2447 = vpop.trf.xlu0
      %v2448 = vpop.trf.xlu0
      %v2449 = vpop.trf.xlu0
      %v2450 = vpop.trf.xlu0
      %v2451 = vpop.trf.xlu0
      %v2452 = vpop.trf.xlu0
      %v2453 = vpop.trf.xlu0
      %v2454 = vpop.trf.xlu0
      %v2455 = vpop.trf.xlu0
      %v2456 = vpop.trf.xlu0
      %v2457 = vpop.trf.xlu0
      %2458 = vxpose.xlu0.b32.start [1/16] %v191, 128
      %2459 = vxpose.xlu0.b32.cont [2/16] 0.0, 128
      %2460 = vxpose.xlu0.b32.cont [3/16] 0.0, 128
      %2461 = vxpose.xlu0.b32.cont [4/16] 0.0, 128
      %2462 = vxpose.xlu0.b32.cont [5/16] 0.0, 128
      %2463 = vxpose.xlu0.b32.cont [6/16] 0.0, 128
      %2464 = vxpose.xlu0.b32.cont [7/16] 0.0, 128
      %2465 = vxpose.xlu0.b32.cont [8/16] 0.0, 128
      %2466 = vxpose.xlu0.b32.cont [9/16] 0.0, 128
      %2467 = vxpose.xlu0.b32.cont [10/16] 0.0, 128
      %2468 = vxpose.xlu0.b32.cont [11/16] 0.0, 128
      %2469 = vxpose.xlu0.b32.cont [12/16] 0.0, 128
      %2470 = vxpose.xlu0.b32.cont [13/16] 0.0, 128
      %2471 = vxpose.xlu0.b32.cont [14/16] 0.0, 128
      %2472 = vxpose.xlu0.b32.cont [15/16] 0.0, 128
      %2473 = vxpose.xlu0.b32.end [16/16] 0.0, 128
      %v2474 = vpop.trf.xlu0
      %v2475 = vpop.trf.xlu0
      %v2476 = vpop.trf.xlu0
      %v2477 = vpop.trf.xlu0
      %v2478 = vpop.trf.xlu0
      %v2479 = vpop.trf.xlu0
      %v2480 = vpop.trf.xlu0
      %v2481 = vpop.trf.xlu0
      %v2482 = vpop.trf.xlu0
      %v2483 = vpop.trf.xlu0
      %v2484 = vpop.trf.xlu0
      %v2485 = vpop.trf.xlu0
      %v2486 = vpop.trf.xlu0
      %v2487 = vpop.trf.xlu0
      %v2488 = vpop.trf.xlu0
      %v2489 = vpop.trf.xlu0
      %2490 = vxpose.xlu0.b32.start [1/16] %v192, 128
      %2491 = vxpose.xlu0.b32.cont [2/16] 0.0, 128
      %2492 = vxpose.xlu0.b32.cont [3/16] 0.0, 128
      %2493 = vxpose.xlu0.b32.cont [4/16] 0.0, 128
      %2494 = vxpose.xlu0.b32.cont [5/16] 0.0, 128
      %2495 = vxpose.xlu0.b32.cont [6/16] 0.0, 128
      %2496 = vxpose.xlu0.b32.cont [7/16] 0.0, 128
      %2497 = vxpose.xlu0.b32.cont [8/16] 0.0, 128
      %2498 = vxpose.xlu0.b32.cont [9/16] 0.0, 128
      %2499 = vxpose.xlu0.b32.cont [10/16] 0.0, 128
      %2500 = vxpose.xlu0.b32.cont [11/16] 0.0, 128
      %2501 = vxpose.xlu0.b32.cont [12/16] 0.0, 128
      %2502 = vxpose.xlu0.b32.cont [13/16] 0.0, 128
      %2503 = vxpose.xlu0.b32.cont [14/16] 0.0, 128
      %2504 = vxpose.xlu0.b32.cont [15/16] 0.0, 128
      %2505 = vxpose.xlu0.b32.end [16/16] 0.0, 128
      %v2506 = vpop.trf.xlu0
      %v2507 = vpop.trf.xlu0
      %v2508 = vpop.trf.xlu0
      %v2509 = vpop.trf.xlu0
      %v2510 = vpop.trf.xlu0
      %v2511 = vpop.trf.xlu0
      %v2512 = vpop.trf.xlu0
      %v2513 = vpop.trf.xlu0
      %v2514 = vpop.trf.xlu0
      %v2515 = vpop.trf.xlu0
      %v2516 = vpop.trf.xlu0
      %v2517 = vpop.trf.xlu0
      %v2518 = vpop.trf.xlu0
      %v2519 = vpop.trf.xlu0
      %v2520 = vpop.trf.xlu0
      %v2521 = vpop.trf.xlu0
      %2522 = vxpose.xlu0.b32.start [1/16] %v193, 128
      %2523 = vxpose.xlu0.b32.cont [2/16] 0.0, 128
      %2524 = vxpose.xlu0.b32.cont [3/16] 0.0, 128
      %2525 = vxpose.xlu0.b32.cont [4/16] 0.0, 128
      %2526 = vxpose.xlu0.b32.cont [5/16] 0.0, 128
      %2527 = vxpose.xlu0.b32.cont [6/16] 0.0, 128
      %2528 = vxpose.xlu0.b32.cont [7/16] 0.0, 128
      %2529 = vxpose.xlu0.b32.cont [8/16] 0.0, 128
      %2530 = vxpose.xlu0.b32.cont [9/16] 0.0, 128
      %2531 = vxpose.xlu0.b32.cont [10/16] 0.0, 128
      %2532 = vxpose.xlu0.b32.cont [11/16] 0.0, 128
      %2533 = vxpose.xlu0.b32.cont [12/16] 0.0, 128
      %2534 = vxpose.xlu0.b32.cont [13/16] 0.0, 128
      %2535 = vxpose.xlu0.b32.cont [14/16] 0.0, 128
      %2536 = vxpose.xlu0.b32.cont [15/16] 0.0, 128
      %2537 = vxpose.xlu0.b32.end [16/16] 0.0, 128
      %v2538 = vpop.trf.xlu0
      %v2539 = vpop.trf.xlu0
      %v2540 = vpop.trf.xlu0
      %v2541 = vpop.trf.xlu0
      %v2542 = vpop.trf.xlu0
      %v2543 = vpop.trf.xlu0
      %v2544 = vpop.trf.xlu0
      %v2545 = vpop.trf.xlu0
      %v2546 = vpop.trf.xlu0
      %v2547 = vpop.trf.xlu0
      %v2548 = vpop.trf.xlu0
      %v2549 = vpop.trf.xlu0
      %v2550 = vpop.trf.xlu0
      %v2551 = vpop.trf.xlu0
      %v2552 = vpop.trf.xlu0
      %v2553 = vpop.trf.xlu0
      %2554 = vxpose.xlu0.b32.start [1/16] %v194, 128
      %2555 = vxpose.xlu0.b32.cont [2/16] 0.0, 128
      %2556 = vxpose.xlu0.b32.cont [3/16] 0.0, 128
      %2557 = vxpose.xlu0.b32.cont [4/16] 0.0, 128
      %2558 = vxpose.xlu0.b32.cont [5/16] 0.0, 128
      %2559 = vxpose.xlu0.b32.cont [6/16] 0.0, 128
      %2560 = vxpose.xlu0.b32.cont [7/16] 0.0, 128
      %2561 = vxpose.xlu0.b32.cont [8/16] 0.0, 128
      %2562 = vxpose.xlu0.b32.cont [9/16] 0.0, 128
      %2563 = vxpose.xlu0.b32.cont [10/16] 0.0, 128
      %2564 = vxpose.xlu0.b32.cont [11/16] 0.0, 128
      %2565 = vxpose.xlu0.b32.cont [12/16] 0.0, 128
      %2566 = vxpose.xlu0.b32.cont [13/16] 0.0, 128
      %2567 = vxpose.xlu0.b32.cont [14/16] 0.0, 128
      %2568 = vxpose.xlu0.b32.cont [15/16] 0.0, 128
      %2569 = vxpose.xlu0.b32.end [16/16] 0.0, 128
      %v2570 = vpop.trf.xlu0
      %v2571 = vpop.trf.xlu0
      %v2572 = vpop.trf.xlu0
      %v2573 = vpop.trf.xlu0
      %v2574 = vpop.trf.xlu0
      %v2575 = vpop.trf.xlu0
      %v2576 = vpop.trf.xlu0
      %v2577 = vpop.trf.xlu0
      %v2578 = vpop.trf.xlu0
      %v2579 = vpop.trf.xlu0
      %v2580 = vpop.trf.xlu0
      %v2581 = vpop.trf.xlu0
      %v2582 = vpop.trf.xlu0
      %v2583 = vpop.trf.xlu0
      %v2584 = vpop.trf.xlu0
      %v2585 = vpop.trf.xlu0
      %2586 = vxpose.xlu0.b32.start [1/16] %v195, 128
      %2587 = vxpose.xlu0.b32.cont [2/16] 0.0, 128
      %2588 = vxpose.xlu0.b32.cont [3/16] 0.0, 128
      %2589 = vxpose.xlu0.b32.cont [4/16] 0.0, 128
      %2590 = vxpose.xlu0.b32.cont [5/16] 0.0, 128
      %2591 = vxpose.xlu0.b32.cont [6/16] 0.0, 128
      %2592 = vxpose.xlu0.b32.cont [7/16] 0.0, 128
      %2593 = vxpose.xlu0.b32.cont [8/16] 0.0, 128
      %2594 = vxpose.xlu0.b32.cont [9/16] 0.0, 128
      %2595 = vxpose.xlu0.b32.cont [10/16] 0.0, 128
      %2596 = vxpose.xlu0.b32.cont [11/16] 0.0, 128
      %2597 = vxpose.xlu0.b32.cont [12/16] 0.0, 128
      %2598 = vxpose.xlu0.b32.cont [13/16] 0.0, 128
      %2599 = vxpose.xlu0.b32.cont [14/16] 0.0, 128
      %2600 = vxpose.xlu0.b32.cont [15/16] 0.0, 128
      %2601 = vxpose.xlu0.b32.end [16/16] 0.0, 128
      %v2602 = vpop.trf.xlu0
      %v2603 = vpop.trf.xlu0
      %v2604 = vpop.trf.xlu0
      %v2605 = vpop.trf.xlu0
      %v2606 = vpop.trf.xlu0
      %v2607 = vpop.trf.xlu0
      %v2608 = vpop.trf.xlu0
      %v2609 = vpop.trf.xlu0
      %v2610 = vpop.trf.xlu0
      %v2611 = vpop.trf.xlu0
      %v2612 = vpop.trf.xlu0
      %v2613 = vpop.trf.xlu0
      %v2614 = vpop.trf.xlu0
      %v2615 = vpop.trf.xlu0
      %v2616 = vpop.trf.xlu0
      %v2617 = vpop.trf.xlu0
      %2618 = vxpose.xlu0.b32.start [1/16] %v196, 128
      %2619 = vxpose.xlu0.b32.cont [2/16] 0.0, 128
      %2620 = vxpose.xlu0.b32.cont [3/16] 0.0, 128
      %2621 = vxpose.xlu0.b32.cont [4/16] 0.0, 128
      %2622 = vxpose.xlu0.b32.cont [5/16] 0.0, 128
      %2623 = vxpose.xlu0.b32.cont [6/16] 0.0, 128
      %2624 = vxpose.xlu0.b32.cont [7/16] 0.0, 128
      %2625 = vxpose.xlu0.b32.cont [8/16] 0.0, 128
      %2626 = vxpose.xlu0.b32.cont [9/16] 0.0, 128
      %2627 = vxpose.xlu0.b32.cont [10/16] 0.0, 128
      %2628 = vxpose.xlu0.b32.cont [11/16] 0.0, 128
      %2629 = vxpose.xlu0.b32.cont [12/16] 0.0, 128
      %2630 = vxpose.xlu0.b32.cont [13/16] 0.0, 128
      %2631 = vxpose.xlu0.b32.cont [14/16] 0.0, 128
      %2632 = vxpose.xlu0.b32.cont [15/16] 0.0, 128
      %2633 = vxpose.xlu0.b32.end [16/16] 0.0, 128
      %v2634 = vpop.trf.xlu0
      %v2635 = vpop.trf.xlu0
      %v2636 = vpop.trf.xlu0
      %v2637 = vpop.trf.xlu0
      %v2638 = vpop.trf.xlu0
      %v2639 = vpop.trf.xlu0
      %v2640 = vpop.trf.xlu0
      %v2641 = vpop.trf.xlu0
      %v2642 = vpop.trf.xlu0
      %v2643 = vpop.trf.xlu0
      %v2644 = vpop.trf.xlu0
      %v2645 = vpop.trf.xlu0
      %v2646 = vpop.trf.xlu0
      %v2647 = vpop.trf.xlu0
      %v2648 = vpop.trf.xlu0
      %v2649 = vpop.trf.xlu0
      %2650 = vxpose.xlu0.b32.start [1/16] %v197, 128
      %2651 = vxpose.xlu0.b32.cont [2/16] 0.0, 128
      %2652 = vxpose.xlu0.b32.cont [3/16] 0.0, 128
      %2653 = vxpose.xlu0.b32.cont [4/16] 0.0, 128
      %2654 = vxpose.xlu0.b32.cont [5/16] 0.0, 128
      %2655 = vxpose.xlu0.b32.cont [6/16] 0.0, 128
      %2656 = vxpose.xlu0.b32.cont [7/16] 0.0, 128
      %2657 = vxpose.xlu0.b32.cont [8/16] 0.0, 128
      %2658 = vxpose.xlu0.b32.cont [9/16] 0.0, 128
      %2659 = vxpose.xlu0.b32.cont [10/16] 0.0, 128
      %2660 = vxpose.xlu0.b32.cont [11/16] 0.0, 128
      %2661 = vxpose.xlu0.b32.cont [12/16] 0.0, 128
      %2662 = vxpose.xlu0.b32.cont [13/16] 0.0, 128
      %2663 = vxpose.xlu0.b32.cont [14/16] 0.0, 128
      %2664 = vxpose.xlu0.b32.cont [15/16] 0.0, 128
      %2665 = vxpose.xlu0.b32.end [16/16] 0.0, 128
      %v2666 = vpop.trf.xlu0
      %v2667 = vpop.trf.xlu0
      %v2668 = vpop.trf.xlu0
      %v2669 = vpop.trf.xlu0
      %v2670 = vpop.trf.xlu0
      %v2671 = vpop.trf.xlu0
      %v2672 = vpop.trf.xlu0
      %v2673 = vpop.trf.xlu0
      %v2674 = vpop.trf.xlu0
      %v2675 = vpop.trf.xlu0
      %v2676 = vpop.trf.xlu0
      %v2677 = vpop.trf.xlu0
      %v2678 = vpop.trf.xlu0
      %v2679 = vpop.trf.xlu0
      %v2680 = vpop.trf.xlu0
      %v2681 = vpop.trf.xlu0
      %2682 = vxpose.xlu0.b32.start [1/16] %v198, 128
      %2683 = vxpose.xlu0.b32.cont [2/16] 0.0, 128
      %2684 = vxpose.xlu0.b32.cont [3/16] 0.0, 128
      %2685 = vxpose.xlu0.b32.cont [4/16] 0.0, 128
      %2686 = vxpose.xlu0.b32.cont [5/16] 0.0, 128
      %2687 = vxpose.xlu0.b32.cont [6/16] 0.0, 128
      %2688 = vxpose.xlu0.b32.cont [7/16] 0.0, 128
      %2689 = vxpose.xlu0.b32.cont [8/16] 0.0, 128
      %2690 = vxpose.xlu0.b32.cont [9/16] 0.0, 128
      %2691 = vxpose.xlu0.b32.cont [10/16] 0.0, 128
      %2692 = vxpose.xlu0.b32.cont [11/16] 0.0, 128
      %2693 = vxpose.xlu0.b32.cont [12/16] 0.0, 128
      %2694 = vxpose.xlu0.b32.cont [13/16] 0.0, 128
      %2695 = vxpose.xlu0.b32.cont [14/16] 0.0, 128
      %2696 = vxpose.xlu0.b32.cont [15/16] 0.0, 128
      %2697 = vxpose.xlu0.b32.end [16/16] 0.0, 128
      %v2698 = vpop.trf.xlu0
      %v2699 = vpop.trf.xlu0
      %v2700 = vpop.trf.xlu0
      %v2701 = vpop.trf.xlu0
      %v2702 = vpop.trf.xlu0
      %v2703 = vpop.trf.xlu0
      %v2704 = vpop.trf.xlu0
      %v2705 = vpop.trf.xlu0
      %v2706 = vpop.trf.xlu0
      %v2707 = vpop.trf.xlu0
      %v2708 = vpop.trf.xlu0
      %v2709 = vpop.trf.xlu0
      %v2710 = vpop.trf.xlu0
      %v2711 = vpop.trf.xlu0
      %v2712 = vpop.trf.xlu0
      %v2713 = vpop.trf.xlu0
      %2714 = vxpose.xlu0.b32.start [1/16] %v199, 128
      %2715 = vxpose.xlu0.b32.cont [2/16] 0.0, 128
      %2716 = vxpose.xlu0.b32.cont [3/16] 0.0, 128
      %2717 = vxpose.xlu0.b32.cont [4/16] 0.0, 128
      %2718 = vxpose.xlu0.b32.cont [5/16] 0.0, 128
      %2719 = vxpose.xlu0.b32.cont [6/16] 0.0, 128
      %2720 = vxpose.xlu0.b32.cont [7/16] 0.0, 128
      %2721 = vxpose.xlu0.b32.cont [8/16] 0.0, 128
      %2722 = vxpose.xlu0.b32.cont [9/16] 0.0, 128
      %2723 = vxpose.xlu0.b32.cont [10/16] 0.0, 128
      %2724 = vxpose.xlu0.b32.cont [11/16] 0.0, 128
      %2725 = vxpose.xlu0.b32.cont [12/16] 0.0, 128
      %2726 = vxpose.xlu0.b32.cont [13/16] 0.0, 128
      %2727 = vxpose.xlu0.b32.cont [14/16] 0.0, 128
      %2728 = vxpose.xlu0.b32.cont [15/16] 0.0, 128
      %2729 = vxpose.xlu0.b32.end [16/16] 0.0, 128
      %v2730 = vpop.trf.xlu0
      %v2731 = vpop.trf.xlu0
      %v2732 = vpop.trf.xlu0
      %v2733 = vpop.trf.xlu0
      %v2734 = vpop.trf.xlu0
      %v2735 = vpop.trf.xlu0
      %v2736 = vpop.trf.xlu0
      %v2737 = vpop.trf.xlu0
      %v2738 = vpop.trf.xlu0
      %v2739 = vpop.trf.xlu0
      %v2740 = vpop.trf.xlu0
      %v2741 = vpop.trf.xlu0
      %v2742 = vpop.trf.xlu0
      %v2743 = vpop.trf.xlu0
      %v2744 = vpop.trf.xlu0
      %v2745 = vpop.trf.xlu0
      %2746 = vxpose.xlu0.b32.start [1/16] %v200, 128
      %2747 = vxpose.xlu0.b32.cont [2/16] 0.0, 128
      %2748 = vxpose.xlu0.b32.cont [3/16] 0.0, 128
      %2749 = vxpose.xlu0.b32.cont [4/16] 0.0, 128
      %2750 = vxpose.xlu0.b32.cont [5/16] 0.0, 128
      %2751 = vxpose.xlu0.b32.cont [6/16] 0.0, 128
      %2752 = vxpose.xlu0.b32.cont [7/16] 0.0, 128
      %2753 = vxpose.xlu0.b32.cont [8/16] 0.0, 128
      %2754 = vxpose.xlu0.b32.cont [9/16] 0.0, 128
      %2755 = vxpose.xlu0.b32.cont [10/16] 0.0, 128
      %2756 = vxpose.xlu0.b32.cont [11/16] 0.0, 128
      %2757 = vxpose.xlu0.b32.cont [12/16] 0.0, 128
      %2758 = vxpose.xlu0.b32.cont [13/16] 0.0, 128
      %2759 = vxpose.xlu0.b32.cont [14/16] 0.0, 128
      %2760 = vxpose.xlu0.b32.cont [15/16] 0.0, 128
      %2761 = vxpose.xlu0.b32.end [16/16] 0.0, 128
      %v2762 = vpop.trf.xlu0
      %v2763 = vpop.trf.xlu0
      %v2764 = vpop.trf.xlu0
      %v2765 = vpop.trf.xlu0
      %v2766 = vpop.trf.xlu0
      %v2767 = vpop.trf.xlu0
      %v2768 = vpop.trf.xlu0
      %v2769 = vpop.trf.xlu0
      %v2770 = vpop.trf.xlu0
      %v2771 = vpop.trf.xlu0
      %v2772 = vpop.trf.xlu0
      %v2773 = vpop.trf.xlu0
      %v2774 = vpop.trf.xlu0
      %v2775 = vpop.trf.xlu0
      %v2776 = vpop.trf.xlu0
      %v2777 = vpop.trf.xlu0
      %2778 = vxpose.xlu0.b32.start [1/16] %v201, 128
      %2779 = vxpose.xlu0.b32.cont [2/16] 0.0, 128
      %2780 = vxpose.xlu0.b32.cont [3/16] 0.0, 128
      %2781 = vxpose.xlu0.b32.cont [4/16] 0.0, 128
      %2782 = vxpose.xlu0.b32.cont [5/16] 0.0, 128
      %2783 = vxpose.xlu0.b32.cont [6/16] 0.0, 128
      %2784 = vxpose.xlu0.b32.cont [7/16] 0.0, 128
      %2785 = vxpose.xlu0.b32.cont [8/16] 0.0, 128
      %2786 = vxpose.xlu0.b32.cont [9/16] 0.0, 128
      %2787 = vxpose.xlu0.b32.cont [10/16] 0.0, 128
      %2788 = vxpose.xlu0.b32.cont [11/16] 0.0, 128
      %2789 = vxpose.xlu0.b32.cont [12/16] 0.0, 128
      %2790 = vxpose.xlu0.b32.cont [13/16] 0.0, 128
      %2791 = vxpose.xlu0.b32.cont [14/16] 0.0, 128
      %2792 = vxpose.xlu0.b32.cont [15/16] 0.0, 128
      %2793 = vxpose.xlu0.b32.end [16/16] 0.0, 128
      %v2794 = vpop.trf.xlu0
      %v2795 = vpop.trf.xlu0
      %v2796 = vpop.trf.xlu0
      %v2797 = vpop.trf.xlu0
      %v2798 = vpop.trf.xlu0
      %v2799 = vpop.trf.xlu0
      %v2800 = vpop.trf.xlu0
      %v2801 = vpop.trf.xlu0
      %v2802 = vpop.trf.xlu0
      %v2803 = vpop.trf.xlu0
      %v2804 = vpop.trf.xlu0
      %v2805 = vpop.trf.xlu0
      %v2806 = vpop.trf.xlu0
      %v2807 = vpop.trf.xlu0
      %v2808 = vpop.trf.xlu0
      %v2809 = vpop.trf.xlu0
      %2810 = vxpose.xlu0.b32.start [1/16] %v202, 128
      %2811 = vxpose.xlu0.b32.cont [2/16] 0.0, 128
      %2812 = vxpose.xlu0.b32.cont [3/16] 0.0, 128
      %2813 = vxpose.xlu0.b32.cont [4/16] 0.0, 128
      %2814 = vxpose.xlu0.b32.cont [5/16] 0.0, 128
      %2815 = vxpose.xlu0.b32.cont [6/16] 0.0, 128
      %2816 = vxpose.xlu0.b32.cont [7/16] 0.0, 128
      %2817 = vxpose.xlu0.b32.cont [8/16] 0.0, 128
      %2818 = vxpose.xlu0.b32.cont [9/16] 0.0, 128
      %2819 = vxpose.xlu0.b32.cont [10/16] 0.0, 128
      %2820 = vxpose.xlu0.b32.cont [11/16] 0.0, 128
      %2821 = vxpose.xlu0.b32.cont [12/16] 0.0, 128
      %2822 = vxpose.xlu0.b32.cont [13/16] 0.0, 128
      %2823 = vxpose.xlu0.b32.cont [14/16] 0.0, 128
      %2824 = vxpose.xlu0.b32.cont [15/16] 0.0, 128
      %2825 = vxpose.xlu0.b32.end [16/16] 0.0, 128
      %v2826 = vpop.trf.xlu0
      %v2827 = vpop.trf.xlu0
      %v2828 = vpop.trf.xlu0
      %v2829 = vpop.trf.xlu0
      %v2830 = vpop.trf.xlu0
      %v2831 = vpop.trf.xlu0
      %v2832 = vpop.trf.xlu0
      %v2833 = vpop.trf.xlu0
      %v2834 = vpop.trf.xlu0
      %v2835 = vpop.trf.xlu0
      %v2836 = vpop.trf.xlu0
      %v2837 = vpop.trf.xlu0
      %v2838 = vpop.trf.xlu0
      %v2839 = vpop.trf.xlu0
      %v2840 = vpop.trf.xlu0
      %v2841 = vpop.trf.xlu0
      %2842 = vxpose.xlu0.b32.start [1/16] %v203, 128
      %2843 = vxpose.xlu0.b32.cont [2/16] 0.0, 128
      %2844 = vxpose.xlu0.b32.cont [3/16] 0.0, 128
      %2845 = vxpose.xlu0.b32.cont [4/16] 0.0, 128
      %2846 = vxpose.xlu0.b32.cont [5/16] 0.0, 128
      %2847 = vxpose.xlu0.b32.cont [6/16] 0.0, 128
      %2848 = vxpose.xlu0.b32.cont [7/16] 0.0, 128
      %2849 = vxpose.xlu0.b32.cont [8/16] 0.0, 128
      %2850 = vxpose.xlu0.b32.cont [9/16] 0.0, 128
      %2851 = vxpose.xlu0.b32.cont [10/16] 0.0, 128
      %2852 = vxpose.xlu0.b32.cont [11/16] 0.0, 128
      %2853 = vxpose.xlu0.b32.cont [12/16] 0.0, 128
      %2854 = vxpose.xlu0.b32.cont [13/16] 0.0, 128
      %2855 = vxpose.xlu0.b32.cont [14/16] 0.0, 128
      %2856 = vxpose.xlu0.b32.cont [15/16] 0.0, 128
      %2857 = vxpose.xlu0.b32.end [16/16] 0.0, 128
      %v2858 = vpop.trf.xlu0
      %v2859 = vpop.trf.xlu0
      %v2860 = vpop.trf.xlu0
      %v2861 = vpop.trf.xlu0
      %v2862 = vpop.trf.xlu0
      %v2863 = vpop.trf.xlu0
      %v2864 = vpop.trf.xlu0
      %v2865 = vpop.trf.xlu0
      %v2866 = vpop.trf.xlu0
      %v2867 = vpop.trf.xlu0
      %v2868 = vpop.trf.xlu0
      %v2869 = vpop.trf.xlu0
      %v2870 = vpop.trf.xlu0
      %v2871 = vpop.trf.xlu0
      %v2872 = vpop.trf.xlu0
      %v2873 = vpop.trf.xlu0
      %2874 = vxpose.xlu0.b32.start [1/16] %v204, 128
      %2875 = vxpose.xlu0.b32.cont [2/16] 0.0, 128
      %2876 = vxpose.xlu0.b32.cont [3/16] 0.0, 128
      %2877 = vxpose.xlu0.b32.cont [4/16] 0.0, 128
      %2878 = vxpose.xlu0.b32.cont [5/16] 0.0, 128
      %2879 = vxpose.xlu0.b32.cont [6/16] 0.0, 128
      %2880 = vxpose.xlu0.b32.cont [7/16] 0.0, 128
      %2881 = vxpose.xlu0.b32.cont [8/16] 0.0, 128
      %2882 = vxpose.xlu0.b32.cont [9/16] 0.0, 128
      %2883 = vxpose.xlu0.b32.cont [10/16] 0.0, 128
      %2884 = vxpose.xlu0.b32.cont [11/16] 0.0, 128
      %2885 = vxpose.xlu0.b32.cont [12/16] 0.0, 128
      %2886 = vxpose.xlu0.b32.cont [13/16] 0.0, 128
      %2887 = vxpose.xlu0.b32.cont [14/16] 0.0, 128
      %2888 = vxpose.xlu0.b32.cont [15/16] 0.0, 128
      %2889 = vxpose.xlu0.b32.end [16/16] 0.0, 128
      %v2890 = vpop.trf.xlu0
      %v2891 = vpop.trf.xlu0
      %v2892 = vpop.trf.xlu0
      %v2893 = vpop.trf.xlu0
      %v2894 = vpop.trf.xlu0
      %v2895 = vpop.trf.xlu0
      %v2896 = vpop.trf.xlu0
      %v2897 = vpop.trf.xlu0
      %v2898 = vpop.trf.xlu0
      %v2899 = vpop.trf.xlu0
      %v2900 = vpop.trf.xlu0
      %v2901 = vpop.trf.xlu0
      %v2902 = vpop.trf.xlu0
      %v2903 = vpop.trf.xlu0
      %v2904 = vpop.trf.xlu0
      %v2905 = vpop.trf.xlu0
      %2906 = vxpose.xlu0.b32.start [1/16] %v205, 128
      %2907 = vxpose.xlu0.b32.cont [2/16] 0.0, 128
      %2908 = vxpose.xlu0.b32.cont [3/16] 0.0, 128
      %2909 = vxpose.xlu0.b32.cont [4/16] 0.0, 128
      %2910 = vxpose.xlu0.b32.cont [5/16] 0.0, 128
      %2911 = vxpose.xlu0.b32.cont [6/16] 0.0, 128
      %2912 = vxpose.xlu0.b32.cont [7/16] 0.0, 128
      %2913 = vxpose.xlu0.b32.cont [8/16] 0.0, 128
      %2914 = vxpose.xlu0.b32.cont [9/16] 0.0, 128
      %2915 = vxpose.xlu0.b32.cont [10/16] 0.0, 128
      %2916 = vxpose.xlu0.b32.cont [11/16] 0.0, 128
      %2917 = vxpose.xlu0.b32.cont [12/16] 0.0, 128
      %2918 = vxpose.xlu0.b32.cont [13/16] 0.0, 128
      %2919 = vxpose.xlu0.b32.cont [14/16] 0.0, 128
      %2920 = vxpose.xlu0.b32.cont [15/16] 0.0, 128
      %2921 = vxpose.xlu0.b32.end [16/16] 0.0, 128
      %v2922 = vpop.trf.xlu0
      %v2923 = vpop.trf.xlu0
      %v2924 = vpop.trf.xlu0
      %v2925 = vpop.trf.xlu0
      %v2926 = vpop.trf.xlu0
      %v2927 = vpop.trf.xlu0
      %v2928 = vpop.trf.xlu0
      %v2929 = vpop.trf.xlu0
      %v2930 = vpop.trf.xlu0
      %v2931 = vpop.trf.xlu0
      %v2932 = vpop.trf.xlu0
      %v2933 = vpop.trf.xlu0
      %v2934 = vpop.trf.xlu0
      %v2935 = vpop.trf.xlu0
      %v2936 = vpop.trf.xlu0
      %v2937 = vpop.trf.xlu0
      %2938 = vxpose.xlu0.b32.start [1/16] %v206, 128
      %2939 = vxpose.xlu0.b32.cont [2/16] 0.0, 128
      %2940 = vxpose.xlu0.b32.cont [3/16] 0.0, 128
      %2941 = vxpose.xlu0.b32.cont [4/16] 0.0, 128
      %2942 = vxpose.xlu0.b32.cont [5/16] 0.0, 128
      %2943 = vxpose.xlu0.b32.cont [6/16] 0.0, 128
      %2944 = vxpose.xlu0.b32.cont [7/16] 0.0, 128
      %2945 = vxpose.xlu0.b32.cont [8/16] 0.0, 128
      %2946 = vxpose.xlu0.b32.cont [9/16] 0.0, 128
      %2947 = vxpose.xlu0.b32.cont [10/16] 0.0, 128
      %2948 = vxpose.xlu0.b32.cont [11/16] 0.0, 128
      %2949 = vxpose.xlu0.b32.cont [12/16] 0.0, 128
      %2950 = vxpose.xlu0.b32.cont [13/16] 0.0, 128
      %2951 = vxpose.xlu0.b32.cont [14/16] 0.0, 128
      %2952 = vxpose.xlu0.b32.cont [15/16] 0.0, 128
      %2953 = vxpose.xlu0.b32.end [16/16] 0.0, 128
      %v2954 = vpop.trf.xlu0
      %v2955 = vpop.trf.xlu0
      %v2956 = vpop.trf.xlu0
      %v2957 = vpop.trf.xlu0
      %v2958 = vpop.trf.xlu0
      %v2959 = vpop.trf.xlu0
      %v2960 = vpop.trf.xlu0
      %v2961 = vpop.trf.xlu0
      %v2962 = vpop.trf.xlu0
      %v2963 = vpop.trf.xlu0
      %v2964 = vpop.trf.xlu0
      %v2965 = vpop.trf.xlu0
      %v2966 = vpop.trf.xlu0
      %v2967 = vpop.trf.xlu0
      %v2968 = vpop.trf.xlu0
      %v2969 = vpop.trf.xlu0
      %2970 = vxpose.xlu0.b32.start [1/16] %v207, 128
      %2971 = vxpose.xlu0.b32.cont [2/16] 0.0, 128
      %2972 = vxpose.xlu0.b32.cont [3/16] 0.0, 128
      %2973 = vxpose.xlu0.b32.cont [4/16] 0.0, 128
      %2974 = vxpose.xlu0.b32.cont [5/16] 0.0, 128
      %2975 = vxpose.xlu0.b32.cont [6/16] 0.0, 128
      %2976 = vxpose.xlu0.b32.cont [7/16] 0.0, 128
      %2977 = vxpose.xlu0.b32.cont [8/16] 0.0, 128
      %2978 = vxpose.xlu0.b32.cont [9/16] 0.0, 128
      %2979 = vxpose.xlu0.b32.cont [10/16] 0.0, 128
      %2980 = vxpose.xlu0.b32.cont [11/16] 0.0, 128
      %2981 = vxpose.xlu0.b32.cont [12/16] 0.0, 128
      %2982 = vxpose.xlu0.b32.cont [13/16] 0.0, 128
      %2983 = vxpose.xlu0.b32.cont [14/16] 0.0, 128
      %2984 = vxpose.xlu0.b32.cont [15/16] 0.0, 128
      %2985 = vxpose.xlu0.b32.end [16/16] 0.0, 128
      %v2986 = vpop.trf.xlu0
      %v2987 = vpop.trf.xlu0
      %v2988 = vpop.trf.xlu0
      %v2989 = vpop.trf.xlu0
      %v2990 = vpop.trf.xlu0
      %v2991 = vpop.trf.xlu0
      %v2992 = vpop.trf.xlu0
      %v2993 = vpop.trf.xlu0
      %v2994 = vpop.trf.xlu0
      %v2995 = vpop.trf.xlu0
      %v2996 = vpop.trf.xlu0
      %v2997 = vpop.trf.xlu0
      %v2998 = vpop.trf.xlu0
      %v2999 = vpop.trf.xlu0
      %v3000 = vpop.trf.xlu0
      %v3001 = vpop.trf.xlu0
      %3002 = vxpose.xlu0.b32.start [1/16] %v208, 128
      %3003 = vxpose.xlu0.b32.cont [2/16] 0.0, 128
      %3004 = vxpose.xlu0.b32.cont [3/16] 0.0, 128
      %3005 = vxpose.xlu0.b32.cont [4/16] 0.0, 128
      %3006 = vxpose.xlu0.b32.cont [5/16] 0.0, 128
      %3007 = vxpose.xlu0.b32.cont [6/16] 0.0, 128
      %3008 = vxpose.xlu0.b32.cont [7/16] 0.0, 128
      %3009 = vxpose.xlu0.b32.cont [8/16] 0.0, 128
      %3010 = vxpose.xlu0.b32.cont [9/16] 0.0, 128
      %3011 = vxpose.xlu0.b32.cont [10/16] 0.0, 128
      %3012 = vxpose.xlu0.b32.cont [11/16] 0.0, 128
      %3013 = vxpose.xlu0.b32.cont [12/16] 0.0, 128
      %3014 = vxpose.xlu0.b32.cont [13/16] 0.0, 128
      %3015 = vxpose.xlu0.b32.cont [14/16] 0.0, 128
      %3016 = vxpose.xlu0.b32.cont [15/16] 0.0, 128
      %3017 = vxpose.xlu0.b32.end [16/16] 0.0, 128
      %v3018 = vpop.trf.xlu0
      %v3019 = vpop.trf.xlu0
      %v3020 = vpop.trf.xlu0
      %v3021 = vpop.trf.xlu0
      %v3022 = vpop.trf.xlu0
      %v3023 = vpop.trf.xlu0
      %v3024 = vpop.trf.xlu0
      %v3025 = vpop.trf.xlu0
      %v3026 = vpop.trf.xlu0
      %v3027 = vpop.trf.xlu0
      %v3028 = vpop.trf.xlu0
      %v3029 = vpop.trf.xlu0
      %v3030 = vpop.trf.xlu0
      %v3031 = vpop.trf.xlu0
      %v3032 = vpop.trf.xlu0
      %v3033 = vpop.trf.xlu0
      %3034 = vxpose.xlu0.b32.start [1/16] %v209, 128
      %3035 = vxpose.xlu0.b32.cont [2/16] 0.0, 128
      %3036 = vxpose.xlu0.b32.cont [3/16] 0.0, 128
      %3037 = vxpose.xlu0.b32.cont [4/16] 0.0, 128
      %3038 = vxpose.xlu0.b32.cont [5/16] 0.0, 128
      %3039 = vxpose.xlu0.b32.cont [6/16] 0.0, 128
      %3040 = vxpose.xlu0.b32.cont [7/16] 0.0, 128
      %3041 = vxpose.xlu0.b32.cont [8/16] 0.0, 128
      %3042 = vxpose.xlu0.b32.cont [9/16] 0.0, 128
      %3043 = vxpose.xlu0.b32.cont [10/16] 0.0, 128
      %3044 = vxpose.xlu0.b32.cont [11/16] 0.0, 128
      %3045 = vxpose.xlu0.b32.cont [12/16] 0.0, 128
      %3046 = vxpose.xlu0.b32.cont [13/16] 0.0, 128
      %3047 = vxpose.xlu0.b32.cont [14/16] 0.0, 128
      %3048 = vxpose.xlu0.b32.cont [15/16] 0.0, 128
      %3049 = vxpose.xlu0.b32.end [16/16] 0.0, 128
      %v3050 = vpop.trf.xlu0
      %v3051 = vpop.trf.xlu0
      %v3052 = vpop.trf.xlu0
      %v3053 = vpop.trf.xlu0
      %v3054 = vpop.trf.xlu0
      %v3055 = vpop.trf.xlu0
      %v3056 = vpop.trf.xlu0
      %v3057 = vpop.trf.xlu0
      %v3058 = vpop.trf.xlu0
      %v3059 = vpop.trf.xlu0
      %v3060 = vpop.trf.xlu0
      %v3061 = vpop.trf.xlu0
      %v3062 = vpop.trf.xlu0
      %v3063 = vpop.trf.xlu0
      %v3064 = vpop.trf.xlu0
      %v3065 = vpop.trf.xlu0
      %3066 = vxpose.xlu0.b32.start [1/16] %v210, 128
      %3067 = vxpose.xlu0.b32.cont [2/16] 0.0, 128
      %3068 = vxpose.xlu0.b32.cont [3/16] 0.0, 128
      %3069 = vxpose.xlu0.b32.cont [4/16] 0.0, 128
      %3070 = vxpose.xlu0.b32.cont [5/16] 0.0, 128
      %3071 = vxpose.xlu0.b32.cont [6/16] 0.0, 128
      %3072 = vxpose.xlu0.b32.cont [7/16] 0.0, 128
      %3073 = vxpose.xlu0.b32.cont [8/16] 0.0, 128
      %3074 = vxpose.xlu0.b32.cont [9/16] 0.0, 128
      %3075 = vxpose.xlu0.b32.cont [10/16] 0.0, 128
      %3076 = vxpose.xlu0.b32.cont [11/16] 0.0, 128
      %3077 = vxpose.xlu0.b32.cont [12/16] 0.0, 128
      %3078 = vxpose.xlu0.b32.cont [13/16] 0.0, 128
      %3079 = vxpose.xlu0.b32.cont [14/16] 0.0, 128
      %3080 = vxpose.xlu0.b32.cont [15/16] 0.0, 128
      %3081 = vxpose.xlu0.b32.end [16/16] 0.0, 128
      %v3082 = vpop.trf.xlu0
      %v3083 = vpop.trf.xlu0
      %v3084 = vpop.trf.xlu0
      %v3085 = vpop.trf.xlu0
      %v3086 = vpop.trf.xlu0
      %v3087 = vpop.trf.xlu0
      %v3088 = vpop.trf.xlu0
      %v3089 = vpop.trf.xlu0
      %v3090 = vpop.trf.xlu0
      %v3091 = vpop.trf.xlu0
      %v3092 = vpop.trf.xlu0
      %v3093 = vpop.trf.xlu0
      %v3094 = vpop.trf.xlu0
      %v3095 = vpop.trf.xlu0
      %v3096 = vpop.trf.xlu0
      %v3097 = vpop.trf.xlu0
      %3098 = vxpose.xlu0.b32.start [1/16] %v211, 128
      %3099 = vxpose.xlu0.b32.cont [2/16] 0.0, 128
      %3100 = vxpose.xlu0.b32.cont [3/16] 0.0, 128
      %3101 = vxpose.xlu0.b32.cont [4/16] 0.0, 128
      %3102 = vxpose.xlu0.b32.cont [5/16] 0.0, 128
      %3103 = vxpose.xlu0.b32.cont [6/16] 0.0, 128
      %3104 = vxpose.xlu0.b32.cont [7/16] 0.0, 128
      %3105 = vxpose.xlu0.b32.cont [8/16] 0.0, 128
      %3106 = vxpose.xlu0.b32.cont [9/16] 0.0, 128
      %3107 = vxpose.xlu0.b32.cont [10/16] 0.0, 128
      %3108 = vxpose.xlu0.b32.cont [11/16] 0.0, 128
      %3109 = vxpose.xlu0.b32.cont [12/16] 0.0, 128
      %3110 = vxpose.xlu0.b32.cont [13/16] 0.0, 128
      %3111 = vxpose.xlu0.b32.cont [14/16] 0.0, 128
      %3112 = vxpose.xlu0.b32.cont [15/16] 0.0, 128
      %3113 = vxpose.xlu0.b32.end [16/16] 0.0, 128
      %v3114 = vpop.trf.xlu0
      %v3115 = vpop.trf.xlu0
      %v3116 = vpop.trf.xlu0
      %v3117 = vpop.trf.xlu0
      %v3118 = vpop.trf.xlu0
      %v3119 = vpop.trf.xlu0
      %v3120 = vpop.trf.xlu0
      %v3121 = vpop.trf.xlu0
      %v3122 = vpop.trf.xlu0
      %v3123 = vpop.trf.xlu0
      %v3124 = vpop.trf.xlu0
      %v3125 = vpop.trf.xlu0
      %v3126 = vpop.trf.xlu0
      %v3127 = vpop.trf.xlu0
      %v3128 = vpop.trf.xlu0
      %v3129 = vpop.trf.xlu0
      %3130 = vxpose.xlu0.b32.start [1/16] %v212, 128
      %3131 = vxpose.xlu0.b32.cont [2/16] 0.0, 128
      %3132 = vxpose.xlu0.b32.cont [3/16] 0.0, 128
      %3133 = vxpose.xlu0.b32.cont [4/16] 0.0, 128
      %3134 = vxpose.xlu0.b32.cont [5/16] 0.0, 128
      %3135 = vxpose.xlu0.b32.cont [6/16] 0.0, 128
      %3136 = vxpose.xlu0.b32.cont [7/16] 0.0, 128
      %3137 = vxpose.xlu0.b32.cont [8/16] 0.0, 128
      %3138 = vxpose.xlu0.b32.cont [9/16] 0.0, 128
      %3139 = vxpose.xlu0.b32.cont [10/16] 0.0, 128
      %3140 = vxpose.xlu0.b32.cont [11/16] 0.0, 128
      %3141 = vxpose.xlu0.b32.cont [12/16] 0.0, 128
      %3142 = vxpose.xlu0.b32.cont [13/16] 0.0, 128
      %3143 = vxpose.xlu0.b32.cont [14/16] 0.0, 128
      %3144 = vxpose.xlu0.b32.cont [15/16] 0.0, 128
      %3145 = vxpose.xlu0.b32.end [16/16] 0.0, 128
      %v3146 = vpop.trf.xlu0
      %v3147 = vpop.trf.xlu0
      %v3148 = vpop.trf.xlu0
      %v3149 = vpop.trf.xlu0
      %v3150 = vpop.trf.xlu0
      %v3151 = vpop.trf.xlu0
      %v3152 = vpop.trf.xlu0
      %v3153 = vpop.trf.xlu0
      %v3154 = vpop.trf.xlu0
      %v3155 = vpop.trf.xlu0
      %v3156 = vpop.trf.xlu0
      %v3157 = vpop.trf.xlu0
      %v3158 = vpop.trf.xlu0
      %v3159 = vpop.trf.xlu0
      %v3160 = vpop.trf.xlu0
      %v3161 = vpop.trf.xlu0
      %3162 = vxpose.xlu0.b32.start [1/16] %v213, 128
      %3163 = vxpose.xlu0.b32.cont [2/16] 0.0, 128
      %3164 = vxpose.xlu0.b32.cont [3/16] 0.0, 128
      %3165 = vxpose.xlu0.b32.cont [4/16] 0.0, 128
      %3166 = vxpose.xlu0.b32.cont [5/16] 0.0, 128
      %3167 = vxpose.xlu0.b32.cont [6/16] 0.0, 128
      %3168 = vxpose.xlu0.b32.cont [7/16] 0.0, 128
      %3169 = vxpose.xlu0.b32.cont [8/16] 0.0, 128
      %3170 = vxpose.xlu0.b32.cont [9/16] 0.0, 128
      %3171 = vxpose.xlu0.b32.cont [10/16] 0.0, 128
      %3172 = vxpose.xlu0.b32.cont [11/16] 0.0, 128
      %3173 = vxpose.xlu0.b32.cont [12/16] 0.0, 128
      %3174 = vxpose.xlu0.b32.cont [13/16] 0.0, 128
      %3175 = vxpose.xlu0.b32.cont [14/16] 0.0, 128
      %3176 = vxpose.xlu0.b32.cont [15/16] 0.0, 128
      %3177 = vxpose.xlu0.b32.end [16/16] 0.0, 128
      %v3178 = vpop.trf.xlu0
      %v3179 = vpop.trf.xlu0
      %v3180 = vpop.trf.xlu0
      %v3181 = vpop.trf.xlu0
      %v3182 = vpop.trf.xlu0
      %v3183 = vpop.trf.xlu0
      %v3184 = vpop.trf.xlu0
      %v3185 = vpop.trf.xlu0
      %v3186 = vpop.trf.xlu0
      %v3187 = vpop.trf.xlu0
      %v3188 = vpop.trf.xlu0
      %v3189 = vpop.trf.xlu0
      %v3190 = vpop.trf.xlu0
      %v3191 = vpop.trf.xlu0
      %v3192 = vpop.trf.xlu0
      %v3193 = vpop.trf.xlu0
      %3194 = vxpose.xlu0.b32.start [1/16] %v214, 128
      %3195 = vxpose.xlu0.b32.cont [2/16] 0.0, 128
      %3196 = vxpose.xlu0.b32.cont [3/16] 0.0, 128
      %3197 = vxpose.xlu0.b32.cont [4/16] 0.0, 128
      %3198 = vxpose.xlu0.b32.cont [5/16] 0.0, 128
      %3199 = vxpose.xlu0.b32.cont [6/16] 0.0, 128
      %3200 = vxpose.xlu0.b32.cont [7/16] 0.0, 128
      %3201 = vxpose.xlu0.b32.cont [8/16] 0.0, 128
      %3202 = vxpose.xlu0.b32.cont [9/16] 0.0, 128
      %3203 = vxpose.xlu0.b32.cont [10/16] 0.0, 128
      %3204 = vxpose.xlu0.b32.cont [11/16] 0.0, 128
      %3205 = vxpose.xlu0.b32.cont [12/16] 0.0, 128
      %3206 = vxpose.xlu0.b32.cont [13/16] 0.0, 128
      %3207 = vxpose.xlu0.b32.cont [14/16] 0.0, 128
      %3208 = vxpose.xlu0.b32.cont [15/16] 0.0, 128
      %3209 = vxpose.xlu0.b32.end [16/16] 0.0, 128
      %v3210 = vpop.trf.xlu0
      %v3211 = vpop.trf.xlu0
      %v3212 = vpop.trf.xlu0
      %v3213 = vpop.trf.xlu0
      %v3214 = vpop.trf.xlu0
      %v3215 = vpop.trf.xlu0
      %v3216 = vpop.trf.xlu0
      %v3217 = vpop.trf.xlu0
      %v3218 = vpop.trf.xlu0
      %v3219 = vpop.trf.xlu0
      %v3220 = vpop.trf.xlu0
      %v3221 = vpop.trf.xlu0
      %v3222 = vpop.trf.xlu0
      %v3223 = vpop.trf.xlu0
      %v3224 = vpop.trf.xlu0
      %v3225 = vpop.trf.xlu0
      %3226 = vxpose.xlu0.b32.start [1/16] %v215, 128
      %3227 = vxpose.xlu0.b32.cont [2/16] 0.0, 128
      %3228 = vxpose.xlu0.b32.cont [3/16] 0.0, 128
      %3229 = vxpose.xlu0.b32.cont [4/16] 0.0, 128
      %3230 = vxpose.xlu0.b32.cont [5/16] 0.0, 128
      %3231 = vxpose.xlu0.b32.cont [6/16] 0.0, 128
      %3232 = vxpose.xlu0.b32.cont [7/16] 0.0, 128
      %3233 = vxpose.xlu0.b32.cont [8/16] 0.0, 128
      %3234 = vxpose.xlu0.b32.cont [9/16] 0.0, 128
      %3235 = vxpose.xlu0.b32.cont [10/16] 0.0, 128
      %3236 = vxpose.xlu0.b32.cont [11/16] 0.0, 128
      %3237 = vxpose.xlu0.b32.cont [12/16] 0.0, 128
      %3238 = vxpose.xlu0.b32.cont [13/16] 0.0, 128
      %3239 = vxpose.xlu0.b32.cont [14/16] 0.0, 128
      %3240 = vxpose.xlu0.b32.cont [15/16] 0.0, 128
      %3241 = vxpose.xlu0.b32.end [16/16] 0.0, 128
      %v3242 = vpop.trf.xlu0
      %v3243 = vpop.trf.xlu0
      %v3244 = vpop.trf.xlu0
      %v3245 = vpop.trf.xlu0
      %v3246 = vpop.trf.xlu0
      %v3247 = vpop.trf.xlu0
      %v3248 = vpop.trf.xlu0
      %v3249 = vpop.trf.xlu0
      %v3250 = vpop.trf.xlu0
      %v3251 = vpop.trf.xlu0
      %v3252 = vpop.trf.xlu0
      %v3253 = vpop.trf.xlu0
      %v3254 = vpop.trf.xlu0
      %v3255 = vpop.trf.xlu0
      %v3256 = vpop.trf.xlu0
      %v3257 = vpop.trf.xlu0
      %3258 = vxpose.xlu0.b32.start [1/16] %v216, 128
      %3259 = vxpose.xlu0.b32.cont [2/16] 0.0, 128
      %3260 = vxpose.xlu0.b32.cont [3/16] 0.0, 128
      %3261 = vxpose.xlu0.b32.cont [4/16] 0.0, 128
      %3262 = vxpose.xlu0.b32.cont [5/16] 0.0, 128
      %3263 = vxpose.xlu0.b32.cont [6/16] 0.0, 128
      %3264 = vxpose.xlu0.b32.cont [7/16] 0.0, 128
      %3265 = vxpose.xlu0.b32.cont [8/16] 0.0, 128
      %3266 = vxpose.xlu0.b32.cont [9/16] 0.0, 128
      %3267 = vxpose.xlu0.b32.cont [10/16] 0.0, 128
      %3268 = vxpose.xlu0.b32.cont [11/16] 0.0, 128
      %3269 = vxpose.xlu0.b32.cont [12/16] 0.0, 128
      %3270 = vxpose.xlu0.b32.cont [13/16] 0.0, 128
      %3271 = vxpose.xlu0.b32.cont [14/16] 0.0, 128
      %3272 = vxpose.xlu0.b32.cont [15/16] 0.0, 128
      %3273 = vxpose.xlu0.b32.end [16/16] 0.0, 128
      %v3274 = vpop.trf.xlu0
      %v3275 = vpop.trf.xlu0
      %v3276 = vpop.trf.xlu0
      %v3277 = vpop.trf.xlu0
      %v3278 = vpop.trf.xlu0
      %v3279 = vpop.trf.xlu0
      %v3280 = vpop.trf.xlu0
      %v3281 = vpop.trf.xlu0
      %v3282 = vpop.trf.xlu0
      %v3283 = vpop.trf.xlu0
      %v3284 = vpop.trf.xlu0
      %v3285 = vpop.trf.xlu0
      %v3286 = vpop.trf.xlu0
      %v3287 = vpop.trf.xlu0
      %v3288 = vpop.trf.xlu0
      %v3289 = vpop.trf.xlu0
      %3290 = vxpose.xlu0.b32.start [1/16] %v217, 128
      %3291 = vxpose.xlu0.b32.cont [2/16] 0.0, 128
      %3292 = vxpose.xlu0.b32.cont [3/16] 0.0, 128
      %3293 = vxpose.xlu0.b32.cont [4/16] 0.0, 128
      %3294 = vxpose.xlu0.b32.cont [5/16] 0.0, 128
      %3295 = vxpose.xlu0.b32.cont [6/16] 0.0, 128
      %3296 = vxpose.xlu0.b32.cont [7/16] 0.0, 128
      %3297 = vxpose.xlu0.b32.cont [8/16] 0.0, 128
      %3298 = vxpose.xlu0.b32.cont [9/16] 0.0, 128
      %3299 = vxpose.xlu0.b32.cont [10/16] 0.0, 128
      %3300 = vxpose.xlu0.b32.cont [11/16] 0.0, 128
      %3301 = vxpose.xlu0.b32.cont [12/16] 0.0, 128
      %3302 = vxpose.xlu0.b32.cont [13/16] 0.0, 128
      %3303 = vxpose.xlu0.b32.cont [14/16] 0.0, 128
      %3304 = vxpose.xlu0.b32.cont [15/16] 0.0, 128
      %3305 = vxpose.xlu0.b32.end [16/16] 0.0, 128
      %v3306 = vpop.trf.xlu0
      %v3307 = vpop.trf.xlu0
      %v3308 = vpop.trf.xlu0
      %v3309 = vpop.trf.xlu0
      %v3310 = vpop.trf.xlu0
      %v3311 = vpop.trf.xlu0
      %v3312 = vpop.trf.xlu0
      %v3313 = vpop.trf.xlu0
      %v3314 = vpop.trf.xlu0
      %v3315 = vpop.trf.xlu0
      %v3316 = vpop.trf.xlu0
      %v3317 = vpop.trf.xlu0
      %v3318 = vpop.trf.xlu0
      %v3319 = vpop.trf.xlu0
      %v3320 = vpop.trf.xlu0
      %v3321 = vpop.trf.xlu0
      %3322 = vxpose.xlu0.b32.start [1/16] %v218, 128
      %3323 = vxpose.xlu0.b32.cont [2/16] 0.0, 128
      %3324 = vxpose.xlu0.b32.cont [3/16] 0.0, 128
      %3325 = vxpose.xlu0.b32.cont [4/16] 0.0, 128
      %3326 = vxpose.xlu0.b32.cont [5/16] 0.0, 128
      %3327 = vxpose.xlu0.b32.cont [6/16] 0.0, 128
      %3328 = vxpose.xlu0.b32.cont [7/16] 0.0, 128
      %3329 = vxpose.xlu0.b32.cont [8/16] 0.0, 128
      %3330 = vxpose.xlu0.b32.cont [9/16] 0.0, 128
      %3331 = vxpose.xlu0.b32.cont [10/16] 0.0, 128
      %3332 = vxpose.xlu0.b32.cont [11/16] 0.0, 128
      %3333 = vxpose.xlu0.b32.cont [12/16] 0.0, 128
      %3334 = vxpose.xlu0.b32.cont [13/16] 0.0, 128
      %3335 = vxpose.xlu0.b32.cont [14/16] 0.0, 128
      %3336 = vxpose.xlu0.b32.cont [15/16] 0.0, 128
      %3337 = vxpose.xlu0.b32.end [16/16] 0.0, 128
      %v3338 = vpop.trf.xlu0
      %v3339 = vpop.trf.xlu0
      %v3340 = vpop.trf.xlu0
      %v3341 = vpop.trf.xlu0
      %v3342 = vpop.trf.xlu0
      %v3343 = vpop.trf.xlu0
      %v3344 = vpop.trf.xlu0
      %v3345 = vpop.trf.xlu0
      %v3346 = vpop.trf.xlu0
      %v3347 = vpop.trf.xlu0
      %v3348 = vpop.trf.xlu0
      %v3349 = vpop.trf.xlu0
      %v3350 = vpop.trf.xlu0
      %v3351 = vpop.trf.xlu0
      %v3352 = vpop.trf.xlu0
      %v3353 = vpop.trf.xlu0
      %3354 = vxpose.xlu0.b32.start [1/16] %v219, 128
      %3355 = vxpose.xlu0.b32.cont [2/16] 0.0, 128
      %3356 = vxpose.xlu0.b32.cont [3/16] 0.0, 128
      %3357 = vxpose.xlu0.b32.cont [4/16] 0.0, 128
      %3358 = vxpose.xlu0.b32.cont [5/16] 0.0, 128
      %3359 = vxpose.xlu0.b32.cont [6/16] 0.0, 128
      %3360 = vxpose.xlu0.b32.cont [7/16] 0.0, 128
      %3361 = vxpose.xlu0.b32.cont [8/16] 0.0, 128
      %3362 = vxpose.xlu0.b32.cont [9/16] 0.0, 128
      %3363 = vxpose.xlu0.b32.cont [10/16] 0.0, 128
      %3364 = vxpose.xlu0.b32.cont [11/16] 0.0, 128
      %3365 = vxpose.xlu0.b32.cont [12/16] 0.0, 128
      %3366 = vxpose.xlu0.b32.cont [13/16] 0.0, 128
      %3367 = vxpose.xlu0.b32.cont [14/16] 0.0, 128
      %3368 = vxpose.xlu0.b32.cont [15/16] 0.0, 128
      %3369 = vxpose.xlu0.b32.end [16/16] 0.0, 128
      %v3370 = vpop.trf.xlu0
      %v3371 = vpop.trf.xlu0
      %v3372 = vpop.trf.xlu0
      %v3373 = vpop.trf.xlu0
      %v3374 = vpop.trf.xlu0
      %v3375 = vpop.trf.xlu0
      %v3376 = vpop.trf.xlu0
      %v3377 = vpop.trf.xlu0
      %v3378 = vpop.trf.xlu0
      %v3379 = vpop.trf.xlu0
      %v3380 = vpop.trf.xlu0
      %v3381 = vpop.trf.xlu0
      %v3382 = vpop.trf.xlu0
      %v3383 = vpop.trf.xlu0
      %v3384 = vpop.trf.xlu0
      %v3385 = vpop.trf.xlu0
      %3386 = vxpose.xlu0.b32.start [1/16] %v220, 128
      %3387 = vxpose.xlu0.b32.cont [2/16] 0.0, 128
      %3388 = vxpose.xlu0.b32.cont [3/16] 0.0, 128
      %3389 = vxpose.xlu0.b32.cont [4/16] 0.0, 128
      %3390 = vxpose.xlu0.b32.cont [5/16] 0.0, 128
      %3391 = vxpose.xlu0.b32.cont [6/16] 0.0, 128
      %3392 = vxpose.xlu0.b32.cont [7/16] 0.0, 128
      %3393 = vxpose.xlu0.b32.cont [8/16] 0.0, 128
      %3394 = vxpose.xlu0.b32.cont [9/16] 0.0, 128
      %3395 = vxpose.xlu0.b32.cont [10/16] 0.0, 128
      %3396 = vxpose.xlu0.b32.cont [11/16] 0.0, 128
      %3397 = vxpose.xlu0.b32.cont [12/16] 0.0, 128
      %3398 = vxpose.xlu0.b32.cont [13/16] 0.0, 128
      %3399 = vxpose.xlu0.b32.cont [14/16] 0.0, 128
      %3400 = vxpose.xlu0.b32.cont [15/16] 0.0, 128
      %3401 = vxpose.xlu0.b32.end [16/16] 0.0, 128
      %v3402 = vpop.trf.xlu0
      %v3403 = vpop.trf.xlu0
      %v3404 = vpop.trf.xlu0
      %v3405 = vpop.trf.xlu0
      %v3406 = vpop.trf.xlu0
      %v3407 = vpop.trf.xlu0
      %v3408 = vpop.trf.xlu0
      %v3409 = vpop.trf.xlu0
      %v3410 = vpop.trf.xlu0
      %v3411 = vpop.trf.xlu0
      %v3412 = vpop.trf.xlu0
      %v3413 = vpop.trf.xlu0
      %v3414 = vpop.trf.xlu0
      %v3415 = vpop.trf.xlu0
      %v3416 = vpop.trf.xlu0
      %v3417 = vpop.trf.xlu0
      %3418 = vxpose.xlu0.b32.start [1/16] %v221, 128
      %3419 = vxpose.xlu0.b32.cont [2/16] 0.0, 128
      %3420 = vxpose.xlu0.b32.cont [3/16] 0.0, 128
      %3421 = vxpose.xlu0.b32.cont [4/16] 0.0, 128
      %3422 = vxpose.xlu0.b32.cont [5/16] 0.0, 128
      %3423 = vxpose.xlu0.b32.cont [6/16] 0.0, 128
      %3424 = vxpose.xlu0.b32.cont [7/16] 0.0, 128
      %3425 = vxpose.xlu0.b32.cont [8/16] 0.0, 128
      %3426 = vxpose.xlu0.b32.cont [9/16] 0.0, 128
      %3427 = vxpose.xlu0.b32.cont [10/16] 0.0, 128
      %3428 = vxpose.xlu0.b32.cont [11/16] 0.0, 128
      %3429 = vxpose.xlu0.b32.cont [12/16] 0.0, 128
      %3430 = vxpose.xlu0.b32.cont [13/16] 0.0, 128
      %3431 = vxpose.xlu0.b32.cont [14/16] 0.0, 128
      %3432 = vxpose.xlu0.b32.cont [15/16] 0.0, 128
      %3433 = vxpose.xlu0.b32.end [16/16] 0.0, 128
      %v3434 = vpop.trf.xlu0
      %v3435 = vpop.trf.xlu0
      %v3436 = vpop.trf.xlu0
      %v3437 = vpop.trf.xlu0
      %v3438 = vpop.trf.xlu0
      %v3439 = vpop.trf.xlu0
      %v3440 = vpop.trf.xlu0
      %v3441 = vpop.trf.xlu0
      %v3442 = vpop.trf.xlu0
      %v3443 = vpop.trf.xlu0
      %v3444 = vpop.trf.xlu0
      %v3445 = vpop.trf.xlu0
      %v3446 = vpop.trf.xlu0
      %v3447 = vpop.trf.xlu0
      %v3448 = vpop.trf.xlu0
      %v3449 = vpop.trf.xlu0
      %3450 = vxpose.xlu0.b32.start [1/16] %v222, 128
      %3451 = vxpose.xlu0.b32.cont [2/16] 0.0, 128
      %3452 = vxpose.xlu0.b32.cont [3/16] 0.0, 128
      %3453 = vxpose.xlu0.b32.cont [4/16] 0.0, 128
      %3454 = vxpose.xlu0.b32.cont [5/16] 0.0, 128
      %3455 = vxpose.xlu0.b32.cont [6/16] 0.0, 128
      %3456 = vxpose.xlu0.b32.cont [7/16] 0.0, 128
      %3457 = vxpose.xlu0.b32.cont [8/16] 0.0, 128
      %3458 = vxpose.xlu0.b32.cont [9/16] 0.0, 128
      %3459 = vxpose.xlu0.b32.cont [10/16] 0.0, 128
      %3460 = vxpose.xlu0.b32.cont [11/16] 0.0, 128
      %3461 = vxpose.xlu0.b32.cont [12/16] 0.0, 128
      %3462 = vxpose.xlu0.b32.cont [13/16] 0.0, 128
      %3463 = vxpose.xlu0.b32.cont [14/16] 0.0, 128
      %3464 = vxpose.xlu0.b32.cont [15/16] 0.0, 128
      %3465 = vxpose.xlu0.b32.end [16/16] 0.0, 128
      %v3466 = vpop.trf.xlu0
      %v3467 = vpop.trf.xlu0
      %v3468 = vpop.trf.xlu0
      %v3469 = vpop.trf.xlu0
      %v3470 = vpop.trf.xlu0
      %v3471 = vpop.trf.xlu0
      %v3472 = vpop.trf.xlu0
      %v3473 = vpop.trf.xlu0
      %v3474 = vpop.trf.xlu0
      %v3475 = vpop.trf.xlu0
      %v3476 = vpop.trf.xlu0
      %v3477 = vpop.trf.xlu0
      %v3478 = vpop.trf.xlu0
      %v3479 = vpop.trf.xlu0
      %v3480 = vpop.trf.xlu0
      %v3481 = vpop.trf.xlu0
      %3482 = vxpose.xlu0.b32.start [1/16] %v223, 128
      %3483 = vxpose.xlu0.b32.cont [2/16] 0.0, 128
      %3484 = vxpose.xlu0.b32.cont [3/16] 0.0, 128
      %3485 = vxpose.xlu0.b32.cont [4/16] 0.0, 128
      %3486 = vxpose.xlu0.b32.cont [5/16] 0.0, 128
      %3487 = vxpose.xlu0.b32.cont [6/16] 0.0, 128
      %3488 = vxpose.xlu0.b32.cont [7/16] 0.0, 128
      %3489 = vxpose.xlu0.b32.cont [8/16] 0.0, 128
      %3490 = vxpose.xlu0.b32.cont [9/16] 0.0, 128
      %3491 = vxpose.xlu0.b32.cont [10/16] 0.0, 128
      %3492 = vxpose.xlu0.b32.cont [11/16] 0.0, 128
      %3493 = vxpose.xlu0.b32.cont [12/16] 0.0, 128
      %3494 = vxpose.xlu0.b32.cont [13/16] 0.0, 128
      %3495 = vxpose.xlu0.b32.cont [14/16] 0.0, 128
      %3496 = vxpose.xlu0.b32.cont [15/16] 0.0, 128
      %3497 = vxpose.xlu0.b32.end [16/16] 0.0, 128
      %v3498 = vpop.trf.xlu0
      %v3499 = vpop.trf.xlu0
      %v3500 = vpop.trf.xlu0
      %v3501 = vpop.trf.xlu0
      %v3502 = vpop.trf.xlu0
      %v3503 = vpop.trf.xlu0
      %v3504 = vpop.trf.xlu0
      %v3505 = vpop.trf.xlu0
      %v3506 = vpop.trf.xlu0
      %v3507 = vpop.trf.xlu0
      %v3508 = vpop.trf.xlu0
      %v3509 = vpop.trf.xlu0
      %v3510 = vpop.trf.xlu0
      %v3511 = vpop.trf.xlu0
      %v3512 = vpop.trf.xlu0
      %v3513 = vpop.trf.xlu0
      %3514 = vxpose.xlu0.b32.start [1/16] %v224, 128
      %3515 = vxpose.xlu0.b32.cont [2/16] 0.0, 128
      %3516 = vxpose.xlu0.b32.cont [3/16] 0.0, 128
      %3517 = vxpose.xlu0.b32.cont [4/16] 0.0, 128
      %3518 = vxpose.xlu0.b32.cont [5/16] 0.0, 128
      %3519 = vxpose.xlu0.b32.cont [6/16] 0.0, 128
      %3520 = vxpose.xlu0.b32.cont [7/16] 0.0, 128
      %3521 = vxpose.xlu0.b32.cont [8/16] 0.0, 128
      %3522 = vxpose.xlu0.b32.cont [9/16] 0.0, 128
      %3523 = vxpose.xlu0.b32.cont [10/16] 0.0, 128
      %3524 = vxpose.xlu0.b32.cont [11/16] 0.0, 128
      %3525 = vxpose.xlu0.b32.cont [12/16] 0.0, 128
      %3526 = vxpose.xlu0.b32.cont [13/16] 0.0, 128
      %3527 = vxpose.xlu0.b32.cont [14/16] 0.0, 128
      %3528 = vxpose.xlu0.b32.cont [15/16] 0.0, 128
      %3529 = vxpose.xlu0.b32.end [16/16] 0.0, 128
      %v3530 = vpop.trf.xlu0
      %v3531 = vpop.trf.xlu0
      %v3532 = vpop.trf.xlu0
      %v3533 = vpop.trf.xlu0
      %v3534 = vpop.trf.xlu0
      %v3535 = vpop.trf.xlu0
      %v3536 = vpop.trf.xlu0
      %v3537 = vpop.trf.xlu0
      %v3538 = vpop.trf.xlu0
      %v3539 = vpop.trf.xlu0
      %v3540 = vpop.trf.xlu0
      %v3541 = vpop.trf.xlu0
      %v3542 = vpop.trf.xlu0
      %v3543 = vpop.trf.xlu0
      %v3544 = vpop.trf.xlu0
      %v3545 = vpop.trf.xlu0
      %3546 = vxpose.xlu0.b32.start [1/16] %v225, 128
      %3547 = vxpose.xlu0.b32.cont [2/16] 0.0, 128
      %3548 = vxpose.xlu0.b32.cont [3/16] 0.0, 128
      %3549 = vxpose.xlu0.b32.cont [4/16] 0.0, 128
      %3550 = vxpose.xlu0.b32.cont [5/16] 0.0, 128
      %3551 = vxpose.xlu0.b32.cont [6/16] 0.0, 128
      %3552 = vxpose.xlu0.b32.cont [7/16] 0.0, 128
      %3553 = vxpose.xlu0.b32.cont [8/16] 0.0, 128
      %3554 = vxpose.xlu0.b32.cont [9/16] 0.0, 128
      %3555 = vxpose.xlu0.b32.cont [10/16] 0.0, 128
      %3556 = vxpose.xlu0.b32.cont [11/16] 0.0, 128
      %3557 = vxpose.xlu0.b32.cont [12/16] 0.0, 128
      %3558 = vxpose.xlu0.b32.cont [13/16] 0.0, 128
      %3559 = vxpose.xlu0.b32.cont [14/16] 0.0, 128
      %3560 = vxpose.xlu0.b32.cont [15/16] 0.0, 128
      %3561 = vxpose.xlu0.b32.end [16/16] 0.0, 128
      %v3562 = vpop.trf.xlu0
      %v3563 = vpop.trf.xlu0
      %v3564 = vpop.trf.xlu0
      %v3565 = vpop.trf.xlu0
      %v3566 = vpop.trf.xlu0
      %v3567 = vpop.trf.xlu0
      %v3568 = vpop.trf.xlu0
      %v3569 = vpop.trf.xlu0
      %v3570 = vpop.trf.xlu0
      %v3571 = vpop.trf.xlu0
      %v3572 = vpop.trf.xlu0
      %v3573 = vpop.trf.xlu0
      %v3574 = vpop.trf.xlu0
      %v3575 = vpop.trf.xlu0
      %v3576 = vpop.trf.xlu0
      %v3577 = vpop.trf.xlu0
      %3578 = vxpose.xlu0.b32.start [1/16] %v226, 128
      %3579 = vxpose.xlu0.b32.cont [2/16] 0.0, 128
      %3580 = vxpose.xlu0.b32.cont [3/16] 0.0, 128
      %3581 = vxpose.xlu0.b32.cont [4/16] 0.0, 128
      %3582 = vxpose.xlu0.b32.cont [5/16] 0.0, 128
      %3583 = vxpose.xlu0.b32.cont [6/16] 0.0, 128
      %3584 = vxpose.xlu0.b32.cont [7/16] 0.0, 128
      %3585 = vxpose.xlu0.b32.cont [8/16] 0.0, 128
      %3586 = vxpose.xlu0.b32.cont [9/16] 0.0, 128
      %3587 = vxpose.xlu0.b32.cont [10/16] 0.0, 128
      %3588 = vxpose.xlu0.b32.cont [11/16] 0.0, 128
      %3589 = vxpose.xlu0.b32.cont [12/16] 0.0, 128
      %3590 = vxpose.xlu0.b32.cont [13/16] 0.0, 128
      %3591 = vxpose.xlu0.b32.cont [14/16] 0.0, 128
      %3592 = vxpose.xlu0.b32.cont [15/16] 0.0, 128
      %3593 = vxpose.xlu0.b32.end [16/16] 0.0, 128
      %v3594 = vpop.trf.xlu0
      %v3595 = vpop.trf.xlu0
      %v3596 = vpop.trf.xlu0
      %v3597 = vpop.trf.xlu0
      %v3598 = vpop.trf.xlu0
      %v3599 = vpop.trf.xlu0
      %v3600 = vpop.trf.xlu0
      %v3601 = vpop.trf.xlu0
      %v3602 = vpop.trf.xlu0
      %v3603 = vpop.trf.xlu0
      %v3604 = vpop.trf.xlu0
      %v3605 = vpop.trf.xlu0
      %v3606 = vpop.trf.xlu0
      %v3607 = vpop.trf.xlu0
      %v3608 = vpop.trf.xlu0
      %v3609 = vpop.trf.xlu0
      %3610 = vxpose.xlu0.b32.start [1/16] %v227, 128
      %3611 = vxpose.xlu0.b32.cont [2/16] 0.0, 128
      %3612 = vxpose.xlu0.b32.cont [3/16] 0.0, 128
      %3613 = vxpose.xlu0.b32.cont [4/16] 0.0, 128
      %3614 = vxpose.xlu0.b32.cont [5/16] 0.0, 128
      %3615 = vxpose.xlu0.b32.cont [6/16] 0.0, 128
      %3616 = vxpose.xlu0.b32.cont [7/16] 0.0, 128
      %3617 = vxpose.xlu0.b32.cont [8/16] 0.0, 128
      %3618 = vxpose.xlu0.b32.cont [9/16] 0.0, 128
      %3619 = vxpose.xlu0.b32.cont [10/16] 0.0, 128
      %3620 = vxpose.xlu0.b32.cont [11/16] 0.0, 128
      %3621 = vxpose.xlu0.b32.cont [12/16] 0.0, 128
      %3622 = vxpose.xlu0.b32.cont [13/16] 0.0, 128
      %3623 = vxpose.xlu0.b32.cont [14/16] 0.0, 128
      %3624 = vxpose.xlu0.b32.cont [15/16] 0.0, 128
      %3625 = vxpose.xlu0.b32.end [16/16] 0.0, 128
      %v3626 = vpop.trf.xlu0
      %v3627 = vpop.trf.xlu0
      %v3628 = vpop.trf.xlu0
      %v3629 = vpop.trf.xlu0
      %v3630 = vpop.trf.xlu0
      %v3631 = vpop.trf.xlu0
      %v3632 = vpop.trf.xlu0
      %v3633 = vpop.trf.xlu0
      %v3634 = vpop.trf.xlu0
      %v3635 = vpop.trf.xlu0
      %v3636 = vpop.trf.xlu0
      %v3637 = vpop.trf.xlu0
      %v3638 = vpop.trf.xlu0
      %v3639 = vpop.trf.xlu0
      %v3640 = vpop.trf.xlu0
      %v3641 = vpop.trf.xlu0
      %3642 = vxpose.xlu0.b32.start [1/16] %v228, 128
      %3643 = vxpose.xlu0.b32.cont [2/16] 0.0, 128
      %3644 = vxpose.xlu0.b32.cont [3/16] 0.0, 128
      %3645 = vxpose.xlu0.b32.cont [4/16] 0.0, 128
      %3646 = vxpose.xlu0.b32.cont [5/16] 0.0, 128
      %3647 = vxpose.xlu0.b32.cont [6/16] 0.0, 128
      %3648 = vxpose.xlu0.b32.cont [7/16] 0.0, 128
      %3649 = vxpose.xlu0.b32.cont [8/16] 0.0, 128
      %3650 = vxpose.xlu0.b32.cont [9/16] 0.0, 128
      %3651 = vxpose.xlu0.b32.cont [10/16] 0.0, 128
      %3652 = vxpose.xlu0.b32.cont [11/16] 0.0, 128
      %3653 = vxpose.xlu0.b32.cont [12/16] 0.0, 128
      %3654 = vxpose.xlu0.b32.cont [13/16] 0.0, 128
      %3655 = vxpose.xlu0.b32.cont [14/16] 0.0, 128
      %3656 = vxpose.xlu0.b32.cont [15/16] 0.0, 128
      %3657 = vxpose.xlu0.b32.end [16/16] 0.0, 128
      %v3658 = vpop.trf.xlu0
      %v3659 = vpop.trf.xlu0
      %v3660 = vpop.trf.xlu0
      %v3661 = vpop.trf.xlu0
      %v3662 = vpop.trf.xlu0
      %v3663 = vpop.trf.xlu0
      %v3664 = vpop.trf.xlu0
      %v3665 = vpop.trf.xlu0
      %v3666 = vpop.trf.xlu0
      %v3667 = vpop.trf.xlu0
      %v3668 = vpop.trf.xlu0
      %v3669 = vpop.trf.xlu0
      %v3670 = vpop.trf.xlu0
      %v3671 = vpop.trf.xlu0
      %v3672 = vpop.trf.xlu0
      %v3673 = vpop.trf.xlu0
      %3674 = vxpose.xlu0.b32.start [1/16] %v229, 128
      %3675 = vxpose.xlu0.b32.cont [2/16] 0.0, 128
      %3676 = vxpose.xlu0.b32.cont [3/16] 0.0, 128
      %3677 = vxpose.xlu0.b32.cont [4/16] 0.0, 128
      %3678 = vxpose.xlu0.b32.cont [5/16] 0.0, 128
      %3679 = vxpose.xlu0.b32.cont [6/16] 0.0, 128
      %3680 = vxpose.xlu0.b32.cont [7/16] 0.0, 128
      %3681 = vxpose.xlu0.b32.cont [8/16] 0.0, 128
      %3682 = vxpose.xlu0.b32.cont [9/16] 0.0, 128
      %3683 = vxpose.xlu0.b32.cont [10/16] 0.0, 128
      %3684 = vxpose.xlu0.b32.cont [11/16] 0.0, 128
      %3685 = vxpose.xlu0.b32.cont [12/16] 0.0, 128
      %3686 = vxpose.xlu0.b32.cont [13/16] 0.0, 128
      %3687 = vxpose.xlu0.b32.cont [14/16] 0.0, 128
      %3688 = vxpose.xlu0.b32.cont [15/16] 0.0, 128
      %3689 = vxpose.xlu0.b32.end [16/16] 0.0, 128
      %v3690 = vpop.trf.xlu0
      %v3691 = vpop.trf.xlu0
      %v3692 = vpop.trf.xlu0
      %v3693 = vpop.trf.xlu0
      %v3694 = vpop.trf.xlu0
      %v3695 = vpop.trf.xlu0
      %v3696 = vpop.trf.xlu0
      %v3697 = vpop.trf.xlu0
      %v3698 = vpop.trf.xlu0
      %v3699 = vpop.trf.xlu0
      %v3700 = vpop.trf.xlu0
      %v3701 = vpop.trf.xlu0
      %v3702 = vpop.trf.xlu0
      %v3703 = vpop.trf.xlu0
      %v3704 = vpop.trf.xlu0
      %v3705 = vpop.trf.xlu0
      %3706 = vxpose.xlu0.b32.start [1/16] %v230, 128
      %3707 = vxpose.xlu0.b32.cont [2/16] 0.0, 128
      %3708 = vxpose.xlu0.b32.cont [3/16] 0.0, 128
      %3709 = vxpose.xlu0.b32.cont [4/16] 0.0, 128
      %3710 = vxpose.xlu0.b32.cont [5/16] 0.0, 128
      %3711 = vxpose.xlu0.b32.cont [6/16] 0.0, 128
      %3712 = vxpose.xlu0.b32.cont [7/16] 0.0, 128
      %3713 = vxpose.xlu0.b32.cont [8/16] 0.0, 128
      %3714 = vxpose.xlu0.b32.cont [9/16] 0.0, 128
      %3715 = vxpose.xlu0.b32.cont [10/16] 0.0, 128
      %3716 = vxpose.xlu0.b32.cont [11/16] 0.0, 128
      %3717 = vxpose.xlu0.b32.cont [12/16] 0.0, 128
      %3718 = vxpose.xlu0.b32.cont [13/16] 0.0, 128
      %3719 = vxpose.xlu0.b32.cont [14/16] 0.0, 128
      %3720 = vxpose.xlu0.b32.cont [15/16] 0.0, 128
      %3721 = vxpose.xlu0.b32.end [16/16] 0.0, 128
      %v3722 = vpop.trf.xlu0
      %v3723 = vpop.trf.xlu0
      %v3724 = vpop.trf.xlu0
      %v3725 = vpop.trf.xlu0
      %v3726 = vpop.trf.xlu0
      %v3727 = vpop.trf.xlu0
      %v3728 = vpop.trf.xlu0
      %v3729 = vpop.trf.xlu0
      %v3730 = vpop.trf.xlu0
      %v3731 = vpop.trf.xlu0
      %v3732 = vpop.trf.xlu0
      %v3733 = vpop.trf.xlu0
      %v3734 = vpop.trf.xlu0
      %v3735 = vpop.trf.xlu0
      %v3736 = vpop.trf.xlu0
      %v3737 = vpop.trf.xlu0
      %3738 = vxpose.xlu0.b32.start [1/16] %v231, 128
      %3739 = vxpose.xlu0.b32.cont [2/16] 0.0, 128
      %3740 = vxpose.xlu0.b32.cont [3/16] 0.0, 128
      %3741 = vxpose.xlu0.b32.cont [4/16] 0.0, 128
      %3742 = vxpose.xlu0.b32.cont [5/16] 0.0, 128
      %3743 = vxpose.xlu0.b32.cont [6/16] 0.0, 128
      %3744 = vxpose.xlu0.b32.cont [7/16] 0.0, 128
      %3745 = vxpose.xlu0.b32.cont [8/16] 0.0, 128
      %3746 = vxpose.xlu0.b32.cont [9/16] 0.0, 128
      %3747 = vxpose.xlu0.b32.cont [10/16] 0.0, 128
      %3748 = vxpose.xlu0.b32.cont [11/16] 0.0, 128
      %3749 = vxpose.xlu0.b32.cont [12/16] 0.0, 128
      %3750 = vxpose.xlu0.b32.cont [13/16] 0.0, 128
      %3751 = vxpose.xlu0.b32.cont [14/16] 0.0, 128
      %3752 = vxpose.xlu0.b32.cont [15/16] 0.0, 128
      %3753 = vxpose.xlu0.b32.end [16/16] 0.0, 128
      %v3754 = vpop.trf.xlu0
      %v3755 = vpop.trf.xlu0
      %v3756 = vpop.trf.xlu0
      %v3757 = vpop.trf.xlu0
      %v3758 = vpop.trf.xlu0
      %v3759 = vpop.trf.xlu0
      %v3760 = vpop.trf.xlu0
      %v3761 = vpop.trf.xlu0
      %v3762 = vpop.trf.xlu0
      %v3763 = vpop.trf.xlu0
      %v3764 = vpop.trf.xlu0
      %v3765 = vpop.trf.xlu0
      %v3766 = vpop.trf.xlu0
      %v3767 = vpop.trf.xlu0
      %v3768 = vpop.trf.xlu0
      %v3769 = vpop.trf.xlu0
      %3770 = vxpose.xlu0.b32.start [1/16] %v232, 128
      %3771 = vxpose.xlu0.b32.cont [2/16] 0.0, 128
      %3772 = vxpose.xlu0.b32.cont [3/16] 0.0, 128
      %3773 = vxpose.xlu0.b32.cont [4/16] 0.0, 128
      %3774 = vxpose.xlu0.b32.cont [5/16] 0.0, 128
      %3775 = vxpose.xlu0.b32.cont [6/16] 0.0, 128
      %3776 = vxpose.xlu0.b32.cont [7/16] 0.0, 128
      %3777 = vxpose.xlu0.b32.cont [8/16] 0.0, 128
      %3778 = vxpose.xlu0.b32.cont [9/16] 0.0, 128
      %3779 = vxpose.xlu0.b32.cont [10/16] 0.0, 128
      %3780 = vxpose.xlu0.b32.cont [11/16] 0.0, 128
      %3781 = vxpose.xlu0.b32.cont [12/16] 0.0, 128
      %3782 = vxpose.xlu0.b32.cont [13/16] 0.0, 128
      %3783 = vxpose.xlu0.b32.cont [14/16] 0.0, 128
      %3784 = vxpose.xlu0.b32.cont [15/16] 0.0, 128
      %3785 = vxpose.xlu0.b32.end [16/16] 0.0, 128
      %v3786 = vpop.trf.xlu0
      %v3787 = vpop.trf.xlu0
      %v3788 = vpop.trf.xlu0
      %v3789 = vpop.trf.xlu0
      %v3790 = vpop.trf.xlu0
      %v3791 = vpop.trf.xlu0
      %v3792 = vpop.trf.xlu0
      %v3793 = vpop.trf.xlu0
      %v3794 = vpop.trf.xlu0
      %v3795 = vpop.trf.xlu0
      %v3796 = vpop.trf.xlu0
      %v3797 = vpop.trf.xlu0
      %v3798 = vpop.trf.xlu0
      %v3799 = vpop.trf.xlu0
      %v3800 = vpop.trf.xlu0
      %v3801 = vpop.trf.xlu0
      %3802 = vxpose.xlu0.b32.start [1/16] %v233, 128
      %3803 = vxpose.xlu0.b32.cont [2/16] 0.0, 128
      %3804 = vxpose.xlu0.b32.cont [3/16] 0.0, 128
      %3805 = vxpose.xlu0.b32.cont [4/16] 0.0, 128
      %3806 = vxpose.xlu0.b32.cont [5/16] 0.0, 128
      %3807 = vxpose.xlu0.b32.cont [6/16] 0.0, 128
      %3808 = vxpose.xlu0.b32.cont [7/16] 0.0, 128
      %3809 = vxpose.xlu0.b32.cont [8/16] 0.0, 128
      %3810 = vxpose.xlu0.b32.cont [9/16] 0.0, 128
      %3811 = vxpose.xlu0.b32.cont [10/16] 0.0, 128
      %3812 = vxpose.xlu0.b32.cont [11/16] 0.0, 128
      %3813 = vxpose.xlu0.b32.cont [12/16] 0.0, 128
      %3814 = vxpose.xlu0.b32.cont [13/16] 0.0, 128
      %3815 = vxpose.xlu0.b32.cont [14/16] 0.0, 128
      %3816 = vxpose.xlu0.b32.cont [15/16] 0.0, 128
      %3817 = vxpose.xlu0.b32.end [16/16] 0.0, 128
      %v3818 = vpop.trf.xlu0
      %v3819 = vpop.trf.xlu0
      %v3820 = vpop.trf.xlu0
      %v3821 = vpop.trf.xlu0
      %v3822 = vpop.trf.xlu0
      %v3823 = vpop.trf.xlu0
      %v3824 = vpop.trf.xlu0
      %v3825 = vpop.trf.xlu0
      %v3826 = vpop.trf.xlu0
      %v3827 = vpop.trf.xlu0
      %v3828 = vpop.trf.xlu0
      %v3829 = vpop.trf.xlu0
      %v3830 = vpop.trf.xlu0
      %v3831 = vpop.trf.xlu0
      %v3832 = vpop.trf.xlu0
      %v3833 = vpop.trf.xlu0
      %3834 = vxpose.xlu0.b32.start [1/16] %v234, 128
      %3835 = vxpose.xlu0.b32.cont [2/16] 0.0, 128
      %3836 = vxpose.xlu0.b32.cont [3/16] 0.0, 128
      %3837 = vxpose.xlu0.b32.cont [4/16] 0.0, 128
      %3838 = vxpose.xlu0.b32.cont [5/16] 0.0, 128
      %3839 = vxpose.xlu0.b32.cont [6/16] 0.0, 128
      %3840 = vxpose.xlu0.b32.cont [7/16] 0.0, 128
      %3841 = vxpose.xlu0.b32.cont [8/16] 0.0, 128
      %3842 = vxpose.xlu0.b32.cont [9/16] 0.0, 128
      %3843 = vxpose.xlu0.b32.cont [10/16] 0.0, 128
      %3844 = vxpose.xlu0.b32.cont [11/16] 0.0, 128
      %3845 = vxpose.xlu0.b32.cont [12/16] 0.0, 128
      %3846 = vxpose.xlu0.b32.cont [13/16] 0.0, 128
      %3847 = vxpose.xlu0.b32.cont [14/16] 0.0, 128
      %3848 = vxpose.xlu0.b32.cont [15/16] 0.0, 128
      %3849 = vxpose.xlu0.b32.end [16/16] 0.0, 128
      %v3850 = vpop.trf.xlu0
      %v3851 = vpop.trf.xlu0
      %v3852 = vpop.trf.xlu0
      %v3853 = vpop.trf.xlu0
      %v3854 = vpop.trf.xlu0
      %v3855 = vpop.trf.xlu0
      %v3856 = vpop.trf.xlu0
      %v3857 = vpop.trf.xlu0
      %v3858 = vpop.trf.xlu0
      %v3859 = vpop.trf.xlu0
      %v3860 = vpop.trf.xlu0
      %v3861 = vpop.trf.xlu0
      %v3862 = vpop.trf.xlu0
      %v3863 = vpop.trf.xlu0
      %v3864 = vpop.trf.xlu0
      %v3865 = vpop.trf.xlu0
      %3866 = vxpose.xlu0.b32.start [1/16] %v235, 128
      %3867 = vxpose.xlu0.b32.cont [2/16] 0.0, 128
      %3868 = vxpose.xlu0.b32.cont [3/16] 0.0, 128
      %3869 = vxpose.xlu0.b32.cont [4/16] 0.0, 128
      %3870 = vxpose.xlu0.b32.cont [5/16] 0.0, 128
      %3871 = vxpose.xlu0.b32.cont [6/16] 0.0, 128
      %3872 = vxpose.xlu0.b32.cont [7/16] 0.0, 128
      %3873 = vxpose.xlu0.b32.cont [8/16] 0.0, 128
      %3874 = vxpose.xlu0.b32.cont [9/16] 0.0, 128
      %3875 = vxpose.xlu0.b32.cont [10/16] 0.0, 128
      %3876 = vxpose.xlu0.b32.cont [11/16] 0.0, 128
      %3877 = vxpose.xlu0.b32.cont [12/16] 0.0, 128
      %3878 = vxpose.xlu0.b32.cont [13/16] 0.0, 128
      %3879 = vxpose.xlu0.b32.cont [14/16] 0.0, 128
      %3880 = vxpose.xlu0.b32.cont [15/16] 0.0, 128
      %3881 = vxpose.xlu0.b32.end [16/16] 0.0, 128
      %v3882 = vpop.trf.xlu0
      %v3883 = vpop.trf.xlu0
      %v3884 = vpop.trf.xlu0
      %v3885 = vpop.trf.xlu0
      %v3886 = vpop.trf.xlu0
      %v3887 = vpop.trf.xlu0
      %v3888 = vpop.trf.xlu0
      %v3889 = vpop.trf.xlu0
      %v3890 = vpop.trf.xlu0
      %v3891 = vpop.trf.xlu0
      %v3892 = vpop.trf.xlu0
      %v3893 = vpop.trf.xlu0
      %v3894 = vpop.trf.xlu0
      %v3895 = vpop.trf.xlu0
      %v3896 = vpop.trf.xlu0
      %v3897 = vpop.trf.xlu0
      %3898 = vxpose.xlu0.b32.start [1/16] %v236, 128
      %3899 = vxpose.xlu0.b32.cont [2/16] 0.0, 128
      %3900 = vxpose.xlu0.b32.cont [3/16] 0.0, 128
      %3901 = vxpose.xlu0.b32.cont [4/16] 0.0, 128
      %3902 = vxpose.xlu0.b32.cont [5/16] 0.0, 128
      %3903 = vxpose.xlu0.b32.cont [6/16] 0.0, 128
      %3904 = vxpose.xlu0.b32.cont [7/16] 0.0, 128
      %3905 = vxpose.xlu0.b32.cont [8/16] 0.0, 128
      %3906 = vxpose.xlu0.b32.cont [9/16] 0.0, 128
      %3907 = vxpose.xlu0.b32.cont [10/16] 0.0, 128
      %3908 = vxpose.xlu0.b32.cont [11/16] 0.0, 128
      %3909 = vxpose.xlu0.b32.cont [12/16] 0.0, 128
      %3910 = vxpose.xlu0.b32.cont [13/16] 0.0, 128
      %3911 = vxpose.xlu0.b32.cont [14/16] 0.0, 128
      %3912 = vxpose.xlu0.b32.cont [15/16] 0.0, 128
      %3913 = vxpose.xlu0.b32.end [16/16] 0.0, 128
      %v3914 = vpop.trf.xlu0
      %v3915 = vpop.trf.xlu0
      %v3916 = vpop.trf.xlu0
      %v3917 = vpop.trf.xlu0
      %v3918 = vpop.trf.xlu0
      %v3919 = vpop.trf.xlu0
      %v3920 = vpop.trf.xlu0
      %v3921 = vpop.trf.xlu0
      %v3922 = vpop.trf.xlu0
      %v3923 = vpop.trf.xlu0
      %v3924 = vpop.trf.xlu0
      %v3925 = vpop.trf.xlu0
      %v3926 = vpop.trf.xlu0
      %v3927 = vpop.trf.xlu0
      %v3928 = vpop.trf.xlu0
      %v3929 = vpop.trf.xlu0
      %3930 = vxpose.xlu0.b32.start [1/16] %v237, 128
      %3931 = vxpose.xlu0.b32.cont [2/16] 0.0, 128
      %3932 = vxpose.xlu0.b32.cont [3/16] 0.0, 128
      %3933 = vxpose.xlu0.b32.cont [4/16] 0.0, 128
      %3934 = vxpose.xlu0.b32.cont [5/16] 0.0, 128
      %3935 = vxpose.xlu0.b32.cont [6/16] 0.0, 128
      %3936 = vxpose.xlu0.b32.cont [7/16] 0.0, 128
      %3937 = vxpose.xlu0.b32.cont [8/16] 0.0, 128
      %3938 = vxpose.xlu0.b32.cont [9/16] 0.0, 128
      %3939 = vxpose.xlu0.b32.cont [10/16] 0.0, 128
      %3940 = vxpose.xlu0.b32.cont [11/16] 0.0, 128
      %3941 = vxpose.xlu0.b32.cont [12/16] 0.0, 128
      %3942 = vxpose.xlu0.b32.cont [13/16] 0.0, 128
      %3943 = vxpose.xlu0.b32.cont [14/16] 0.0, 128
      %3944 = vxpose.xlu0.b32.cont [15/16] 0.0, 128
      %3945 = vxpose.xlu0.b32.end [16/16] 0.0, 128
      %v3946 = vpop.trf.xlu0
      %v3947 = vpop.trf.xlu0
      %v3948 = vpop.trf.xlu0
      %v3949 = vpop.trf.xlu0
      %v3950 = vpop.trf.xlu0
      %v3951 = vpop.trf.xlu0
      %v3952 = vpop.trf.xlu0
      %v3953 = vpop.trf.xlu0
      %v3954 = vpop.trf.xlu0
      %v3955 = vpop.trf.xlu0
      %v3956 = vpop.trf.xlu0
      %v3957 = vpop.trf.xlu0
      %v3958 = vpop.trf.xlu0
      %v3959 = vpop.trf.xlu0
      %v3960 = vpop.trf.xlu0
      %v3961 = vpop.trf.xlu0
      %3962 = vxpose.xlu0.b32.start [1/16] %v238, 128
      %3963 = vxpose.xlu0.b32.cont [2/16] 0.0, 128
      %3964 = vxpose.xlu0.b32.cont [3/16] 0.0, 128
      %3965 = vxpose.xlu0.b32.cont [4/16] 0.0, 128
      %3966 = vxpose.xlu0.b32.cont [5/16] 0.0, 128
      %3967 = vxpose.xlu0.b32.cont [6/16] 0.0, 128
      %3968 = vxpose.xlu0.b32.cont [7/16] 0.0, 128
      %3969 = vxpose.xlu0.b32.cont [8/16] 0.0, 128
      %3970 = vxpose.xlu0.b32.cont [9/16] 0.0, 128
      %3971 = vxpose.xlu0.b32.cont [10/16] 0.0, 128
      %3972 = vxpose.xlu0.b32.cont [11/16] 0.0, 128
      %3973 = vxpose.xlu0.b32.cont [12/16] 0.0, 128
      %3974 = vxpose.xlu0.b32.cont [13/16] 0.0, 128
      %3975 = vxpose.xlu0.b32.cont [14/16] 0.0, 128
      %3976 = vxpose.xlu0.b32.cont [15/16] 0.0, 128
      %3977 = vxpose.xlu0.b32.end [16/16] 0.0, 128
      %v3978 = vpop.trf.xlu0
      %v3979 = vpop.trf.xlu0
      %v3980 = vpop.trf.xlu0
      %v3981 = vpop.trf.xlu0
      %v3982 = vpop.trf.xlu0
      %v3983 = vpop.trf.xlu0
      %v3984 = vpop.trf.xlu0
      %v3985 = vpop.trf.xlu0
      %v3986 = vpop.trf.xlu0
      %v3987 = vpop.trf.xlu0
      %v3988 = vpop.trf.xlu0
      %v3989 = vpop.trf.xlu0
      %v3990 = vpop.trf.xlu0
      %v3991 = vpop.trf.xlu0
      %v3992 = vpop.trf.xlu0
      %v3993 = vpop.trf.xlu0
      %3994 = vxpose.xlu0.b32.start [1/16] %v239, 128
      %3995 = vxpose.xlu0.b32.cont [2/16] 0.0, 128
      %3996 = vxpose.xlu0.b32.cont [3/16] 0.0, 128
      %3997 = vxpose.xlu0.b32.cont [4/16] 0.0, 128
      %3998 = vxpose.xlu0.b32.cont [5/16] 0.0, 128
      %3999 = vxpose.xlu0.b32.cont [6/16] 0.0, 128
      %4000 = vxpose.xlu0.b32.cont [7/16] 0.0, 128
      %4001 = vxpose.xlu0.b32.cont [8/16] 0.0, 128
      %4002 = vxpose.xlu0.b32.cont [9/16] 0.0, 128
      %4003 = vxpose.xlu0.b32.cont [10/16] 0.0, 128
      %4004 = vxpose.xlu0.b32.cont [11/16] 0.0, 128
      %4005 = vxpose.xlu0.b32.cont [12/16] 0.0, 128
      %4006 = vxpose.xlu0.b32.cont [13/16] 0.0, 128
      %4007 = vxpose.xlu0.b32.cont [14/16] 0.0, 128
      %4008 = vxpose.xlu0.b32.cont [15/16] 0.0, 128
      %4009 = vxpose.xlu0.b32.end [16/16] 0.0, 128
      %v4010 = vpop.trf.xlu0
      %v4011 = vpop.trf.xlu0
      %v4012 = vpop.trf.xlu0
      %v4013 = vpop.trf.xlu0
      %v4014 = vpop.trf.xlu0
      %v4015 = vpop.trf.xlu0
      %v4016 = vpop.trf.xlu0
      %v4017 = vpop.trf.xlu0
      %v4018 = vpop.trf.xlu0
      %v4019 = vpop.trf.xlu0
      %v4020 = vpop.trf.xlu0
      %v4021 = vpop.trf.xlu0
      %v4022 = vpop.trf.xlu0
      %v4023 = vpop.trf.xlu0
      %v4024 = vpop.trf.xlu0
      %v4025 = vpop.trf.xlu0
      %4026 = vxpose.xlu0.b32.start [1/16] %v240, 128
      %4027 = vxpose.xlu0.b32.cont [2/16] 0.0, 128
      %4028 = vxpose.xlu0.b32.cont [3/16] 0.0, 128
      %4029 = vxpose.xlu0.b32.cont [4/16] 0.0, 128
      %4030 = vxpose.xlu0.b32.cont [5/16] 0.0, 128
      %4031 = vxpose.xlu0.b32.cont [6/16] 0.0, 128
      %4032 = vxpose.xlu0.b32.cont [7/16] 0.0, 128
      %4033 = vxpose.xlu0.b32.cont [8/16] 0.0, 128
      %4034 = vxpose.xlu0.b32.cont [9/16] 0.0, 128
      %4035 = vxpose.xlu0.b32.cont [10/16] 0.0, 128
      %4036 = vxpose.xlu0.b32.cont [11/16] 0.0, 128
      %4037 = vxpose.xlu0.b32.cont [12/16] 0.0, 128
      %4038 = vxpose.xlu0.b32.cont [13/16] 0.0, 128
      %4039 = vxpose.xlu0.b32.cont [14/16] 0.0, 128
      %4040 = vxpose.xlu0.b32.cont [15/16] 0.0, 128
      %4041 = vxpose.xlu0.b32.end [16/16] 0.0, 128
      %v4042 = vpop.trf.xlu0
      %v4043 = vpop.trf.xlu0
      %v4044 = vpop.trf.xlu0
      %v4045 = vpop.trf.xlu0
      %v4046 = vpop.trf.xlu0
      %v4047 = vpop.trf.xlu0
      %v4048 = vpop.trf.xlu0
      %v4049 = vpop.trf.xlu0
      %v4050 = vpop.trf.xlu0
      %v4051 = vpop.trf.xlu0
      %v4052 = vpop.trf.xlu0
      %v4053 = vpop.trf.xlu0
      %v4054 = vpop.trf.xlu0
      %v4055 = vpop.trf.xlu0
      %v4056 = vpop.trf.xlu0
      %v4057 = vpop.trf.xlu0
      %4058 = vxpose.xlu0.b32.start [1/16] %v241, 128
      %4059 = vxpose.xlu0.b32.cont [2/16] 0.0, 128
      %4060 = vxpose.xlu0.b32.cont [3/16] 0.0, 128
      %4061 = vxpose.xlu0.b32.cont [4/16] 0.0, 128
      %4062 = vxpose.xlu0.b32.cont [5/16] 0.0, 128
      %4063 = vxpose.xlu0.b32.cont [6/16] 0.0, 128
      %4064 = vxpose.xlu0.b32.cont [7/16] 0.0, 128
      %4065 = vxpose.xlu0.b32.cont [8/16] 0.0, 128
      %4066 = vxpose.xlu0.b32.cont [9/16] 0.0, 128
      %4067 = vxpose.xlu0.b32.cont [10/16] 0.0, 128
      %4068 = vxpose.xlu0.b32.cont [11/16] 0.0, 128
      %4069 = vxpose.xlu0.b32.cont [12/16] 0.0, 128
      %4070 = vxpose.xlu0.b32.cont [13/16] 0.0, 128
      %4071 = vxpose.xlu0.b32.cont [14/16] 0.0, 128
      %4072 = vxpose.xlu0.b32.cont [15/16] 0.0, 128
      %4073 = vxpose.xlu0.b32.end [16/16] 0.0, 128
      %v4074 = vpop.trf.xlu0
      %v4075 = vpop.trf.xlu0
      %v4076 = vpop.trf.xlu0
      %v4077 = vpop.trf.xlu0
      %v4078 = vpop.trf.xlu0
      %v4079 = vpop.trf.xlu0
      %v4080 = vpop.trf.xlu0
      %v4081 = vpop.trf.xlu0
      %v4082 = vpop.trf.xlu0
      %v4083 = vpop.trf.xlu0
      %v4084 = vpop.trf.xlu0
      %v4085 = vpop.trf.xlu0
      %v4086 = vpop.trf.xlu0
      %v4087 = vpop.trf.xlu0
      %v4088 = vpop.trf.xlu0
      %v4089 = vpop.trf.xlu0
      %4090 = vxpose.xlu0.b32.start [1/16] %v242, 128
      %4091 = vxpose.xlu0.b32.cont [2/16] 0.0, 128
      %4092 = vxpose.xlu0.b32.cont [3/16] 0.0, 128
      %4093 = vxpose.xlu0.b32.cont [4/16] 0.0, 128
      %4094 = vxpose.xlu0.b32.cont [5/16] 0.0, 128
      %4095 = vxpose.xlu0.b32.cont [6/16] 0.0, 128
      %4096 = vxpose.xlu0.b32.cont [7/16] 0.0, 128
      %4097 = vxpose.xlu0.b32.cont [8/16] 0.0, 128
      %4098 = vxpose.xlu0.b32.cont [9/16] 0.0, 128
      %4099 = vxpose.xlu0.b32.cont [10/16] 0.0, 128
      %4100 = vxpose.xlu0.b32.cont [11/16] 0.0, 128
      %4101 = vxpose.xlu0.b32.cont [12/16] 0.0, 128
      %4102 = vxpose.xlu0.b32.cont [13/16] 0.0, 128
      %4103 = vxpose.xlu0.b32.cont [14/16] 0.0, 128
      %4104 = vxpose.xlu0.b32.cont [15/16] 0.0, 128
      %4105 = vxpose.xlu0.b32.end [16/16] 0.0, 128
      %v4106 = vpop.trf.xlu0
      %v4107 = vpop.trf.xlu0
      %v4108 = vpop.trf.xlu0
      %v4109 = vpop.trf.xlu0
      %v4110 = vpop.trf.xlu0
      %v4111 = vpop.trf.xlu0
      %v4112 = vpop.trf.xlu0
      %v4113 = vpop.trf.xlu0
      %v4114 = vpop.trf.xlu0
      %v4115 = vpop.trf.xlu0
      %v4116 = vpop.trf.xlu0
      %v4117 = vpop.trf.xlu0
      %v4118 = vpop.trf.xlu0
      %v4119 = vpop.trf.xlu0
      %v4120 = vpop.trf.xlu0
      %v4121 = vpop.trf.xlu0
      %4122 = vxpose.xlu0.b32.start [1/16] %v243, 128
      %4123 = vxpose.xlu0.b32.cont [2/16] 0.0, 128
      %4124 = vxpose.xlu0.b32.cont [3/16] 0.0, 128
      %4125 = vxpose.xlu0.b32.cont [4/16] 0.0, 128
      %4126 = vxpose.xlu0.b32.cont [5/16] 0.0, 128
      %4127 = vxpose.xlu0.b32.cont [6/16] 0.0, 128
      %4128 = vxpose.xlu0.b32.cont [7/16] 0.0, 128
      %4129 = vxpose.xlu0.b32.cont [8/16] 0.0, 128
      %4130 = vxpose.xlu0.b32.cont [9/16] 0.0, 128
      %4131 = vxpose.xlu0.b32.cont [10/16] 0.0, 128
      %4132 = vxpose.xlu0.b32.cont [11/16] 0.0, 128
      %4133 = vxpose.xlu0.b32.cont [12/16] 0.0, 128
      %4134 = vxpose.xlu0.b32.cont [13/16] 0.0, 128
      %4135 = vxpose.xlu0.b32.cont [14/16] 0.0, 128
      %4136 = vxpose.xlu0.b32.cont [15/16] 0.0, 128
      %4137 = vxpose.xlu0.b32.end [16/16] 0.0, 128
      %v4138 = vpop.trf.xlu0
      %v4139 = vpop.trf.xlu0
      %v4140 = vpop.trf.xlu0
      %v4141 = vpop.trf.xlu0
      %v4142 = vpop.trf.xlu0
      %v4143 = vpop.trf.xlu0
      %v4144 = vpop.trf.xlu0
      %v4145 = vpop.trf.xlu0
      %v4146 = vpop.trf.xlu0
      %v4147 = vpop.trf.xlu0
      %v4148 = vpop.trf.xlu0
      %v4149 = vpop.trf.xlu0
      %v4150 = vpop.trf.xlu0
      %v4151 = vpop.trf.xlu0
      %v4152 = vpop.trf.xlu0
      %v4153 = vpop.trf.xlu0
      %4154 = vxpose.xlu0.b32.start [1/16] %v244, 128
      %4155 = vxpose.xlu0.b32.cont [2/16] 0.0, 128
      %4156 = vxpose.xlu0.b32.cont [3/16] 0.0, 128
      %4157 = vxpose.xlu0.b32.cont [4/16] 0.0, 128
      %4158 = vxpose.xlu0.b32.cont [5/16] 0.0, 128
      %4159 = vxpose.xlu0.b32.cont [6/16] 0.0, 128
      %4160 = vxpose.xlu0.b32.cont [7/16] 0.0, 128
      %4161 = vxpose.xlu0.b32.cont [8/16] 0.0, 128
      %4162 = vxpose.xlu0.b32.cont [9/16] 0.0, 128
      %4163 = vxpose.xlu0.b32.cont [10/16] 0.0, 128
      %4164 = vxpose.xlu0.b32.cont [11/16] 0.0, 128
      %4165 = vxpose.xlu0.b32.cont [12/16] 0.0, 128
      %4166 = vxpose.xlu0.b32.cont [13/16] 0.0, 128
      %4167 = vxpose.xlu0.b32.cont [14/16] 0.0, 128
      %4168 = vxpose.xlu0.b32.cont [15/16] 0.0, 128
      %4169 = vxpose.xlu0.b32.end [16/16] 0.0, 128
      %v4170 = vpop.trf.xlu0
      %v4171 = vpop.trf.xlu0
      %v4172 = vpop.trf.xlu0
      %v4173 = vpop.trf.xlu0
      %v4174 = vpop.trf.xlu0
      %v4175 = vpop.trf.xlu0
      %v4176 = vpop.trf.xlu0
      %v4177 = vpop.trf.xlu0
      %v4178 = vpop.trf.xlu0
      %v4179 = vpop.trf.xlu0
      %v4180 = vpop.trf.xlu0
      %v4181 = vpop.trf.xlu0
      %v4182 = vpop.trf.xlu0
      %v4183 = vpop.trf.xlu0
      %v4184 = vpop.trf.xlu0
      %v4185 = vpop.trf.xlu0
      %4186 = vxpose.xlu0.b32.start [1/16] %v245, 128
      %4187 = vxpose.xlu0.b32.cont [2/16] 0.0, 128
      %4188 = vxpose.xlu0.b32.cont [3/16] 0.0, 128
      %4189 = vxpose.xlu0.b32.cont [4/16] 0.0, 128
      %4190 = vxpose.xlu0.b32.cont [5/16] 0.0, 128
      %4191 = vxpose.xlu0.b32.cont [6/16] 0.0, 128
      %4192 = vxpose.xlu0.b32.cont [7/16] 0.0, 128
      %4193 = vxpose.xlu0.b32.cont [8/16] 0.0, 128
      %4194 = vxpose.xlu0.b32.cont [9/16] 0.0, 128
      %4195 = vxpose.xlu0.b32.cont [10/16] 0.0, 128
      %4196 = vxpose.xlu0.b32.cont [11/16] 0.0, 128
      %4197 = vxpose.xlu0.b32.cont [12/16] 0.0, 128
      %4198 = vxpose.xlu0.b32.cont [13/16] 0.0, 128
      %4199 = vxpose.xlu0.b32.cont [14/16] 0.0, 128
      %4200 = vxpose.xlu0.b32.cont [15/16] 0.0, 128
      %4201 = vxpose.xlu0.b32.end [16/16] 0.0, 128
      %v4202 = vpop.trf.xlu0
      %v4203 = vpop.trf.xlu0
      %v4204 = vpop.trf.xlu0
      %v4205 = vpop.trf.xlu0
      %v4206 = vpop.trf.xlu0
      %v4207 = vpop.trf.xlu0
      %v4208 = vpop.trf.xlu0
      %v4209 = vpop.trf.xlu0
      %v4210 = vpop.trf.xlu0
      %v4211 = vpop.trf.xlu0
      %v4212 = vpop.trf.xlu0
      %v4213 = vpop.trf.xlu0
      %v4214 = vpop.trf.xlu0
      %v4215 = vpop.trf.xlu0
      %v4216 = vpop.trf.xlu0
      %v4217 = vpop.trf.xlu0
      %4218 = vxpose.xlu0.b32.start [1/16] %v246, 128
      %4219 = vxpose.xlu0.b32.cont [2/16] 0.0, 128
      %4220 = vxpose.xlu0.b32.cont [3/16] 0.0, 128
      %4221 = vxpose.xlu0.b32.cont [4/16] 0.0, 128
      %4222 = vxpose.xlu0.b32.cont [5/16] 0.0, 128
      %4223 = vxpose.xlu0.b32.cont [6/16] 0.0, 128
      %4224 = vxpose.xlu0.b32.cont [7/16] 0.0, 128
      %4225 = vxpose.xlu0.b32.cont [8/16] 0.0, 128
      %4226 = vxpose.xlu0.b32.cont [9/16] 0.0, 128
      %4227 = vxpose.xlu0.b32.cont [10/16] 0.0, 128
      %4228 = vxpose.xlu0.b32.cont [11/16] 0.0, 128
      %4229 = vxpose.xlu0.b32.cont [12/16] 0.0, 128
      %4230 = vxpose.xlu0.b32.cont [13/16] 0.0, 128
      %4231 = vxpose.xlu0.b32.cont [14/16] 0.0, 128
      %4232 = vxpose.xlu0.b32.cont [15/16] 0.0, 128
      %4233 = vxpose.xlu0.b32.end [16/16] 0.0, 128
      %v4234 = vpop.trf.xlu0
      %v4235 = vpop.trf.xlu0
      %v4236 = vpop.trf.xlu0
      %v4237 = vpop.trf.xlu0
      %v4238 = vpop.trf.xlu0
      %v4239 = vpop.trf.xlu0
      %v4240 = vpop.trf.xlu0
      %v4241 = vpop.trf.xlu0
      %v4242 = vpop.trf.xlu0
      %v4243 = vpop.trf.xlu0
      %v4244 = vpop.trf.xlu0
      %v4245 = vpop.trf.xlu0
      %v4246 = vpop.trf.xlu0
      %v4247 = vpop.trf.xlu0
      %v4248 = vpop.trf.xlu0
      %v4249 = vpop.trf.xlu0
      %4250 = vxpose.xlu0.b32.start [1/16] %v247, 128
      %4251 = vxpose.xlu0.b32.cont [2/16] 0.0, 128
      %4252 = vxpose.xlu0.b32.cont [3/16] 0.0, 128
      %4253 = vxpose.xlu0.b32.cont [4/16] 0.0, 128
      %4254 = vxpose.xlu0.b32.cont [5/16] 0.0, 128
      %4255 = vxpose.xlu0.b32.cont [6/16] 0.0, 128
      %4256 = vxpose.xlu0.b32.cont [7/16] 0.0, 128
      %4257 = vxpose.xlu0.b32.cont [8/16] 0.0, 128
      %4258 = vxpose.xlu0.b32.cont [9/16] 0.0, 128
      %4259 = vxpose.xlu0.b32.cont [10/16] 0.0, 128
      %4260 = vxpose.xlu0.b32.cont [11/16] 0.0, 128
      %4261 = vxpose.xlu0.b32.cont [12/16] 0.0, 128
      %4262 = vxpose.xlu0.b32.cont [13/16] 0.0, 128
      %4263 = vxpose.xlu0.b32.cont [14/16] 0.0, 128
      %4264 = vxpose.xlu0.b32.cont [15/16] 0.0, 128
      %4265 = vxpose.xlu0.b32.end [16/16] 0.0, 128
      %v4266 = vpop.trf.xlu0
      %v4267 = vpop.trf.xlu0
      %v4268 = vpop.trf.xlu0
      %v4269 = vpop.trf.xlu0
      %v4270 = vpop.trf.xlu0
      %v4271 = vpop.trf.xlu0
      %v4272 = vpop.trf.xlu0
      %v4273 = vpop.trf.xlu0
      %v4274 = vpop.trf.xlu0
      %v4275 = vpop.trf.xlu0
      %v4276 = vpop.trf.xlu0
      %v4277 = vpop.trf.xlu0
      %v4278 = vpop.trf.xlu0
      %v4279 = vpop.trf.xlu0
      %v4280 = vpop.trf.xlu0
      %v4281 = vpop.trf.xlu0
      %4282 = vxpose.xlu0.b32.start [1/16] %v248, 128
      %4283 = vxpose.xlu0.b32.cont [2/16] 0.0, 128
      %4284 = vxpose.xlu0.b32.cont [3/16] 0.0, 128
      %4285 = vxpose.xlu0.b32.cont [4/16] 0.0, 128
      %4286 = vxpose.xlu0.b32.cont [5/16] 0.0, 128
      %4287 = vxpose.xlu0.b32.cont [6/16] 0.0, 128
      %4288 = vxpose.xlu0.b32.cont [7/16] 0.0, 128
      %4289 = vxpose.xlu0.b32.cont [8/16] 0.0, 128
      %4290 = vxpose.xlu0.b32.cont [9/16] 0.0, 128
      %4291 = vxpose.xlu0.b32.cont [10/16] 0.0, 128
      %4292 = vxpose.xlu0.b32.cont [11/16] 0.0, 128
      %4293 = vxpose.xlu0.b32.cont [12/16] 0.0, 128
      %4294 = vxpose.xlu0.b32.cont [13/16] 0.0, 128
      %4295 = vxpose.xlu0.b32.cont [14/16] 0.0, 128
      %4296 = vxpose.xlu0.b32.cont [15/16] 0.0, 128
      %4297 = vxpose.xlu0.b32.end [16/16] 0.0, 128
      %v4298 = vpop.trf.xlu0
      %v4299 = vpop.trf.xlu0
      %v4300 = vpop.trf.xlu0
      %v4301 = vpop.trf.xlu0
      %v4302 = vpop.trf.xlu0
      %v4303 = vpop.trf.xlu0
      %v4304 = vpop.trf.xlu0
      %v4305 = vpop.trf.xlu0
      %v4306 = vpop.trf.xlu0
      %v4307 = vpop.trf.xlu0
      %v4308 = vpop.trf.xlu0
      %v4309 = vpop.trf.xlu0
      %v4310 = vpop.trf.xlu0
      %v4311 = vpop.trf.xlu0
      %v4312 = vpop.trf.xlu0
      %v4313 = vpop.trf.xlu0
      %4314 = vxpose.xlu0.b32.start [1/16] %v249, 128
      %4315 = vxpose.xlu0.b32.cont [2/16] 0.0, 128
      %4316 = vxpose.xlu0.b32.cont [3/16] 0.0, 128
      %4317 = vxpose.xlu0.b32.cont [4/16] 0.0, 128
      %4318 = vxpose.xlu0.b32.cont [5/16] 0.0, 128
      %4319 = vxpose.xlu0.b32.cont [6/16] 0.0, 128
      %4320 = vxpose.xlu0.b32.cont [7/16] 0.0, 128
      %4321 = vxpose.xlu0.b32.cont [8/16] 0.0, 128
      %4322 = vxpose.xlu0.b32.cont [9/16] 0.0, 128
      %4323 = vxpose.xlu0.b32.cont [10/16] 0.0, 128
      %4324 = vxpose.xlu0.b32.cont [11/16] 0.0, 128
      %4325 = vxpose.xlu0.b32.cont [12/16] 0.0, 128
      %4326 = vxpose.xlu0.b32.cont [13/16] 0.0, 128
      %4327 = vxpose.xlu0.b32.cont [14/16] 0.0, 128
      %4328 = vxpose.xlu0.b32.cont [15/16] 0.0, 128
      %4329 = vxpose.xlu0.b32.end [16/16] 0.0, 128
      %v4330 = vpop.trf.xlu0
      %v4331 = vpop.trf.xlu0
      %v4332 = vpop.trf.xlu0
      %v4333 = vpop.trf.xlu0
      %v4334 = vpop.trf.xlu0
      %v4335 = vpop.trf.xlu0
      %v4336 = vpop.trf.xlu0
      %v4337 = vpop.trf.xlu0
      %v4338 = vpop.trf.xlu0
      %v4339 = vpop.trf.xlu0
      %v4340 = vpop.trf.xlu0
      %v4341 = vpop.trf.xlu0
      %v4342 = vpop.trf.xlu0
      %v4343 = vpop.trf.xlu0
      %v4344 = vpop.trf.xlu0
      %v4345 = vpop.trf.xlu0
      %vm4346 = vcmask 64512
      %4347 = vst.msk [vmem:[%s120] sm:$0xff] %vm4346, %v266
      %4348 = vst.msk [vmem:[%s120 + $0x8] sm:$0xff] %vm4346, %v267
      %4349 = vst.msk [vmem:[%s120 + $0x10] sm:$0xff] %vm4346, %v268
      %4350 = vst.msk [vmem:[%s120 + $0x18] sm:$0xff] %vm4346, %v269
      %4351 = vst.msk [vmem:[%s120 + $0x20] sm:$0xff] %vm4346, %v298
      %4352 = vst.msk [vmem:[%s120 + $0x28] sm:$0xff] %vm4346, %v299
      %4353 = vst.msk [vmem:[%s120 + $0x30] sm:$0xff] %vm4346, %v300
      %4354 = vst.msk [vmem:[%s120 + $0x38] sm:$0xff] %vm4346, %v301
      %4355 = vst.msk [vmem:[%s120 + $0x40] sm:$0xff] %vm4346, %v330
      %4356 = vst.msk [vmem:[%s120 + $0x48] sm:$0xff] %vm4346, %v331
      %4357 = vst.msk [vmem:[%s120 + $0x50] sm:$0xff] %vm4346, %v332
      %4358 = vst.msk [vmem:[%s120 + $0x58] sm:$0xff] %vm4346, %v333
      %4359 = vst.msk [vmem:[%s120 + $0x60] sm:$0xff] %vm4346, %v362
      %4360 = vst.msk [vmem:[%s120 + $0x68] sm:$0xff] %vm4346, %v363
      %4361 = vst.msk [vmem:[%s120 + $0x70] sm:$0xff] %vm4346, %v364
      %4362 = vst.msk [vmem:[%s120 + $0x78] sm:$0xff] %vm4346, %v365
      %4363 = vst.msk [vmem:[%s120 + $0x80] sm:$0xff] %vm4346, %v394
      %4364 = vst.msk [vmem:[%s120 + $0x88] sm:$0xff] %vm4346, %v395
      %4365 = vst.msk [vmem:[%s120 + $0x90] sm:$0xff] %vm4346, %v396
      %4366 = vst.msk [vmem:[%s120 + $0x98] sm:$0xff] %vm4346, %v397
      %4367 = vst.msk [vmem:[%s120 + $0xa0] sm:$0xff] %vm4346, %v426
      %4368 = vst.msk [vmem:[%s120 + $0xa8] sm:$0xff] %vm4346, %v427
      %4369 = vst.msk [vmem:[%s120 + $0xb0] sm:$0xff] %vm4346, %v428
      %4370 = vst.msk [vmem:[%s120 + $0xb8] sm:$0xff] %vm4346, %v429
      %4371 = vst.msk [vmem:[%s120 + $0xc0] sm:$0xff] %vm4346, %v458
      %4372 = vst.msk [vmem:[%s120 + $0xc8] sm:$0xff] %vm4346, %v459
      %4373 = vst.msk [vmem:[%s120 + $0xd0] sm:$0xff] %vm4346, %v460
      %4374 = vst.msk [vmem:[%s120 + $0xd8] sm:$0xff] %vm4346, %v461
      %4375 = vst.msk [vmem:[%s120 + $0xe0] sm:$0xff] %vm4346, %v490
      %4376 = vst.msk [vmem:[%s120 + $0xe8] sm:$0xff] %vm4346, %v491
      %4377 = vst.msk [vmem:[%s120 + $0xf0] sm:$0xff] %vm4346, %v492
      %4378 = vst.msk [vmem:[%s120 + $0xf8] sm:$0xff] %vm4346, %v493
      %4379 = vst.msk [vmem:[%s120 + $0x100] sm:$0xff] %vm4346, %v522
      %4380 = vst.msk [vmem:[%s120 + $0x108] sm:$0xff] %vm4346, %v523
      %4381 = vst.msk [vmem:[%s120 + $0x110] sm:$0xff] %vm4346, %v524
      %4382 = vst.msk [vmem:[%s120 + $0x118] sm:$0xff] %vm4346, %v525
      %4383 = vst.msk [vmem:[%s120 + $0x120] sm:$0xff] %vm4346, %v554
      %4384 = vst.msk [vmem:[%s120 + $0x128] sm:$0xff] %vm4346, %v555
      %4385 = vst.msk [vmem:[%s120 + $0x130] sm:$0xff] %vm4346, %v556
      %4386 = vst.msk [vmem:[%s120 + $0x138] sm:$0xff] %vm4346, %v557
      %4387 = vst.msk [vmem:[%s120 + $0x140] sm:$0xff] %vm4346, %v586
      %4388 = vst.msk [vmem:[%s120 + $0x148] sm:$0xff] %vm4346, %v587
      %4389 = vst.msk [vmem:[%s120 + $0x150] sm:$0xff] %vm4346, %v588
      %4390 = vst.msk [vmem:[%s120 + $0x158] sm:$0xff] %vm4346, %v589
      %4391 = vst.msk [vmem:[%s120 + $0x160] sm:$0xff] %vm4346, %v618
      %4392 = vst.msk [vmem:[%s120 + $0x168] sm:$0xff] %vm4346, %v619
      %4393 = vst.msk [vmem:[%s120 + $0x170] sm:$0xff] %vm4346, %v620
      %4394 = vst.msk [vmem:[%s120 + $0x178] sm:$0xff] %vm4346, %v621
      %4395 = vst.msk [vmem:[%s120 + $0x180] sm:$0xff] %vm4346, %v650
      %4396 = vst.msk [vmem:[%s120 + $0x188] sm:$0xff] %vm4346, %v651
      %4397 = vst.msk [vmem:[%s120 + $0x190] sm:$0xff] %vm4346, %v652
      %4398 = vst.msk [vmem:[%s120 + $0x198] sm:$0xff] %vm4346, %v653
      %4399 = vst.msk [vmem:[%s120 + $0x1a0] sm:$0xff] %vm4346, %v682
      %4400 = vst.msk [vmem:[%s120 + $0x1a8] sm:$0xff] %vm4346, %v683
      %4401 = vst.msk [vmem:[%s120 + $0x1b0] sm:$0xff] %vm4346, %v684
      %4402 = vst.msk [vmem:[%s120 + $0x1b8] sm:$0xff] %vm4346, %v685
      %4403 = vst.msk [vmem:[%s120 + $0x1c0] sm:$0xff] %vm4346, %v714
      %4404 = vst.msk [vmem:[%s120 + $0x1c8] sm:$0xff] %vm4346, %v715
      %4405 = vst.msk [vmem:[%s120 + $0x1d0] sm:$0xff] %vm4346, %v716
      %4406 = vst.msk [vmem:[%s120 + $0x1d8] sm:$0xff] %vm4346, %v717
      %4407 = vst.msk [vmem:[%s120 + $0x1e0] sm:$0xff] %vm4346, %v746
      %4408 = vst.msk [vmem:[%s120 + $0x1e8] sm:$0xff] %vm4346, %v747
      %4409 = vst.msk [vmem:[%s120 + $0x1f0] sm:$0xff] %vm4346, %v748
      %4410 = vst.msk [vmem:[%s120 + $0x1f8] sm:$0xff] %vm4346, %v749
      %4411 = vst.msk [vmem:[%s120 + $0x200] sm:$0xff] %vm4346, %v778
      %4412 = vst.msk [vmem:[%s120 + $0x208] sm:$0xff] %vm4346, %v779
      %4413 = vst.msk [vmem:[%s120 + $0x210] sm:$0xff] %vm4346, %v780
      %4414 = vst.msk [vmem:[%s120 + $0x218] sm:$0xff] %vm4346, %v781
      %4415 = vst.msk [vmem:[%s120 + $0x220] sm:$0xff] %vm4346, %v810
      %4416 = vst.msk [vmem:[%s120 + $0x228] sm:$0xff] %vm4346, %v811
      %4417 = vst.msk [vmem:[%s120 + $0x230] sm:$0xff] %vm4346, %v812
      %4418 = vst.msk [vmem:[%s120 + $0x238] sm:$0xff] %vm4346, %v813
      %4419 = vst.msk [vmem:[%s120 + $0x240] sm:$0xff] %vm4346, %v842
      %4420 = vst.msk [vmem:[%s120 + $0x248] sm:$0xff] %vm4346, %v843
      %4421 = vst.msk [vmem:[%s120 + $0x250] sm:$0xff] %vm4346, %v844
      %4422 = vst.msk [vmem:[%s120 + $0x258] sm:$0xff] %vm4346, %v845
      %4423 = vst.msk [vmem:[%s120 + $0x260] sm:$0xff] %vm4346, %v874
      %4424 = vst.msk [vmem:[%s120 + $0x268] sm:$0xff] %vm4346, %v875
      %4425 = vst.msk [vmem:[%s120 + $0x270] sm:$0xff] %vm4346, %v876
      %4426 = vst.msk [vmem:[%s120 + $0x278] sm:$0xff] %vm4346, %v877
      %4427 = vst.msk [vmem:[%s120 + $0x280] sm:$0xff] %vm4346, %v906
      %4428 = vst.msk [vmem:[%s120 + $0x288] sm:$0xff] %vm4346, %v907
      %4429 = vst.msk [vmem:[%s120 + $0x290] sm:$0xff] %vm4346, %v908
      %4430 = vst.msk [vmem:[%s120 + $0x298] sm:$0xff] %vm4346, %v909
      %4431 = vst.msk [vmem:[%s120 + $0x2a0] sm:$0xff] %vm4346, %v938
      %4432 = vst.msk [vmem:[%s120 + $0x2a8] sm:$0xff] %vm4346, %v939
      %4433 = vst.msk [vmem:[%s120 + $0x2b0] sm:$0xff] %vm4346, %v940
      %4434 = vst.msk [vmem:[%s120 + $0x2b8] sm:$0xff] %vm4346, %v941
      %4435 = vst.msk [vmem:[%s120 + $0x2c0] sm:$0xff] %vm4346, %v970
      %4436 = vst.msk [vmem:[%s120 + $0x2c8] sm:$0xff] %vm4346, %v971
      %4437 = vst.msk [vmem:[%s120 + $0x2d0] sm:$0xff] %vm4346, %v972
      %4438 = vst.msk [vmem:[%s120 + $0x2d8] sm:$0xff] %vm4346, %v973
      %4439 = vst.msk [vmem:[%s120 + $0x2e0] sm:$0xff] %vm4346, %v1002
      %4440 = vst.msk [vmem:[%s120 + $0x2e8] sm:$0xff] %vm4346, %v1003
      %4441 = vst.msk [vmem:[%s120 + $0x2f0] sm:$0xff] %vm4346, %v1004
      %4442 = vst.msk [vmem:[%s120 + $0x2f8] sm:$0xff] %vm4346, %v1005
      %4443 = vst.msk [vmem:[%s120 + $0x300] sm:$0xff] %vm4346, %v1034
      %4444 = vst.msk [vmem:[%s120 + $0x308] sm:$0xff] %vm4346, %v1035
      %4445 = vst.msk [vmem:[%s120 + $0x310] sm:$0xff] %vm4346, %v1036
      %4446 = vst.msk [vmem:[%s120 + $0x318] sm:$0xff] %vm4346, %v1037
      %4447 = vst.msk [vmem:[%s120 + $0x320] sm:$0xff] %vm4346, %v1066
      %4448 = vst.msk [vmem:[%s120 + $0x328] sm:$0xff] %vm4346, %v1067
      %4449 = vst.msk [vmem:[%s120 + $0x330] sm:$0xff] %vm4346, %v1068
      %4450 = vst.msk [vmem:[%s120 + $0x338] sm:$0xff] %vm4346, %v1069
      %4451 = vst.msk [vmem:[%s120 + $0x340] sm:$0xff] %vm4346, %v1098
      %4452 = vst.msk [vmem:[%s120 + $0x348] sm:$0xff] %vm4346, %v1099
      %4453 = vst.msk [vmem:[%s120 + $0x350] sm:$0xff] %vm4346, %v1100
      %4454 = vst.msk [vmem:[%s120 + $0x358] sm:$0xff] %vm4346, %v1101
      %4455 = vst.msk [vmem:[%s120 + $0x360] sm:$0xff] %vm4346, %v1130
      %4456 = vst.msk [vmem:[%s120 + $0x368] sm:$0xff] %vm4346, %v1131
      %4457 = vst.msk [vmem:[%s120 + $0x370] sm:$0xff] %vm4346, %v1132
      %4458 = vst.msk [vmem:[%s120 + $0x378] sm:$0xff] %vm4346, %v1133
      %4459 = vst.msk [vmem:[%s120 + $0x380] sm:$0xff] %vm4346, %v1162
      %4460 = vst.msk [vmem:[%s120 + $0x388] sm:$0xff] %vm4346, %v1163
      %4461 = vst.msk [vmem:[%s120 + $0x390] sm:$0xff] %vm4346, %v1164
      %4462 = vst.msk [vmem:[%s120 + $0x398] sm:$0xff] %vm4346, %v1165
      %4463 = vst.msk [vmem:[%s120 + $0x3a0] sm:$0xff] %vm4346, %v1194
      %4464 = vst.msk [vmem:[%s120 + $0x3a8] sm:$0xff] %vm4346, %v1195
      %4465 = vst.msk [vmem:[%s120 + $0x3b0] sm:$0xff] %vm4346, %v1196
      %4466 = vst.msk [vmem:[%s120 + $0x3b8] sm:$0xff] %vm4346, %v1197
      %4467 = vst.msk [vmem:[%s120 + $0x3c0] sm:$0xff] %vm4346, %v1226
      %4468 = vst.msk [vmem:[%s120 + $0x3c8] sm:$0xff] %vm4346, %v1227
      %4469 = vst.msk [vmem:[%s120 + $0x3d0] sm:$0xff] %vm4346, %v1228
      %4470 = vst.msk [vmem:[%s120 + $0x3d8] sm:$0xff] %vm4346, %v1229
      %4471 = vst.msk [vmem:[%s120 + $0x3e0] sm:$0xff] %vm4346, %v1258
      %4472 = vst.msk [vmem:[%s120 + $0x3e8] sm:$0xff] %vm4346, %v1259
      %4473 = vst.msk [vmem:[%s120 + $0x3f0] sm:$0xff] %vm4346, %v1260
      %4474 = vst.msk [vmem:[%s120 + $0x3f8] sm:$0xff] %vm4346, %v1261
      %4475 = vst.msk [vmem:[%s120 + $0x400] sm:$0xff] %vm4346, %v1290
      %4476 = vst.msk [vmem:[%s120 + $0x408] sm:$0xff] %vm4346, %v1291
      %4477 = vst.msk [vmem:[%s120 + $0x410] sm:$0xff] %vm4346, %v1292
      %4478 = vst.msk [vmem:[%s120 + $0x418] sm:$0xff] %vm4346, %v1293
      %4479 = vst.msk [vmem:[%s120 + $0x420] sm:$0xff] %vm4346, %v1322
      %4480 = vst.msk [vmem:[%s120 + $0x428] sm:$0xff] %vm4346, %v1323
      %4481 = vst.msk [vmem:[%s120 + $0x430] sm:$0xff] %vm4346, %v1324
      %4482 = vst.msk [vmem:[%s120 + $0x438] sm:$0xff] %vm4346, %v1325
      %4483 = vst.msk [vmem:[%s120 + $0x440] sm:$0xff] %vm4346, %v1354
      %4484 = vst.msk [vmem:[%s120 + $0x448] sm:$0xff] %vm4346, %v1355
      %4485 = vst.msk [vmem:[%s120 + $0x450] sm:$0xff] %vm4346, %v1356
      %4486 = vst.msk [vmem:[%s120 + $0x458] sm:$0xff] %vm4346, %v1357
      %4487 = vst.msk [vmem:[%s120 + $0x460] sm:$0xff] %vm4346, %v1386
      %4488 = vst.msk [vmem:[%s120 + $0x468] sm:$0xff] %vm4346, %v1387
      %4489 = vst.msk [vmem:[%s120 + $0x470] sm:$0xff] %vm4346, %v1388
      %4490 = vst.msk [vmem:[%s120 + $0x478] sm:$0xff] %vm4346, %v1389
      %4491 = vst.msk [vmem:[%s120 + $0x480] sm:$0xff] %vm4346, %v1418
      %4492 = vst.msk [vmem:[%s120 + $0x488] sm:$0xff] %vm4346, %v1419
      %4493 = vst.msk [vmem:[%s120 + $0x490] sm:$0xff] %vm4346, %v1420
      %4494 = vst.msk [vmem:[%s120 + $0x498] sm:$0xff] %vm4346, %v1421
      %4495 = vst.msk [vmem:[%s120 + $0x4a0] sm:$0xff] %vm4346, %v1450
      %4496 = vst.msk [vmem:[%s120 + $0x4a8] sm:$0xff] %vm4346, %v1451
      %4497 = vst.msk [vmem:[%s120 + $0x4b0] sm:$0xff] %vm4346, %v1452
      %4498 = vst.msk [vmem:[%s120 + $0x4b8] sm:$0xff] %vm4346, %v1453
      %4499 = vst.msk [vmem:[%s120 + $0x4c0] sm:$0xff] %vm4346, %v1482
      %4500 = vst.msk [vmem:[%s120 + $0x4c8] sm:$0xff] %vm4346, %v1483
      %4501 = vst.msk [vmem:[%s120 + $0x4d0] sm:$0xff] %vm4346, %v1484
      %4502 = vst.msk [vmem:[%s120 + $0x4d8] sm:$0xff] %vm4346, %v1485
      %4503 = vst.msk [vmem:[%s120 + $0x4e0] sm:$0xff] %vm4346, %v1514
      %4504 = vst.msk [vmem:[%s120 + $0x4e8] sm:$0xff] %vm4346, %v1515
      %4505 = vst.msk [vmem:[%s120 + $0x4f0] sm:$0xff] %vm4346, %v1516
      %4506 = vst.msk [vmem:[%s120 + $0x4f8] sm:$0xff] %vm4346, %v1517
      %4507 = vst.msk [vmem:[%s120 + $0x500] sm:$0xff] %vm4346, %v1546
      %4508 = vst.msk [vmem:[%s120 + $0x508] sm:$0xff] %vm4346, %v1547
      %4509 = vst.msk [vmem:[%s120 + $0x510] sm:$0xff] %vm4346, %v1548
      %4510 = vst.msk [vmem:[%s120 + $0x518] sm:$0xff] %vm4346, %v1549
      %4511 = vst.msk [vmem:[%s120 + $0x520] sm:$0xff] %vm4346, %v1578
      %4512 = vst.msk [vmem:[%s120 + $0x528] sm:$0xff] %vm4346, %v1579
      %4513 = vst.msk [vmem:[%s120 + $0x530] sm:$0xff] %vm4346, %v1580
      %4514 = vst.msk [vmem:[%s120 + $0x538] sm:$0xff] %vm4346, %v1581
      %4515 = vst.msk [vmem:[%s120 + $0x540] sm:$0xff] %vm4346, %v1610
      %4516 = vst.msk [vmem:[%s120 + $0x548] sm:$0xff] %vm4346, %v1611
      %4517 = vst.msk [vmem:[%s120 + $0x550] sm:$0xff] %vm4346, %v1612
      %4518 = vst.msk [vmem:[%s120 + $0x558] sm:$0xff] %vm4346, %v1613
      %4519 = vst.msk [vmem:[%s120 + $0x560] sm:$0xff] %vm4346, %v1642
      %4520 = vst.msk [vmem:[%s120 + $0x568] sm:$0xff] %vm4346, %v1643
      %4521 = vst.msk [vmem:[%s120 + $0x570] sm:$0xff] %vm4346, %v1644
      %4522 = vst.msk [vmem:[%s120 + $0x578] sm:$0xff] %vm4346, %v1645
      %4523 = vst.msk [vmem:[%s120 + $0x580] sm:$0xff] %vm4346, %v1674
      %4524 = vst.msk [vmem:[%s120 + $0x588] sm:$0xff] %vm4346, %v1675
      %4525 = vst.msk [vmem:[%s120 + $0x590] sm:$0xff] %vm4346, %v1676
      %4526 = vst.msk [vmem:[%s120 + $0x598] sm:$0xff] %vm4346, %v1677
      %4527 = vst.msk [vmem:[%s120 + $0x5a0] sm:$0xff] %vm4346, %v1706
      %4528 = vst.msk [vmem:[%s120 + $0x5a8] sm:$0xff] %vm4346, %v1707
      %4529 = vst.msk [vmem:[%s120 + $0x5b0] sm:$0xff] %vm4346, %v1708
      %4530 = vst.msk [vmem:[%s120 + $0x5b8] sm:$0xff] %vm4346, %v1709
      %4531 = vst.msk [vmem:[%s120 + $0x5c0] sm:$0xff] %vm4346, %v1738
      %4532 = vst.msk [vmem:[%s120 + $0x5c8] sm:$0xff] %vm4346, %v1739
      %4533 = vst.msk [vmem:[%s120 + $0x5d0] sm:$0xff] %vm4346, %v1740
      %4534 = vst.msk [vmem:[%s120 + $0x5d8] sm:$0xff] %vm4346, %v1741
      %4535 = vst.msk [vmem:[%s120 + $0x5e0] sm:$0xff] %vm4346, %v1770
      %4536 = vst.msk [vmem:[%s120 + $0x5e8] sm:$0xff] %vm4346, %v1771
      %4537 = vst.msk [vmem:[%s120 + $0x5f0] sm:$0xff] %vm4346, %v1772
      %4538 = vst.msk [vmem:[%s120 + $0x5f8] sm:$0xff] %vm4346, %v1773
      %4539 = vst.msk [vmem:[%s120 + $0x600] sm:$0xff] %vm4346, %v1802
      %4540 = vst.msk [vmem:[%s120 + $0x608] sm:$0xff] %vm4346, %v1803
      %4541 = vst.msk [vmem:[%s120 + $0x610] sm:$0xff] %vm4346, %v1804
      %4542 = vst.msk [vmem:[%s120 + $0x618] sm:$0xff] %vm4346, %v1805
      %4543 = vst.msk [vmem:[%s120 + $0x620] sm:$0xff] %vm4346, %v1834
      %4544 = vst.msk [vmem:[%s120 + $0x628] sm:$0xff] %vm4346, %v1835
      %4545 = vst.msk [vmem:[%s120 + $0x630] sm:$0xff] %vm4346, %v1836
      %4546 = vst.msk [vmem:[%s120 + $0x638] sm:$0xff] %vm4346, %v1837
      %4547 = vst.msk [vmem:[%s120 + $0x640] sm:$0xff] %vm4346, %v1866
      %4548 = vst.msk [vmem:[%s120 + $0x648] sm:$0xff] %vm4346, %v1867
      %4549 = vst.msk [vmem:[%s120 + $0x650] sm:$0xff] %vm4346, %v1868
      %4550 = vst.msk [vmem:[%s120 + $0x658] sm:$0xff] %vm4346, %v1869
      %4551 = vst.msk [vmem:[%s120 + $0x660] sm:$0xff] %vm4346, %v1898
      %4552 = vst.msk [vmem:[%s120 + $0x668] sm:$0xff] %vm4346, %v1899
      %4553 = vst.msk [vmem:[%s120 + $0x670] sm:$0xff] %vm4346, %v1900
      %4554 = vst.msk [vmem:[%s120 + $0x678] sm:$0xff] %vm4346, %v1901
      %4555 = vst.msk [vmem:[%s120 + $0x680] sm:$0xff] %vm4346, %v1930
      %4556 = vst.msk [vmem:[%s120 + $0x688] sm:$0xff] %vm4346, %v1931
      %4557 = vst.msk [vmem:[%s120 + $0x690] sm:$0xff] %vm4346, %v1932
      %4558 = vst.msk [vmem:[%s120 + $0x698] sm:$0xff] %vm4346, %v1933
      %4559 = vst.msk [vmem:[%s120 + $0x6a0] sm:$0xff] %vm4346, %v1962
      %4560 = vst.msk [vmem:[%s120 + $0x6a8] sm:$0xff] %vm4346, %v1963
      %4561 = vst.msk [vmem:[%s120 + $0x6b0] sm:$0xff] %vm4346, %v1964
      %4562 = vst.msk [vmem:[%s120 + $0x6b8] sm:$0xff] %vm4346, %v1965
      %4563 = vst.msk [vmem:[%s120 + $0x6c0] sm:$0xff] %vm4346, %v1994
      %4564 = vst.msk [vmem:[%s120 + $0x6c8] sm:$0xff] %vm4346, %v1995
      %4565 = vst.msk [vmem:[%s120 + $0x6d0] sm:$0xff] %vm4346, %v1996
      %4566 = vst.msk [vmem:[%s120 + $0x6d8] sm:$0xff] %vm4346, %v1997
      %4567 = vst.msk [vmem:[%s120 + $0x6e0] sm:$0xff] %vm4346, %v2026
      %4568 = vst.msk [vmem:[%s120 + $0x6e8] sm:$0xff] %vm4346, %v2027
      %4569 = vst.msk [vmem:[%s120 + $0x6f0] sm:$0xff] %vm4346, %v2028
      %4570 = vst.msk [vmem:[%s120 + $0x6f8] sm:$0xff] %vm4346, %v2029
      %4571 = vst.msk [vmem:[%s120 + $0x700] sm:$0xff] %vm4346, %v2058
      %4572 = vst.msk [vmem:[%s120 + $0x708] sm:$0xff] %vm4346, %v2059
      %4573 = vst.msk [vmem:[%s120 + $0x710] sm:$0xff] %vm4346, %v2060
      %4574 = vst.msk [vmem:[%s120 + $0x718] sm:$0xff] %vm4346, %v2061
      %4575 = vst.msk [vmem:[%s120 + $0x720] sm:$0xff] %vm4346, %v2090
      %4576 = vst.msk [vmem:[%s120 + $0x728] sm:$0xff] %vm4346, %v2091
      %4577 = vst.msk [vmem:[%s120 + $0x730] sm:$0xff] %vm4346, %v2092
      %4578 = vst.msk [vmem:[%s120 + $0x738] sm:$0xff] %vm4346, %v2093
      %4579 = vst.msk [vmem:[%s120 + $0x740] sm:$0xff] %vm4346, %v2122
      %4580 = vst.msk [vmem:[%s120 + $0x748] sm:$0xff] %vm4346, %v2123
      %4581 = vst.msk [vmem:[%s120 + $0x750] sm:$0xff] %vm4346, %v2124
      %4582 = vst.msk [vmem:[%s120 + $0x758] sm:$0xff] %vm4346, %v2125
      %4583 = vst.msk [vmem:[%s120 + $0x760] sm:$0xff] %vm4346, %v2154
      %4584 = vst.msk [vmem:[%s120 + $0x768] sm:$0xff] %vm4346, %v2155
      %4585 = vst.msk [vmem:[%s120 + $0x770] sm:$0xff] %vm4346, %v2156
      %4586 = vst.msk [vmem:[%s120 + $0x778] sm:$0xff] %vm4346, %v2157
      %4587 = vst.msk [vmem:[%s120 + $0x780] sm:$0xff] %vm4346, %v2186
      %4588 = vst.msk [vmem:[%s120 + $0x788] sm:$0xff] %vm4346, %v2187
      %4589 = vst.msk [vmem:[%s120 + $0x790] sm:$0xff] %vm4346, %v2188
      %4590 = vst.msk [vmem:[%s120 + $0x798] sm:$0xff] %vm4346, %v2189
      %4591 = vst.msk [vmem:[%s120 + $0x7a0] sm:$0xff] %vm4346, %v2218
      %4592 = vst.msk [vmem:[%s120 + $0x7a8] sm:$0xff] %vm4346, %v2219
      %4593 = vst.msk [vmem:[%s120 + $0x7b0] sm:$0xff] %vm4346, %v2220
      %4594 = vst.msk [vmem:[%s120 + $0x7b8] sm:$0xff] %vm4346, %v2221
      %4595 = vst.msk [vmem:[%s120 + $0x7c0] sm:$0xff] %vm4346, %v2250
      %4596 = vst.msk [vmem:[%s120 + $0x7c8] sm:$0xff] %vm4346, %v2251
      %4597 = vst.msk [vmem:[%s120 + $0x7d0] sm:$0xff] %vm4346, %v2252
      %4598 = vst.msk [vmem:[%s120 + $0x7d8] sm:$0xff] %vm4346, %v2253
      %4599 = vst.msk [vmem:[%s120 + $0x7e0] sm:$0xff] %vm4346, %v2282
      %4600 = vst.msk [vmem:[%s120 + $0x7e8] sm:$0xff] %vm4346, %v2283
      %4601 = vst.msk [vmem:[%s120 + $0x7f0] sm:$0xff] %vm4346, %v2284
      %4602 = vst.msk [vmem:[%s120 + $0x7f8] sm:$0xff] %vm4346, %v2285
      %4603 = vst.msk [vmem:[%s120 + $0x800] sm:$0xff] %vm4346, %v2314
      %4604 = vst.msk [vmem:[%s120 + $0x808] sm:$0xff] %vm4346, %v2315
      %4605 = vst.msk [vmem:[%s120 + $0x810] sm:$0xff] %vm4346, %v2316
      %4606 = vst.msk [vmem:[%s120 + $0x818] sm:$0xff] %vm4346, %v2317
      %4607 = vst.msk [vmem:[%s120 + $0x820] sm:$0xff] %vm4346, %v2346
      %4608 = vst.msk [vmem:[%s120 + $0x828] sm:$0xff] %vm4346, %v2347
      %4609 = vst.msk [vmem:[%s120 + $0x830] sm:$0xff] %vm4346, %v2348
      %4610 = vst.msk [vmem:[%s120 + $0x838] sm:$0xff] %vm4346, %v2349
      %4611 = vst.msk [vmem:[%s120 + $0x840] sm:$0xff] %vm4346, %v2378
      %4612 = vst.msk [vmem:[%s120 + $0x848] sm:$0xff] %vm4346, %v2379
      %4613 = vst.msk [vmem:[%s120 + $0x850] sm:$0xff] %vm4346, %v2380
      %4614 = vst.msk [vmem:[%s120 + $0x858] sm:$0xff] %vm4346, %v2381
      %4615 = vst.msk [vmem:[%s120 + $0x860] sm:$0xff] %vm4346, %v2410
      %4616 = vst.msk [vmem:[%s120 + $0x868] sm:$0xff] %vm4346, %v2411
      %4617 = vst.msk [vmem:[%s120 + $0x870] sm:$0xff] %vm4346, %v2412
      %4618 = vst.msk [vmem:[%s120 + $0x878] sm:$0xff] %vm4346, %v2413
      %4619 = vst.msk [vmem:[%s120 + $0x880] sm:$0xff] %vm4346, %v2442
      %4620 = vst.msk [vmem:[%s120 + $0x888] sm:$0xff] %vm4346, %v2443
      %4621 = vst.msk [vmem:[%s120 + $0x890] sm:$0xff] %vm4346, %v2444
      %4622 = vst.msk [vmem:[%s120 + $0x898] sm:$0xff] %vm4346, %v2445
      %4623 = vst.msk [vmem:[%s120 + $0x8a0] sm:$0xff] %vm4346, %v2474
      %4624 = vst.msk [vmem:[%s120 + $0x8a8] sm:$0xff] %vm4346, %v2475
      %4625 = vst.msk [vmem:[%s120 + $0x8b0] sm:$0xff] %vm4346, %v2476
      %4626 = vst.msk [vmem:[%s120 + $0x8b8] sm:$0xff] %vm4346, %v2477
      %4627 = vst.msk [vmem:[%s120 + $0x8c0] sm:$0xff] %vm4346, %v2506
      %4628 = vst.msk [vmem:[%s120 + $0x8c8] sm:$0xff] %vm4346, %v2507
      %4629 = vst.msk [vmem:[%s120 + $0x8d0] sm:$0xff] %vm4346, %v2508
      %4630 = vst.msk [vmem:[%s120 + $0x8d8] sm:$0xff] %vm4346, %v2509
      %4631 = vst.msk [vmem:[%s120 + $0x8e0] sm:$0xff] %vm4346, %v2538
      %4632 = vst.msk [vmem:[%s120 + $0x8e8] sm:$0xff] %vm4346, %v2539
      %4633 = vst.msk [vmem:[%s120 + $0x8f0] sm:$0xff] %vm4346, %v2540
      %4634 = vst.msk [vmem:[%s120 + $0x8f8] sm:$0xff] %vm4346, %v2541
      %4635 = vst.msk [vmem:[%s120 + $0x900] sm:$0xff] %vm4346, %v2570
      %4636 = vst.msk [vmem:[%s120 + $0x908] sm:$0xff] %vm4346, %v2571
      %4637 = vst.msk [vmem:[%s120 + $0x910] sm:$0xff] %vm4346, %v2572
      %4638 = vst.msk [vmem:[%s120 + $0x918] sm:$0xff] %vm4346, %v2573
      %4639 = vst.msk [vmem:[%s120 + $0x920] sm:$0xff] %vm4346, %v2602
      %4640 = vst.msk [vmem:[%s120 + $0x928] sm:$0xff] %vm4346, %v2603
      %4641 = vst.msk [vmem:[%s120 + $0x930] sm:$0xff] %vm4346, %v2604
      %4642 = vst.msk [vmem:[%s120 + $0x938] sm:$0xff] %vm4346, %v2605
      %4643 = vst.msk [vmem:[%s120 + $0x940] sm:$0xff] %vm4346, %v2634
      %4644 = vst.msk [vmem:[%s120 + $0x948] sm:$0xff] %vm4346, %v2635
      %4645 = vst.msk [vmem:[%s120 + $0x950] sm:$0xff] %vm4346, %v2636
      %4646 = vst.msk [vmem:[%s120 + $0x958] sm:$0xff] %vm4346, %v2637
      %4647 = vst.msk [vmem:[%s120 + $0x960] sm:$0xff] %vm4346, %v2666
      %4648 = vst.msk [vmem:[%s120 + $0x968] sm:$0xff] %vm4346, %v2667
      %4649 = vst.msk [vmem:[%s120 + $0x970] sm:$0xff] %vm4346, %v2668
      %4650 = vst.msk [vmem:[%s120 + $0x978] sm:$0xff] %vm4346, %v2669
      %4651 = vst.msk [vmem:[%s120 + $0x980] sm:$0xff] %vm4346, %v2698
      %4652 = vst.msk [vmem:[%s120 + $0x988] sm:$0xff] %vm4346, %v2699
      %4653 = vst.msk [vmem:[%s120 + $0x990] sm:$0xff] %vm4346, %v2700
      %4654 = vst.msk [vmem:[%s120 + $0x998] sm:$0xff] %vm4346, %v2701
      %4655 = vst.msk [vmem:[%s120 + $0x9a0] sm:$0xff] %vm4346, %v2730
      %4656 = vst.msk [vmem:[%s120 + $0x9a8] sm:$0xff] %vm4346, %v2731
      %4657 = vst.msk [vmem:[%s120 + $0x9b0] sm:$0xff] %vm4346, %v2732
      %4658 = vst.msk [vmem:[%s120 + $0x9b8] sm:$0xff] %vm4346, %v2733
      %4659 = vst.msk [vmem:[%s120 + $0x9c0] sm:$0xff] %vm4346, %v2762
      %4660 = vst.msk [vmem:[%s120 + $0x9c8] sm:$0xff] %vm4346, %v2763
      %4661 = vst.msk [vmem:[%s120 + $0x9d0] sm:$0xff] %vm4346, %v2764
      %4662 = vst.msk [vmem:[%s120 + $0x9d8] sm:$0xff] %vm4346, %v2765
      %4663 = vst.msk [vmem:[%s120 + $0x9e0] sm:$0xff] %vm4346, %v2794
      %4664 = vst.msk [vmem:[%s120 + $0x9e8] sm:$0xff] %vm4346, %v2795
      %4665 = vst.msk [vmem:[%s120 + $0x9f0] sm:$0xff] %vm4346, %v2796
      %4666 = vst.msk [vmem:[%s120 + $0x9f8] sm:$0xff] %vm4346, %v2797
      %4667 = vst.msk [vmem:[%s120 + $0xa00] sm:$0xff] %vm4346, %v2826
      %4668 = vst.msk [vmem:[%s120 + $0xa08] sm:$0xff] %vm4346, %v2827
      %4669 = vst.msk [vmem:[%s120 + $0xa10] sm:$0xff] %vm4346, %v2828
      %4670 = vst.msk [vmem:[%s120 + $0xa18] sm:$0xff] %vm4346, %v2829
      %4671 = vst.msk [vmem:[%s120 + $0xa20] sm:$0xff] %vm4346, %v2858
      %4672 = vst.msk [vmem:[%s120 + $0xa28] sm:$0xff] %vm4346, %v2859
      %4673 = vst.msk [vmem:[%s120 + $0xa30] sm:$0xff] %vm4346, %v2860
      %4674 = vst.msk [vmem:[%s120 + $0xa38] sm:$0xff] %vm4346, %v2861
      %4675 = vst.msk [vmem:[%s120 + $0xa40] sm:$0xff] %vm4346, %v2890
      %4676 = vst.msk [vmem:[%s120 + $0xa48] sm:$0xff] %vm4346, %v2891
      %4677 = vst.msk [vmem:[%s120 + $0xa50] sm:$0xff] %vm4346, %v2892
      %4678 = vst.msk [vmem:[%s120 + $0xa58] sm:$0xff] %vm4346, %v2893
      %4679 = vst.msk [vmem:[%s120 + $0xa60] sm:$0xff] %vm4346, %v2922
      %4680 = vst.msk [vmem:[%s120 + $0xa68] sm:$0xff] %vm4346, %v2923
      %4681 = vst.msk [vmem:[%s120 + $0xa70] sm:$0xff] %vm4346, %v2924
      %4682 = vst.msk [vmem:[%s120 + $0xa78] sm:$0xff] %vm4346, %v2925
      %4683 = vst.msk [vmem:[%s120 + $0xa80] sm:$0xff] %vm4346, %v2954
      %4684 = vst.msk [vmem:[%s120 + $0xa88] sm:$0xff] %vm4346, %v2955
      %4685 = vst.msk [vmem:[%s120 + $0xa90] sm:$0xff] %vm4346, %v2956
      %4686 = vst.msk [vmem:[%s120 + $0xa98] sm:$0xff] %vm4346, %v2957
      %4687 = vst.msk [vmem:[%s120 + $0xaa0] sm:$0xff] %vm4346, %v2986
      %4688 = vst.msk [vmem:[%s120 + $0xaa8] sm:$0xff] %vm4346, %v2987
      %4689 = vst.msk [vmem:[%s120 + $0xab0] sm:$0xff] %vm4346, %v2988
      %4690 = vst.msk [vmem:[%s120 + $0xab8] sm:$0xff] %vm4346, %v2989
      %4691 = vst.msk [vmem:[%s120 + $0xac0] sm:$0xff] %vm4346, %v3018
      %4692 = vst.msk [vmem:[%s120 + $0xac8] sm:$0xff] %vm4346, %v3019
      %4693 = vst.msk [vmem:[%s120 + $0xad0] sm:$0xff] %vm4346, %v3020
      %4694 = vst.msk [vmem:[%s120 + $0xad8] sm:$0xff] %vm4346, %v3021
      %4695 = vst.msk [vmem:[%s120 + $0xae0] sm:$0xff] %vm4346, %v3050
      %4696 = vst.msk [vmem:[%s120 + $0xae8] sm:$0xff] %vm4346, %v3051
      %4697 = vst.msk [vmem:[%s120 + $0xaf0] sm:$0xff] %vm4346, %v3052
      %4698 = vst.msk [vmem:[%s120 + $0xaf8] sm:$0xff] %vm4346, %v3053
      %4699 = vst.msk [vmem:[%s120 + $0xb00] sm:$0xff] %vm4346, %v3082
      %4700 = vst.msk [vmem:[%s120 + $0xb08] sm:$0xff] %vm4346, %v3083
      %4701 = vst.msk [vmem:[%s120 + $0xb10] sm:$0xff] %vm4346, %v3084
      %4702 = vst.msk [vmem:[%s120 + $0xb18] sm:$0xff] %vm4346, %v3085
      %4703 = vst.msk [vmem:[%s120 + $0xb20] sm:$0xff] %vm4346, %v3114
      %4704 = vst.msk [vmem:[%s120 + $0xb28] sm:$0xff] %vm4346, %v3115
      %4705 = vst.msk [vmem:[%s120 + $0xb30] sm:$0xff] %vm4346, %v3116
      %4706 = vst.msk [vmem:[%s120 + $0xb38] sm:$0xff] %vm4346, %v3117
      %4707 = vst.msk [vmem:[%s120 + $0xb40] sm:$0xff] %vm4346, %v3146
      %4708 = vst.msk [vmem:[%s120 + $0xb48] sm:$0xff] %vm4346, %v3147
      %4709 = vst.msk [vmem:[%s120 + $0xb50] sm:$0xff] %vm4346, %v3148
      %4710 = vst.msk [vmem:[%s120 + $0xb58] sm:$0xff] %vm4346, %v3149
      %4711 = vst.msk [vmem:[%s120 + $0xb60] sm:$0xff] %vm4346, %v3178
      %4712 = vst.msk [vmem:[%s120 + $0xb68] sm:$0xff] %vm4346, %v3179
      %4713 = vst.msk [vmem:[%s120 + $0xb70] sm:$0xff] %vm4346, %v3180
      %4714 = vst.msk [vmem:[%s120 + $0xb78] sm:$0xff] %vm4346, %v3181
      %4715 = vst.msk [vmem:[%s120 + $0xb80] sm:$0xff] %vm4346, %v3210
      %4716 = vst.msk [vmem:[%s120 + $0xb88] sm:$0xff] %vm4346, %v3211
      %4717 = vst.msk [vmem:[%s120 + $0xb90] sm:$0xff] %vm4346, %v3212
      %4718 = vst.msk [vmem:[%s120 + $0xb98] sm:$0xff] %vm4346, %v3213
      %4719 = vst.msk [vmem:[%s120 + $0xba0] sm:$0xff] %vm4346, %v3242
      %4720 = vst.msk [vmem:[%s120 + $0xba8] sm:$0xff] %vm4346, %v3243
      %4721 = vst.msk [vmem:[%s120 + $0xbb0] sm:$0xff] %vm4346, %v3244
      %4722 = vst.msk [vmem:[%s120 + $0xbb8] sm:$0xff] %vm4346, %v3245
      %4723 = vst.msk [vmem:[%s120 + $0xbc0] sm:$0xff] %vm4346, %v3274
      %4724 = vst.msk [vmem:[%s120 + $0xbc8] sm:$0xff] %vm4346, %v3275
      %4725 = vst.msk [vmem:[%s120 + $0xbd0] sm:$0xff] %vm4346, %v3276
      %4726 = vst.msk [vmem:[%s120 + $0xbd8] sm:$0xff] %vm4346, %v3277
      %4727 = vst.msk [vmem:[%s120 + $0xbe0] sm:$0xff] %vm4346, %v3306
      %4728 = vst.msk [vmem:[%s120 + $0xbe8] sm:$0xff] %vm4346, %v3307
      %4729 = vst.msk [vmem:[%s120 + $0xbf0] sm:$0xff] %vm4346, %v3308
      %4730 = vst.msk [vmem:[%s120 + $0xbf8] sm:$0xff] %vm4346, %v3309
      %4731 = vst.msk [vmem:[%s120 + $0xc00] sm:$0xff] %vm4346, %v3338
      %4732 = vst.msk [vmem:[%s120 + $0xc08] sm:$0xff] %vm4346, %v3339
      %4733 = vst.msk [vmem:[%s120 + $0xc10] sm:$0xff] %vm4346, %v3340
      %4734 = vst.msk [vmem:[%s120 + $0xc18] sm:$0xff] %vm4346, %v3341
      %4735 = vst.msk [vmem:[%s120 + $0xc20] sm:$0xff] %vm4346, %v3370
      %4736 = vst.msk [vmem:[%s120 + $0xc28] sm:$0xff] %vm4346, %v3371
      %4737 = vst.msk [vmem:[%s120 + $0xc30] sm:$0xff] %vm4346, %v3372
      %4738 = vst.msk [vmem:[%s120 + $0xc38] sm:$0xff] %vm4346, %v3373
      %4739 = vst.msk [vmem:[%s120 + $0xc40] sm:$0xff] %vm4346, %v3402
      %4740 = vst.msk [vmem:[%s120 + $0xc48] sm:$0xff] %vm4346, %v3403
      %4741 = vst.msk [vmem:[%s120 + $0xc50] sm:$0xff] %vm4346, %v3404
      %4742 = vst.msk [vmem:[%s120 + $0xc58] sm:$0xff] %vm4346, %v3405
      %4743 = vst.msk [vmem:[%s120 + $0xc60] sm:$0xff] %vm4346, %v3434
      %4744 = vst.msk [vmem:[%s120 + $0xc68] sm:$0xff] %vm4346, %v3435
      %4745 = vst.msk [vmem:[%s120 + $0xc70] sm:$0xff] %vm4346, %v3436
      %4746 = vst.msk [vmem:[%s120 + $0xc78] sm:$0xff] %vm4346, %v3437
      %4747 = vst.msk [vmem:[%s120 + $0xc80] sm:$0xff] %vm4346, %v3466
      %4748 = vst.msk [vmem:[%s120 + $0xc88] sm:$0xff] %vm4346, %v3467
      %4749 = vst.msk [vmem:[%s120 + $0xc90] sm:$0xff] %vm4346, %v3468
      %4750 = vst.msk [vmem:[%s120 + $0xc98] sm:$0xff] %vm4346, %v3469
      %4751 = vst.msk [vmem:[%s120 + $0xca0] sm:$0xff] %vm4346, %v3498
      %4752 = vst.msk [vmem:[%s120 + $0xca8] sm:$0xff] %vm4346, %v3499
      %4753 = vst.msk [vmem:[%s120 + $0xcb0] sm:$0xff] %vm4346, %v3500
      %4754 = vst.msk [vmem:[%s120 + $0xcb8] sm:$0xff] %vm4346, %v3501
      %4755 = vst.msk [vmem:[%s120 + $0xcc0] sm:$0xff] %vm4346, %v3530
      %4756 = vst.msk [vmem:[%s120 + $0xcc8] sm:$0xff] %vm4346, %v3531
      %4757 = vst.msk [vmem:[%s120 + $0xcd0] sm:$0xff] %vm4346, %v3532
      %4758 = vst.msk [vmem:[%s120 + $0xcd8] sm:$0xff] %vm4346, %v3533
      %4759 = vst.msk [vmem:[%s120 + $0xce0] sm:$0xff] %vm4346, %v3562
      %4760 = vst.msk [vmem:[%s120 + $0xce8] sm:$0xff] %vm4346, %v3563
      %4761 = vst.msk [vmem:[%s120 + $0xcf0] sm:$0xff] %vm4346, %v3564
      %4762 = vst.msk [vmem:[%s120 + $0xcf8] sm:$0xff] %vm4346, %v3565
      %4763 = vst.msk [vmem:[%s120 + $0xd00] sm:$0xff] %vm4346, %v3594
      %4764 = vst.msk [vmem:[%s120 + $0xd08] sm:$0xff] %vm4346, %v3595
      %4765 = vst.msk [vmem:[%s120 + $0xd10] sm:$0xff] %vm4346, %v3596
      %4766 = vst.msk [vmem:[%s120 + $0xd18] sm:$0xff] %vm4346, %v3597
      %4767 = vst.msk [vmem:[%s120 + $0xd20] sm:$0xff] %vm4346, %v3626
      %4768 = vst.msk [vmem:[%s120 + $0xd28] sm:$0xff] %vm4346, %v3627
      %4769 = vst.msk [vmem:[%s120 + $0xd30] sm:$0xff] %vm4346, %v3628
      %4770 = vst.msk [vmem:[%s120 + $0xd38] sm:$0xff] %vm4346, %v3629
      %4771 = vst.msk [vmem:[%s120 + $0xd40] sm:$0xff] %vm4346, %v3658
      %4772 = vst.msk [vmem:[%s120 + $0xd48] sm:$0xff] %vm4346, %v3659
      %4773 = vst.msk [vmem:[%s120 + $0xd50] sm:$0xff] %vm4346, %v3660
      %4774 = vst.msk [vmem:[%s120 + $0xd58] sm:$0xff] %vm4346, %v3661
      %4775 = vst.msk [vmem:[%s120 + $0xd60] sm:$0xff] %vm4346, %v3690
      %4776 = vst.msk [vmem:[%s120 + $0xd68] sm:$0xff] %vm4346, %v3691
      %4777 = vst.msk [vmem:[%s120 + $0xd70] sm:$0xff] %vm4346, %v3692
      %4778 = vst.msk [vmem:[%s120 + $0xd78] sm:$0xff] %vm4346, %v3693
      %4779 = vst.msk [vmem:[%s120 + $0xd80] sm:$0xff] %vm4346, %v3722
      %4780 = vst.msk [vmem:[%s120 + $0xd88] sm:$0xff] %vm4346, %v3723
      %4781 = vst.msk [vmem:[%s120 + $0xd90] sm:$0xff] %vm4346, %v3724
      %4782 = vst.msk [vmem:[%s120 + $0xd98] sm:$0xff] %vm4346, %v3725
      %4783 = vst.msk [vmem:[%s120 + $0xda0] sm:$0xff] %vm4346, %v3754
      %4784 = vst.msk [vmem:[%s120 + $0xda8] sm:$0xff] %vm4346, %v3755
      %4785 = vst.msk [vmem:[%s120 + $0xdb0] sm:$0xff] %vm4346, %v3756
      %4786 = vst.msk [vmem:[%s120 + $0xdb8] sm:$0xff] %vm4346, %v3757
      %4787 = vst.msk [vmem:[%s120 + $0xdc0] sm:$0xff] %vm4346, %v3786
      %4788 = vst.msk [vmem:[%s120 + $0xdc8] sm:$0xff] %vm4346, %v3787
      %4789 = vst.msk [vmem:[%s120 + $0xdd0] sm:$0xff] %vm4346, %v3788
      %4790 = vst.msk [vmem:[%s120 + $0xdd8] sm:$0xff] %vm4346, %v3789
      %4791 = vst.msk [vmem:[%s120 + $0xde0] sm:$0xff] %vm4346, %v3818
      %4792 = vst.msk [vmem:[%s120 + $0xde8] sm:$0xff] %vm4346, %v3819
      %4793 = vst.msk [vmem:[%s120 + $0xdf0] sm:$0xff] %vm4346, %v3820
      %4794 = vst.msk [vmem:[%s120 + $0xdf8] sm:$0xff] %vm4346, %v3821
      %4795 = vst.msk [vmem:[%s120 + $0xe00] sm:$0xff] %vm4346, %v3850
      %4796 = vst.msk [vmem:[%s120 + $0xe08] sm:$0xff] %vm4346, %v3851
      %4797 = vst.msk [vmem:[%s120 + $0xe10] sm:$0xff] %vm4346, %v3852
      %4798 = vst.msk [vmem:[%s120 + $0xe18] sm:$0xff] %vm4346, %v3853
      %4799 = vst.msk [vmem:[%s120 + $0xe20] sm:$0xff] %vm4346, %v3882
      %4800 = vst.msk [vmem:[%s120 + $0xe28] sm:$0xff] %vm4346, %v3883
      %4801 = vst.msk [vmem:[%s120 + $0xe30] sm:$0xff] %vm4346, %v3884
      %4802 = vst.msk [vmem:[%s120 + $0xe38] sm:$0xff] %vm4346, %v3885
      %4803 = vst.msk [vmem:[%s120 + $0xe40] sm:$0xff] %vm4346, %v3914
      %4804 = vst.msk [vmem:[%s120 + $0xe48] sm:$0xff] %vm4346, %v3915
      %4805 = vst.msk [vmem:[%s120 + $0xe50] sm:$0xff] %vm4346, %v3916
      %4806 = vst.msk [vmem:[%s120 + $0xe58] sm:$0xff] %vm4346, %v3917
      %4807 = vst.msk [vmem:[%s120 + $0xe60] sm:$0xff] %vm4346, %v3946
      %4808 = vst.msk [vmem:[%s120 + $0xe68] sm:$0xff] %vm4346, %v3947
      %4809 = vst.msk [vmem:[%s120 + $0xe70] sm:$0xff] %vm4346, %v3948
      %4810 = vst.msk [vmem:[%s120 + $0xe78] sm:$0xff] %vm4346, %v3949
      %4811 = vst.msk [vmem:[%s120 + $0xe80] sm:$0xff] %vm4346, %v3978
      %4812 = vst.msk [vmem:[%s120 + $0xe88] sm:$0xff] %vm4346, %v3979
      %4813 = vst.msk [vmem:[%s120 + $0xe90] sm:$0xff] %vm4346, %v3980
      %4814 = vst.msk [vmem:[%s120 + $0xe98] sm:$0xff] %vm4346, %v3981
      %4815 = vst.msk [vmem:[%s120 + $0xea0] sm:$0xff] %vm4346, %v4010
      %4816 = vst.msk [vmem:[%s120 + $0xea8] sm:$0xff] %vm4346, %v4011
      %4817 = vst.msk [vmem:[%s120 + $0xeb0] sm:$0xff] %vm4346, %v4012
      %4818 = vst.msk [vmem:[%s120 + $0xeb8] sm:$0xff] %vm4346, %v4013
      %4819 = vst.msk [vmem:[%s120 + $0xec0] sm:$0xff] %vm4346, %v4042
      %4820 = vst.msk [vmem:[%s120 + $0xec8] sm:$0xff] %vm4346, %v4043
      %4821 = vst.msk [vmem:[%s120 + $0xed0] sm:$0xff] %vm4346, %v4044
      %4822 = vst.msk [vmem:[%s120 + $0xed8] sm:$0xff] %vm4346, %v4045
      %4823 = vst.msk [vmem:[%s120 + $0xee0] sm:$0xff] %vm4346, %v4074
      %4824 = vst.msk [vmem:[%s120 + $0xee8] sm:$0xff] %vm4346, %v4075
      %4825 = vst.msk [vmem:[%s120 + $0xef0] sm:$0xff] %vm4346, %v4076
      %4826 = vst.msk [vmem:[%s120 + $0xef8] sm:$0xff] %vm4346, %v4077
      %4827 = vst.msk [vmem:[%s120 + $0xf00] sm:$0xff] %vm4346, %v4106
      %4828 = vst.msk [vmem:[%s120 + $0xf08] sm:$0xff] %vm4346, %v4107
      %4829 = vst.msk [vmem:[%s120 + $0xf10] sm:$0xff] %vm4346, %v4108
      %4830 = vst.msk [vmem:[%s120 + $0xf18] sm:$0xff] %vm4346, %v4109
      %4831 = vst.msk [vmem:[%s120 + $0xf20] sm:$0xff] %vm4346, %v4138
      %4832 = vst.msk [vmem:[%s120 + $0xf28] sm:$0xff] %vm4346, %v4139
      %4833 = vst.msk [vmem:[%s120 + $0xf30] sm:$0xff] %vm4346, %v4140
      %4834 = vst.msk [vmem:[%s120 + $0xf38] sm:$0xff] %vm4346, %v4141
      %4835 = vst.msk [vmem:[%s120 + $0xf40] sm:$0xff] %vm4346, %v4170
      %4836 = vst.msk [vmem:[%s120 + $0xf48] sm:$0xff] %vm4346, %v4171
      %4837 = vst.msk [vmem:[%s120 + $0xf50] sm:$0xff] %vm4346, %v4172
      %4838 = vst.msk [vmem:[%s120 + $0xf58] sm:$0xff] %vm4346, %v4173
      %4839 = vst.msk [vmem:[%s120 + $0xf60] sm:$0xff] %vm4346, %v4202
      %4840 = vst.msk [vmem:[%s120 + $0xf68] sm:$0xff] %vm4346, %v4203
      %4841 = vst.msk [vmem:[%s120 + $0xf70] sm:$0xff] %vm4346, %v4204
      %4842 = vst.msk [vmem:[%s120 + $0xf78] sm:$0xff] %vm4346, %v4205
      %4843 = vst.msk [vmem:[%s120 + $0xf80] sm:$0xff] %vm4346, %v4234
      %4844 = vst.msk [vmem:[%s120 + $0xf88] sm:$0xff] %vm4346, %v4235
      %4845 = vst.msk [vmem:[%s120 + $0xf90] sm:$0xff] %vm4346, %v4236
      %4846 = vst.msk [vmem:[%s120 + $0xf98] sm:$0xff] %vm4346, %v4237
      %4847 = vst.msk [vmem:[%s120 + $0xfa0] sm:$0xff] %vm4346, %v4266
      %4848 = vst.msk [vmem:[%s120 + $0xfa8] sm:$0xff] %vm4346, %v4267
      %4849 = vst.msk [vmem:[%s120 + $0xfb0] sm:$0xff] %vm4346, %v4268
      %4850 = vst.msk [vmem:[%s120 + $0xfb8] sm:$0xff] %vm4346, %v4269
      %4851 = vst.msk [vmem:[%s120 + $0xfc0] sm:$0xff] %vm4346, %v4298
      %4852 = vst.msk [vmem:[%s120 + $0xfc8] sm:$0xff] %vm4346, %v4299
      %4853 = vst.msk [vmem:[%s120 + $0xfd0] sm:$0xff] %vm4346, %v4300
      %4854 = vst.msk [vmem:[%s120 + $0xfd8] sm:$0xff] %vm4346, %v4301
      %4855 = vst.msk [vmem:[%s120 + $0xfe0] sm:$0xff] %vm4346, %v4330
      %4856 = vst.msk [vmem:[%s120 + $0xfe8] sm:$0xff] %vm4346, %v4331
      %4857 = vst.msk [vmem:[%s120 + $0xff0] sm:$0xff] %vm4346, %v4332
      %4858 = vst.msk [vmem:[%s120 + $0xff8] sm:$0xff] %vm4346, %v4333
      %s4859 = smul.u32 128, %s12
      %p4860 = scmp.lt.s32.totalorder %s4859, 2047
      %s4861 = scalar_select %p4860, %s4859, 2047
      %s4862 = smul.addr %s4861, 4
      %s4863 = smul.addr %s4862, 8
      %s4864 = scalar_lea.vmem %s1, %s4863
      // Predicated region
      $region25: #{tpu_custom_call.1} parent=23 // pred_check
        %p4865 = pneg %p56
      $region26: #{tpu_custom_call.1} parent=23 // pred_check_branch
        %4867 = sbr.rel (%p4865) target = $region28
      $region27: #{tpu_custom_call.1} parent=23 // pred_region
        %s4868 = smul.u32 128, %s12
      $region28: #{tpu_custom_call.1} parent=23 // pred_fallthru
        _
    $region24: #{tpu_custom_call.1} parent=5 // pred_fallthru
      _
    %p4869 = scmp.le.s32.totalorder 2, %s7
    // Predicated region
    $region29: #{tpu_custom_call.1} parent=5 // pred_check
      %p4870 = pneg %p4869
    $region30: #{tpu_custom_call.1} parent=5 // pred_check_branch
      %4872 = sbr.rel (%p4870) target = $region32
    $region31: #{tpu_custom_call.1} parent=5 // pred_region
      %s4873 = ssub.s32 %s7, 2
      // Predicated region
      $region33: #{tpu_custom_call.1} parent=31 // pred_check
        %p4874 = pneg %p62
      $region34: #{tpu_custom_call.1} parent=31 // pred_check_branch
        %4876 = sbr.rel (%p4874) target = $region36
      $region35: #{tpu_custom_call.1} parent=31 // pred_region
        %s4877 = smul.u32 128, %s13
        %p4878 = scmp.lt.s32.totalorder %s4877, 2047
        %s4879 = scalar_select %p4878, %s4877, 2047
        %s4880 = smul.addr %s4879, 4
        %s4881 = smul.addr %s4880, 8
        %s4882 = scalar_lea.vmem %s1, %s4881
      $region36: #{tpu_custom_call.1} parent=31 // pred_fallthru
        _
    $region32: #{tpu_custom_call.1} parent=5 // pred_fallthru
      _
  $region6: #{tpu_custom_call.1} parent=0 // loop_footer
    %s11 = sadd.s32 1, %s7
  $region7: #{tpu_custom_call.1} parent=0 // loop_footer_branch
    %6 = sbr.rel target = $region3
  $region8: #{tpu_custom_call.1} parent=0 // loop_exit
    _

</llo_original>
